<compile_context>
chip_gen: v6e
topology: v6e:2x2x1
jax: 0.10.0
libtpu: 0.0.40
codegen_flags: <defaults>
</compile_context>

<pallas_src>
import functools

import numpy as np

import jax
import jax.numpy as jnp
from jax.experimental import pallas as pl
from jax.experimental.pallas import tpu as pltpu


# ----------------------------------------------------------------------------
# Host-side constant builder (trace-time numpy; shapes are static).
# ----------------------------------------------------------------------------
def _tap_masks(h_up, w_up, batch_tile):
    """(9, batch_tile * h_up*w_up) 0/1 masks: mask[t, p] == 1 iff the 3x3 tap
    t = (dy+1)*3 + (dx+1) reads an in-bounds pixel of the *same* image at the
    flattened position p (covers 'same' zero padding in both dy and dx, and
    prevents lane-shifted reads leaking across packed batch elements)."""
    yy = np.repeat(np.arange(h_up), w_up)
    xx = np.tile(np.arange(w_up), h_up)
    m = np.ones((9, h_up * w_up), np.float32)
    for t in range(9):
        dy, dx = t // 3 - 1, t % 3 - 1
        m[t] = ((yy + dy >= 0) & (yy + dy < h_up) &
                (xx + dx >= 0) & (xx + dx < w_up)).astype(np.float32)
    return jnp.asarray(np.tile(m, (1, batch_tile)))


# ----------------------------------------------------------------------------
# Fused UpConvBlock kernel (batch_tile images per grid step, lane-packed).
# ----------------------------------------------------------------------------
def _upconv_block_kernel(x_ref, skip_ref, m_ref,
                         w0_ref, w1_ref, w2_ref,
                         b0_ref, b1_ref, b2_ref,
                         o_ref, *, row_len, s_elem):
    # x_ref   : (B, Cin, S)  bf16   2x-upsampled input, flattened spatial
    # skip_ref: (B, Csk, S)  f32    skip connection
    # m_ref   : (9, B*S)     f32    per-tap validity masks
    # w*_ref  : (Cout, 9*Ci) bf16   tap-major flattened conv weights
    # b*_ref  : (Cout, 1)    f32    biases
    # o_ref   : (B, Cout, S)
    f32, bf16 = jnp.float32, jnp.bfloat16
    b_tile = o_ref.shape[0]

    masks = m_ref[...]                                   # (9, P)

    def pack(ref):
        # (B, C, S) block -> lane-packed (C, B*S) f32 slab.
        parts = [ref[b].astype(f32) for b in range(b_tile)]
        return parts[0] if b_tile == 1 else jnp.concatenate(parts, axis=1)

    def shift(v, sh):
        # y[:, p] = v[:, p + sh] (zero fill past the packed ends, no wrap).
        if sh == 0:
            return v
        pw = v.shape[1]
        z = jnp.zeros((v.shape[0], abs(sh)), v.dtype)
        if sh > 0:
            return jnp.concatenate([v[:, sh:], z], axis=1)
        return jnp.concatenate([z, v[:, :pw + sh]], axis=1)

    def taps(v):
        # v: (C, P) f32 -> (9*C, P) bf16 tap-concatenated, masks folded in.
        outs = []
        for t in range(9):
            dy, dx = t // 3 - 1, t % 3 - 1
            u = shift(v, dy * row_len + dx)
            if (dy, dx) != (0, 0):                       # centre tap needs no mask
                u = u * masks[t:t + 1, :]
            outs.append(u)
        return jnp.concatenate(outs, axis=0).astype(bf16)

    def conv3x3(v, w_ref, b_ref, relu):
        # One MXU matmul per conv: (Cout, 9C) @ (9C, P) with f32 accumulation.
        y = jnp.dot(w_ref[...], taps(v), preferred_element_type=f32) + b_ref[...]
        return jnp.maximum(y, 0.0) if relu else y

    xup = pack(x_ref)                                    # (Cin, P)
    skip = pack(skip_ref)                                # (Csk, P)

    # conv0: plain Conv2d (bias, no activation) on the upsampled map.
    y0 = conv3x3(xup, w0_ref, b0_ref, relu=False)        # (Cout, P) f32

    # torch.cat((skip, y0), dim=1) in VMEM, then conv1 + ReLU, conv2 + ReLU.
    cat = jnp.concatenate([skip, y0], axis=0)            # (Csk+Cout, P)
    y1 = conv3x3(cat, w1_ref, b1_ref, relu=True)
    y2 = conv3x3(y1, w2_ref, b2_ref, relu=True)

    for b in range(b_tile):
        o_ref[b] = y2[:, b * s_elem:(b + 1) * s_elem].astype(o_ref.dtype)


# ----------------------------------------------------------------------------
# UpConvBlock forward (NCHW in / NCHW out, matching the torch module).
# ----------------------------------------------------------------------------
def up_conv_block_forward(x_nchw, skip_nchw, params, *, batch_tile=None):
    n, cin, h, w = x_nchw.shape
    n_s, csk, h_up, w_up = skip_nchw.shape
    assert n_s == n and h_up == 2 * h and w_up == 2 * w
    cout = params["w0"].shape[-1]
    cin1 = params["w1"].shape[2]
    assert cin1 == csk + cout, "conv1 expects cat(skip, conv0(x)) channels"
    s = h_up * w_up
    # Lane-dense layout requirement (review correctness note #4).
    assert s % 128 == 0, "flattened (2H)*(2W) must be a multiple of 128"

    if batch_tile is None:
        # Pack pairs into the lane axis when possible.  For large N keep
        # n // batch_tile >= 2 steps per TensorCore on v7x for DMA pipelining.
        batch_tile = 2 if n % 2 == 0 else 1
    assert n % batch_tile == 0
    p = batch_tile * s

    # 2x nearest upsample + bf16 cast: one fused XLA copy of x (the smallest
    # tensor); replaces the previous O(HW^2) placement-matrix matmul.
    xup = jnp.broadcast_to(
        x_nchw[:, :, :, None, :, None], (n, cin, h, 2, w, 2)
    ).reshape(n, cin, s).astype(jnp.bfloat16)

    skipf = skip_nchw.reshape(n, csk, s)                 # free metadata reshape

    tap_masks = _tap_masks(h_up, w_up, batch_tile)       # (9, p) f32

    def to_mat(wk):  # HWIO (3,3,ci,co) -> (co, 9*ci) bf16, tap-major columns
        co = wk.shape[3]
        return jnp.transpose(wk, (3, 0, 1, 2)).reshape(co, -1).astype(jnp.bfloat16)

    w0m = to_mat(params["w0"])
    w1m = to_mat(params["w1"])
    w2m = to_mat(params["w2"])
    b0 = params["b0"].reshape(cout, 1).astype(jnp.float32)
    b1 = params["b1"].reshape(cout, 1).astype(jnp.float32)
    b2 = params["b2"].reshape(cout, 1).astype(jnp.float32)

    kern = functools.partial(_upconv_block_kernel, row_len=w_up, s_elem=s)

    out_flat = pl.pallas_call(
        kern,
        out_shape=jax.ShapeDtypeStruct((n, cout, s), x_nchw.dtype),
        grid_spec=pltpu.PrefetchScalarGridSpec(
            num_scalar_prefetch=0,
            grid=(n // batch_tile,),
            in_specs=[
                pl.BlockSpec((batch_tile, cin, s), lambda i: (i, 0, 0)),
                pl.BlockSpec((batch_tile, csk, s), lambda i: (i, 0, 0)),
                pl.BlockSpec((9, p), lambda i: (0, 0)),
                pl.BlockSpec((cout, 9 * cin), lambda i: (0, 0)),
                pl.BlockSpec((cout, 9 * cin1), lambda i: (0, 0)),
                pl.BlockSpec((cout, 9 * cout), lambda i: (0, 0)),
                pl.BlockSpec((cout, 1), lambda i: (0, 0)),
                pl.BlockSpec((cout, 1), lambda i: (0, 0)),
                pl.BlockSpec((cout, 1), lambda i: (0, 0)),
            ],
            out_specs=pl.BlockSpec((batch_tile, cout, s), lambda i: (i, 0, 0)),
        ),
        compiler_params=pltpu.CompilerParams(
            dimension_semantics=("parallel",)),          # v7x: 2 TCs split steps
    )(xup, skipf, tap_masks, w0m, w1m, w2m, b0, b1, b2)

    return out_flat.reshape(n, cout, h_up, w_up)


# ----------------------------------------------------------------------------
# Pure-JAX f32 reference (correctness check only).
# ----------------------------------------------------------------------------
def _ref_conv(x, w, b, relu):
    y = jax.lax.conv_general_dilated(
        x, w, window_strides=(1, 1), padding="SAME",
        dimension_numbers=("NHWC", "HWIO", "NHWC"))
    y = y + b
    return jnp.maximum(y, 0.0) if relu else y


def reference_forward(x_nchw, skip_nchw, params):
    x = jnp.transpose(x_nchw, (0, 2, 3, 1))
    skip = jnp.transpose(skip_nchw, (0, 2, 3, 1))
    x = jnp.repeat(jnp.repeat(x, 2, axis=1), 2, axis=2)
    x = _ref_conv(x, params["w0"], params["b0"], relu=False)
    x = jnp.concatenate([skip, x], axis=-1)
    x = _ref_conv(x, params["w1"], params["b1"], relu=True)
    x = _ref_conv(x, params["w2"], params["b2"], relu=True)
    return jnp.transpose(x, (0, 3, 1, 2))


if __name__ == "__main__":
    key = jax.random.PRNGKey(0)
    in_channels, out_channels = 8, 4
    n, h, w = 2, 16, 16
    skip_channels = in_channels - out_channels  # cat(skip, conv0) -> in_channels

    k = jax.random.split(key, 8)
    x = jax.random.normal(k[0], (n, in_channels, h, w), jnp.float32)
    skip = jax.random.normal(k[1], (n, skip_channels, 2 * h, 2 * w), jnp.float32)

    params = {
        "w0": 0.1 * jax.random.normal(k[2], (3, 3, in_channels, out_channels), jnp.float32),
        "b0": 0.1 * jax.random.normal(k[3], (out_channels,), jnp.float32),
        "w1": 0.1 * jax.random.normal(k[4], (3, 3, in_channels, out_channels), jnp.float32),
        "b1": 0.1 * jax.random.normal(k[5], (out_channels,), jnp.float32),
        "w2": 0.1 * jax.random.normal(k[6], (3, 3, out_channels, out_channels), jnp.float32),
        "b2": 0.1 * jax.random.normal(k[7], (out_channels,), jnp.float32),
    }

    fwd = jax.jit(up_conv_block_forward)
    out = jax.block_until_ready(fwd(x, skip, params))
    ref = jax.block_until_ready(reference_forward(x, skip, params))

    assert out.shape == (n, out_channels, 2 * h, 2 * w), out.shape
    max_err = float(jnp.max(jnp.abs(out - ref)))
    # bf16 matmul operands (f32 accumulation): tolerance loosened per review.
    assert jnp.allclose(out, ref, atol=5e-2, rtol=5e-2), max_err
    print("KERNEL_OK")
</pallas_src>

<mosaic_0001>
module attributes {stable_mosaic.version = 11 : i64} {
  func.func @_upconv_block_kernel(%arg0: i32, %arg1: memref<2x8x1024xbf16, #tpu.memory_space<vmem>>, %arg2: memref<2x4x1024xf32, #tpu.memory_space<vmem>>, %arg3: memref<9x2048xf32, #tpu.memory_space<vmem>>, %arg4: memref<4x72xbf16, #tpu.memory_space<vmem>>, %arg5: memref<4x72xbf16, #tpu.memory_space<vmem>>, %arg6: memref<4x36xbf16, #tpu.memory_space<vmem>>, %arg7: memref<4x1xf32, #tpu.memory_space<vmem>>, %arg8: memref<4x1xf32, #tpu.memory_space<vmem>>, %arg9: memref<4x1xf32, #tpu.memory_space<vmem>>, %arg10: memref<2x4x1024xf32, #tpu.memory_space<vmem>>) attributes {dimension_semantics = [#tpu.dimension_semantics<parallel>], iteration_bounds = array<i64: 1>, scalar_prefetch = 0 : i64, scratch_operands = 0 : i64, tpu.core_type = #tpu.core_type<tc>, window_params = [{transform_indices = @transform_0, window_bounds = array<i64: 2, 8, 1024>}, {transform_indices = @transform_1, window_bounds = array<i64: 2, 4, 1024>}, {pipeline_mode = #tpu.pipeline_mode<synchronous>, transform_indices = @transform_2, window_bounds = array<i64: 9, 2048>}, {pipeline_mode = #tpu.pipeline_mode<synchronous>, transform_indices = @transform_3, window_bounds = array<i64: 4, 72>}, {pipeline_mode = #tpu.pipeline_mode<synchronous>, transform_indices = @transform_4, window_bounds = array<i64: 4, 72>}, {pipeline_mode = #tpu.pipeline_mode<synchronous>, transform_indices = @transform_5, window_bounds = array<i64: 4, 36>}, {pipeline_mode = #tpu.pipeline_mode<synchronous>, transform_indices = @transform_6, window_bounds = array<i64: 4, 1>}, {pipeline_mode = #tpu.pipeline_mode<synchronous>, transform_indices = @transform_7, window_bounds = array<i64: 4, 1>}, {pipeline_mode = #tpu.pipeline_mode<synchronous>, transform_indices = @transform_8, window_bounds = array<i64: 4, 1>}, {transform_indices = @transform_9, window_bounds = array<i64: 2, 4, 1024>}]} {
    %c0 = arith.constant 0 : index
    %c0_0 = arith.constant 0 : index
    %0 = vector.load %arg3[%c0, %c0_0] : memref<9x2048xf32, #tpu.memory_space<vmem>>, vector<9x2048xf32>
    %c0_1 = arith.constant 0 : index
    %c0_2 = arith.constant 0 : index
    %c0_3 = arith.constant 0 : index
    %1 = vector.load %arg1[%c0_1, %c0_2, %c0_3] : memref<2x8x1024xbf16, #tpu.memory_space<vmem>>, vector<1x8x1024xbf16>
    %2 = vector.shape_cast %1 : vector<1x8x1024xbf16> to vector<8x1024xbf16>
    %3 = arith.extf %2 : vector<8x1024xbf16> to vector<8x1024xf32>
    %c1 = arith.constant 1 : index
    %c0_4 = arith.constant 0 : index
    %c0_5 = arith.constant 0 : index
    %4 = vector.load %arg1[%c1, %c0_4, %c0_5] : memref<2x8x1024xbf16, #tpu.memory_space<vmem>>, vector<1x8x1024xbf16>
    %5 = vector.shape_cast %4 : vector<1x8x1024xbf16> to vector<8x1024xbf16>
    %6 = arith.extf %5 : vector<8x1024xbf16> to vector<8x1024xf32>
    %7 = tpu.concatenate %3, %6 in 1 : vector<8x1024xf32>, vector<8x1024xf32> -> vector<8x2048xf32>
    %c0_6 = arith.constant 0 : index
    %c0_7 = arith.constant 0 : index
    %c0_8 = arith.constant 0 : index
    %8 = vector.load %arg2[%c0_6, %c0_7, %c0_8] : memref<2x4x1024xf32, #tpu.memory_space<vmem>>, vector<1x4x1024xf32>
    %9 = vector.shape_cast %8 : vector<1x4x1024xf32> to vector<4x1024xf32>
    %c1_9 = arith.constant 1 : index
    %c0_10 = arith.constant 0 : index
    %c0_11 = arith.constant 0 : index
    %10 = vector.load %arg2[%c1_9, %c0_10, %c0_11] : memref<2x4x1024xf32, #tpu.memory_space<vmem>>, vector<1x4x1024xf32>
    %11 = vector.shape_cast %10 : vector<1x4x1024xf32> to vector<4x1024xf32>
    %12 = tpu.concatenate %9, %11 in 1 : vector<4x1024xf32>, vector<4x1024xf32> -> vector<4x2048xf32>
    %c0_12 = arith.constant 0 : index
    %c0_13 = arith.constant 0 : index
    %13 = vector.load %arg4[%c0_12, %c0_13] : memref<4x72xbf16, #tpu.memory_space<vmem>>, vector<4x72xbf16>
    %cst = arith.constant 0.000000e+00 : f32
    %14 = vector.broadcast %cst : f32 to vector<8x33xf32>
    %15 = vector.extract_strided_slice %7 {offsets = [0, 0], sizes = [8, 2015], strides = [1, 1]} : vector<8x2048xf32> to vector<8x2015xf32>
    %16 = tpu.concatenate %14, %15 in 1 : vector<8x33xf32>, vector<8x2015xf32> -> vector<8x2048xf32>
    %17 = vector.extract_strided_slice %0 {offsets = [0, 0], sizes = [1, 2048], strides = [1, 1]} : vector<9x2048xf32> to vector<1x2048xf32>
    %18 = vector.broadcast %17 : vector<1x2048xf32> to vector<8x2048xf32>
    %19 = arith.mulf %16, %18 : vector<8x2048xf32>
    %cst_14 = arith.constant 0.000000e+00 : f32
    %20 = vector.broadcast %cst_14 : f32 to vector<8x32xf32>
    %21 = vector.extract_strided_slice %7 {offsets = [0, 0], sizes = [8, 2016], strides = [1, 1]} : vector<8x2048xf32> to vector<8x2016xf32>
    %22 = tpu.concatenate %20, %21 in 1 : vector<8x32xf32>, vector<8x2016xf32> -> vector<8x2048xf32>
    %23 = vector.extract_strided_slice %0 {offsets = [1, 0], sizes = [1, 2048], strides = [1, 1]} : vector<9x2048xf32> to vector<1x2048xf32>
    %24 = vector.broadcast %23 : vector<1x2048xf32> to vector<8x2048xf32>
    %25 = arith.mulf %22, %24 : vector<8x2048xf32>
    %cst_15 = arith.constant 0.000000e+00 : f32
    %26 = vector.broadcast %cst_15 : f32 to vector<8x31xf32>
    %27 = vector.extract_strided_slice %7 {offsets = [0, 0], sizes = [8, 2017], strides = [1, 1]} : vector<8x2048xf32> to vector<8x2017xf32>
    %28 = tpu.concatenate %26, %27 in 1 : vector<8x31xf32>, vector<8x2017xf32> -> vector<8x2048xf32>
    %29 = vector.extract_strided_slice %0 {offsets = [2, 0], sizes = [1, 2048], strides = [1, 1]} : vector<9x2048xf32> to vector<1x2048xf32>
    %30 = vector.broadcast %29 : vector<1x2048xf32> to vector<8x2048xf32>
    %31 = arith.mulf %28, %30 : vector<8x2048xf32>
    %cst_16 = arith.constant 0.000000e+00 : f32
    %32 = vector.broadcast %cst_16 : f32 to vector<8x1xf32>
    %33 = vector.extract_strided_slice %7 {offsets = [0, 0], sizes = [8, 2047], strides = [1, 1]} : vector<8x2048xf32> to vector<8x2047xf32>
    %34 = tpu.concatenate %32, %33 in 1 : vector<8x1xf32>, vector<8x2047xf32> -> vector<8x2048xf32>
    %35 = vector.extract_strided_slice %0 {offsets = [3, 0], sizes = [1, 2048], strides = [1, 1]} : vector<9x2048xf32> to vector<1x2048xf32>
    %36 = vector.broadcast %35 : vector<1x2048xf32> to vector<8x2048xf32>
    %37 = arith.mulf %34, %36 : vector<8x2048xf32>
    %cst_17 = arith.constant 0.000000e+00 : f32
    %38 = vector.broadcast %cst_17 : f32 to vector<8x1xf32>
    %39 = vector.extract_strided_slice %7 {offsets = [0, 1], sizes = [8, 2047], strides = [1, 1]} : vector<8x2048xf32> to vector<8x2047xf32>
    %40 = tpu.concatenate %39, %38 in 1 : vector<8x2047xf32>, vector<8x1xf32> -> vector<8x2048xf32>
    %41 = vector.extract_strided_slice %0 {offsets = [5, 0], sizes = [1, 2048], strides = [1, 1]} : vector<9x2048xf32> to vector<1x2048xf32>
    %42 = vector.broadcast %41 : vector<1x2048xf32> to vector<8x2048xf32>
    %43 = arith.mulf %40, %42 : vector<8x2048xf32>
    %cst_18 = arith.constant 0.000000e+00 : f32
    %44 = vector.broadcast %cst_18 : f32 to vector<8x31xf32>
    %45 = vector.extract_strided_slice %7 {offsets = [0, 31], sizes = [8, 2017], strides = [1, 1]} : vector<8x2048xf32> to vector<8x2017xf32>
    %46 = tpu.concatenate %45, %44 in 1 : vector<8x2017xf32>, vector<8x31xf32> -> vector<8x2048xf32>
    %47 = vector.extract_strided_slice %0 {offsets = [6, 0], sizes = [1, 2048], strides = [1, 1]} : vector<9x2048xf32> to vector<1x2048xf32>
    %48 = vector.broadcast %47 : vector<1x2048xf32> to vector<8x2048xf32>
    %49 = arith.mulf %46, %48 : vector<8x2048xf32>
    %cst_19 = arith.constant 0.000000e+00 : f32
    %50 = vector.broadcast %cst_19 : f32 to vector<8x32xf32>
    %51 = vector.extract_strided_slice %7 {offsets = [0, 32], sizes = [8, 2016], strides = [1, 1]} : vector<8x2048xf32> to vector<8x2016xf32>
    %52 = tpu.concatenate %51, %50 in 1 : vector<8x2016xf32>, vector<8x32xf32> -> vector<8x2048xf32>
    %53 = vector.extract_strided_slice %0 {offsets = [7, 0], sizes = [1, 2048], strides = [1, 1]} : vector<9x2048xf32> to vector<1x2048xf32>
    %54 = vector.broadcast %53 : vector<1x2048xf32> to vector<8x2048xf32>
    %55 = arith.mulf %52, %54 : vector<8x2048xf32>
    %cst_20 = arith.constant 0.000000e+00 : f32
    %56 = vector.broadcast %cst_20 : f32 to vector<8x33xf32>
    %57 = vector.extract_strided_slice %7 {offsets = [0, 33], sizes = [8, 2015], strides = [1, 1]} : vector<8x2048xf32> to vector<8x2015xf32>
    %58 = tpu.concatenate %57, %56 in 1 : vector<8x2015xf32>, vector<8x33xf32> -> vector<8x2048xf32>
    %59 = vector.extract_strided_slice %0 {offsets = [8, 0], sizes = [1, 2048], strides = [1, 1]} : vector<9x2048xf32> to vector<1x2048xf32>
    %60 = vector.broadcast %59 : vector<1x2048xf32> to vector<8x2048xf32>
    %61 = arith.mulf %58, %60 : vector<8x2048xf32>
    %62 = tpu.concatenate %19, %25, %31, %37, %7, %43, %49, %55, %61 in 0 : vector<8x2048xf32>, vector<8x2048xf32>, vector<8x2048xf32>, vector<8x2048xf32>, vector<8x2048xf32>, vector<8x2048xf32>, vector<8x2048xf32>, vector<8x2048xf32>, vector<8x2048xf32> -> vector<72x2048xf32>
    %63 = arith.truncf %62 : vector<72x2048xf32> to vector<72x2048xbf16>
    %cst_21 = arith.constant dense<0.000000e+00> : vector<4x2048xf32>
    %64 = tpu.matmul %13, %63, %cst_21 {dimension_numbers = #tpu.dot_dimension_numbers<[1], [0], [0], [1], [0, 0, 1, 1], [], []>} : vector<4x72xbf16>, vector<72x2048xbf16>, vector<4x2048xf32> -> vector<4x2048xf32>
    %c0_22 = arith.constant 0 : index
    %c0_23 = arith.constant 0 : index
    %65 = vector.load %arg7[%c0_22, %c0_23] : memref<4x1xf32, #tpu.memory_space<vmem>>, vector<4x1xf32>
    %66 = vector.broadcast %65 : vector<4x1xf32> to vector<4x2048xf32>
    %67 = arith.addf %64, %66 : vector<4x2048xf32>
    %68 = tpu.concatenate %12, %67 in 0 : vector<4x2048xf32>, vector<4x2048xf32> -> vector<8x2048xf32>
    %c0_24 = arith.constant 0 : index
    %c0_25 = arith.constant 0 : index
    %69 = vector.load %arg5[%c0_24, %c0_25] : memref<4x72xbf16, #tpu.memory_space<vmem>>, vector<4x72xbf16>
    %cst_26 = arith.constant 0.000000e+00 : f32
    %70 = vector.broadcast %cst_26 : f32 to vector<8x33xf32>
    %71 = vector.extract_strided_slice %68 {offsets = [0, 0], sizes = [8, 2015], strides = [1, 1]} : vector<8x2048xf32> to vector<8x2015xf32>
    %72 = tpu.concatenate %70, %71 in 1 : vector<8x33xf32>, vector<8x2015xf32> -> vector<8x2048xf32>
    %73 = vector.extract_strided_slice %0 {offsets = [0, 0], sizes = [1, 2048], strides = [1, 1]} : vector<9x2048xf32> to vector<1x2048xf32>
    %74 = vector.broadcast %73 : vector<1x2048xf32> to vector<8x2048xf32>
    %75 = arith.mulf %72, %74 : vector<8x2048xf32>
    %cst_27 = arith.constant 0.000000e+00 : f32
    %76 = vector.broadcast %cst_27 : f32 to vector<8x32xf32>
    %77 = vector.extract_strided_slice %68 {offsets = [0, 0], sizes = [8, 2016], strides = [1, 1]} : vector<8x2048xf32> to vector<8x2016xf32>
    %78 = tpu.concatenate %76, %77 in 1 : vector<8x32xf32>, vector<8x2016xf32> -> vector<8x2048xf32>
    %79 = vector.extract_strided_slice %0 {offsets = [1, 0], sizes = [1, 2048], strides = [1, 1]} : vector<9x2048xf32> to vector<1x2048xf32>
    %80 = vector.broadcast %79 : vector<1x2048xf32> to vector<8x2048xf32>
    %81 = arith.mulf %78, %80 : vector<8x2048xf32>
    %cst_28 = arith.constant 0.000000e+00 : f32
    %82 = vector.broadcast %cst_28 : f32 to vector<8x31xf32>
    %83 = vector.extract_strided_slice %68 {offsets = [0, 0], sizes = [8, 2017], strides = [1, 1]} : vector<8x2048xf32> to vector<8x2017xf32>
    %84 = tpu.concatenate %82, %83 in 1 : vector<8x31xf32>, vector<8x2017xf32> -> vector<8x2048xf32>
    %85 = vector.extract_strided_slice %0 {offsets = [2, 0], sizes = [1, 2048], strides = [1, 1]} : vector<9x2048xf32> to vector<1x2048xf32>
    %86 = vector.broadcast %85 : vector<1x2048xf32> to vector<8x2048xf32>
    %87 = arith.mulf %84, %86 : vector<8x2048xf32>
    %cst_29 = arith.constant 0.000000e+00 : f32
    %88 = vector.broadcast %cst_29 : f32 to vector<8x1xf32>
    %89 = vector.extract_strided_slice %68 {offsets = [0, 0], sizes = [8, 2047], strides = [1, 1]} : vector<8x2048xf32> to vector<8x2047xf32>
    %90 = tpu.concatenate %88, %89 in 1 : vector<8x1xf32>, vector<8x2047xf32> -> vector<8x2048xf32>
    %91 = vector.extract_strided_slice %0 {offsets = [3, 0], sizes = [1, 2048], strides = [1, 1]} : vector<9x2048xf32> to vector<1x2048xf32>
    %92 = vector.broadcast %91 : vector<1x2048xf32> to vector<8x2048xf32>
    %93 = arith.mulf %90, %92 : vector<8x2048xf32>
    %cst_30 = arith.constant 0.000000e+00 : f32
    %94 = vector.broadcast %cst_30 : f32 to vector<8x1xf32>
    %95 = vector.extract_strided_slice %68 {offsets = [0, 1], sizes = [8, 2047], strides = [1, 1]} : vector<8x2048xf32> to vector<8x2047xf32>
    %96 = tpu.concatenate %95, %94 in 1 : vector<8x2047xf32>, vector<8x1xf32> -> vector<8x2048xf32>
    %97 = vector.extract_strided_slice %0 {offsets = [5, 0], sizes = [1, 2048], strides = [1, 1]} : vector<9x2048xf32> to vector<1x2048xf32>
    %98 = vector.broadcast %97 : vector<1x2048xf32> to vector<8x2048xf32>
    %99 = arith.mulf %96, %98 : vector<8x2048xf32>
    %cst_31 = arith.constant 0.000000e+00 : f32
    %100 = vector.broadcast %cst_31 : f32 to vector<8x31xf32>
    %101 = vector.extract_strided_slice %68 {offsets = [0, 31], sizes = [8, 2017], strides = [1, 1]} : vector<8x2048xf32> to vector<8x2017xf32>
    %102 = tpu.concatenate %101, %100 in 1 : vector<8x2017xf32>, vector<8x31xf32> -> vector<8x2048xf32>
    %103 = vector.extract_strided_slice %0 {offsets = [6, 0], sizes = [1, 2048], strides = [1, 1]} : vector<9x2048xf32> to vector<1x2048xf32>
    %104 = vector.broadcast %103 : vector<1x2048xf32> to vector<8x2048xf32>
    %105 = arith.mulf %102, %104 : vector<8x2048xf32>
    %cst_32 = arith.constant 0.000000e+00 : f32
    %106 = vector.broadcast %cst_32 : f32 to vector<8x32xf32>
    %107 = vector.extract_strided_slice %68 {offsets = [0, 32], sizes = [8, 2016], strides = [1, 1]} : vector<8x2048xf32> to vector<8x2016xf32>
    %108 = tpu.concatenate %107, %106 in 1 : vector<8x2016xf32>, vector<8x32xf32> -> vector<8x2048xf32>
    %109 = vector.extract_strided_slice %0 {offsets = [7, 0], sizes = [1, 2048], strides = [1, 1]} : vector<9x2048xf32> to vector<1x2048xf32>
    %110 = vector.broadcast %109 : vector<1x2048xf32> to vector<8x2048xf32>
    %111 = arith.mulf %108, %110 : vector<8x2048xf32>
    %cst_33 = arith.constant 0.000000e+00 : f32
    %112 = vector.broadcast %cst_33 : f32 to vector<8x33xf32>
    %113 = vector.extract_strided_slice %68 {offsets = [0, 33], sizes = [8, 2015], strides = [1, 1]} : vector<8x2048xf32> to vector<8x2015xf32>
    %114 = tpu.concatenate %113, %112 in 1 : vector<8x2015xf32>, vector<8x33xf32> -> vector<8x2048xf32>
    %115 = vector.extract_strided_slice %0 {offsets = [8, 0], sizes = [1, 2048], strides = [1, 1]} : vector<9x2048xf32> to vector<1x2048xf32>
    %116 = vector.broadcast %115 : vector<1x2048xf32> to vector<8x2048xf32>
    %117 = arith.mulf %114, %116 : vector<8x2048xf32>
    %118 = tpu.concatenate %75, %81, %87, %93, %68, %99, %105, %111, %117 in 0 : vector<8x2048xf32>, vector<8x2048xf32>, vector<8x2048xf32>, vector<8x2048xf32>, vector<8x2048xf32>, vector<8x2048xf32>, vector<8x2048xf32>, vector<8x2048xf32>, vector<8x2048xf32> -> vector<72x2048xf32>
    %119 = arith.truncf %118 : vector<72x2048xf32> to vector<72x2048xbf16>
    %cst_34 = arith.constant dense<0.000000e+00> : vector<4x2048xf32>
    %120 = tpu.matmul %69, %119, %cst_34 {dimension_numbers = #tpu.dot_dimension_numbers<[1], [0], [0], [1], [0, 0, 1, 1], [], []>} : vector<4x72xbf16>, vector<72x2048xbf16>, vector<4x2048xf32> -> vector<4x2048xf32>
    %c0_35 = arith.constant 0 : index
    %c0_36 = arith.constant 0 : index
    %121 = vector.load %arg8[%c0_35, %c0_36] : memref<4x1xf32, #tpu.memory_space<vmem>>, vector<4x1xf32>
    %122 = vector.broadcast %121 : vector<4x1xf32> to vector<4x2048xf32>
    %123 = arith.addf %120, %122 : vector<4x2048xf32>
    %cst_37 = arith.constant 0.000000e+00 : f32
    %124 = vector.broadcast %cst_37 : f32 to vector<4x2048xf32>
    %125 = arith.maximumf %123, %124 : vector<4x2048xf32>
    %c0_38 = arith.constant 0 : index
    %c0_39 = arith.constant 0 : index
    %126 = vector.load %arg6[%c0_38, %c0_39] : memref<4x36xbf16, #tpu.memory_space<vmem>>, vector<4x36xbf16>
    %cst_40 = arith.constant 0.000000e+00 : f32
    %127 = vector.broadcast %cst_40 : f32 to vector<4x33xf32>
    %128 = vector.extract_strided_slice %125 {offsets = [0, 0], sizes = [4, 2015], strides = [1, 1]} : vector<4x2048xf32> to vector<4x2015xf32>
    %129 = tpu.concatenate %127, %128 in 1 : vector<4x33xf32>, vector<4x2015xf32> -> vector<4x2048xf32>
    %130 = vector.extract_strided_slice %0 {offsets = [0, 0], sizes = [1, 2048], strides = [1, 1]} : vector<9x2048xf32> to vector<1x2048xf32>
    %131 = vector.broadcast %130 : vector<1x2048xf32> to vector<4x2048xf32>
    %132 = arith.mulf %129, %131 : vector<4x2048xf32>
    %cst_41 = arith.constant 0.000000e+00 : f32
    %133 = vector.broadcast %cst_41 : f32 to vector<4x32xf32>
    %134 = vector.extract_strided_slice %125 {offsets = [0, 0], sizes = [4, 2016], strides = [1, 1]} : vector<4x2048xf32> to vector<4x2016xf32>
    %135 = tpu.concatenate %133, %134 in 1 : vector<4x32xf32>, vector<4x2016xf32> -> vector<4x2048xf32>
    %136 = vector.extract_strided_slice %0 {offsets = [1, 0], sizes = [1, 2048], strides = [1, 1]} : vector<9x2048xf32> to vector<1x2048xf32>
    %137 = vector.broadcast %136 : vector<1x2048xf32> to vector<4x2048xf32>
    %138 = arith.mulf %135, %137 : vector<4x2048xf32>
    %cst_42 = arith.constant 0.000000e+00 : f32
    %139 = vector.broadcast %cst_42 : f32 to vector<4x31xf32>
    %140 = vector.extract_strided_slice %125 {offsets = [0, 0], sizes = [4, 2017], strides = [1, 1]} : vector<4x2048xf32> to vector<4x2017xf32>
    %141 = tpu.concatenate %139, %140 in 1 : vector<4x31xf32>, vector<4x2017xf32> -> vector<4x2048xf32>
    %142 = vector.extract_strided_slice %0 {offsets = [2, 0], sizes = [1, 2048], strides = [1, 1]} : vector<9x2048xf32> to vector<1x2048xf32>
    %143 = vector.broadcast %142 : vector<1x2048xf32> to vector<4x2048xf32>
    %144 = arith.mulf %141, %143 : vector<4x2048xf32>
    %cst_43 = arith.constant 0.000000e+00 : f32
    %145 = vector.broadcast %cst_43 : f32 to vector<4x1xf32>
    %146 = vector.extract_strided_slice %125 {offsets = [0, 0], sizes = [4, 2047], strides = [1, 1]} : vector<4x2048xf32> to vector<4x2047xf32>
    %147 = tpu.concatenate %145, %146 in 1 : vector<4x1xf32>, vector<4x2047xf32> -> vector<4x2048xf32>
    %148 = vector.extract_strided_slice %0 {offsets = [3, 0], sizes = [1, 2048], strides = [1, 1]} : vector<9x2048xf32> to vector<1x2048xf32>
    %149 = vector.broadcast %148 : vector<1x2048xf32> to vector<4x2048xf32>
    %150 = arith.mulf %147, %149 : vector<4x2048xf32>
    %cst_44 = arith.constant 0.000000e+00 : f32
    %151 = vector.broadcast %cst_44 : f32 to vector<4x1xf32>
    %152 = vector.extract_strided_slice %125 {offsets = [0, 1], sizes = [4, 2047], strides = [1, 1]} : vector<4x2048xf32> to vector<4x2047xf32>
    %153 = tpu.concatenate %152, %151 in 1 : vector<4x2047xf32>, vector<4x1xf32> -> vector<4x2048xf32>
    %154 = vector.extract_strided_slice %0 {offsets = [5, 0], sizes = [1, 2048], strides = [1, 1]} : vector<9x2048xf32> to vector<1x2048xf32>
    %155 = vector.broadcast %154 : vector<1x2048xf32> to vector<4x2048xf32>
    %156 = arith.mulf %153, %155 : vector<4x2048xf32>
    %cst_45 = arith.constant 0.000000e+00 : f32
    %157 = vector.broadcast %cst_45 : f32 to vector<4x31xf32>
    %158 = vector.extract_strided_slice %125 {offsets = [0, 31], sizes = [4, 2017], strides = [1, 1]} : vector<4x2048xf32> to vector<4x2017xf32>
    %159 = tpu.concatenate %158, %157 in 1 : vector<4x2017xf32>, vector<4x31xf32> -> vector<4x2048xf32>
    %160 = vector.extract_strided_slice %0 {offsets = [6, 0], sizes = [1, 2048], strides = [1, 1]} : vector<9x2048xf32> to vector<1x2048xf32>
    %161 = vector.broadcast %160 : vector<1x2048xf32> to vector<4x2048xf32>
    %162 = arith.mulf %159, %161 : vector<4x2048xf32>
    %cst_46 = arith.constant 0.000000e+00 : f32
    %163 = vector.broadcast %cst_46 : f32 to vector<4x32xf32>
    %164 = vector.extract_strided_slice %125 {offsets = [0, 32], sizes = [4, 2016], strides = [1, 1]} : vector<4x2048xf32> to vector<4x2016xf32>
    %165 = tpu.concatenate %164, %163 in 1 : vector<4x2016xf32>, vector<4x32xf32> -> vector<4x2048xf32>
    %166 = vector.extract_strided_slice %0 {offsets = [7, 0], sizes = [1, 2048], strides = [1, 1]} : vector<9x2048xf32> to vector<1x2048xf32>
    %167 = vector.broadcast %166 : vector<1x2048xf32> to vector<4x2048xf32>
    %168 = arith.mulf %165, %167 : vector<4x2048xf32>
    %cst_47 = arith.constant 0.000000e+00 : f32
    %169 = vector.broadcast %cst_47 : f32 to vector<4x33xf32>
    %170 = vector.extract_strided_slice %125 {offsets = [0, 33], sizes = [4, 2015], strides = [1, 1]} : vector<4x2048xf32> to vector<4x2015xf32>
    %171 = tpu.concatenate %170, %169 in 1 : vector<4x2015xf32>, vector<4x33xf32> -> vector<4x2048xf32>
    %172 = vector.extract_strided_slice %0 {offsets = [8, 0], sizes = [1, 2048], strides = [1, 1]} : vector<9x2048xf32> to vector<1x2048xf32>
    %173 = vector.broadcast %172 : vector<1x2048xf32> to vector<4x2048xf32>
    %174 = arith.mulf %171, %173 : vector<4x2048xf32>
    %175 = tpu.concatenate %132, %138, %144, %150, %125, %156, %162, %168, %174 in 0 : vector<4x2048xf32>, vector<4x2048xf32>, vector<4x2048xf32>, vector<4x2048xf32>, vector<4x2048xf32>, vector<4x2048xf32>, vector<4x2048xf32>, vector<4x2048xf32>, vector<4x2048xf32> -> vector<36x2048xf32>
    %176 = arith.truncf %175 : vector<36x2048xf32> to vector<36x2048xbf16>
    %cst_48 = arith.constant dense<0.000000e+00> : vector<4x2048xf32>
    %177 = tpu.matmul %126, %176, %cst_48 {dimension_numbers = #tpu.dot_dimension_numbers<[1], [0], [0], [1], [0, 0, 1, 1], [], []>} : vector<4x36xbf16>, vector<36x2048xbf16>, vector<4x2048xf32> -> vector<4x2048xf32>
    %c0_49 = arith.constant 0 : index
    %c0_50 = arith.constant 0 : index
    %178 = vector.load %arg9[%c0_49, %c0_50] : memref<4x1xf32, #tpu.memory_space<vmem>>, vector<4x1xf32>
    %179 = vector.broadcast %178 : vector<4x1xf32> to vector<4x2048xf32>
    %180 = arith.addf %177, %179 : vector<4x2048xf32>
    %cst_51 = arith.constant 0.000000e+00 : f32
    %181 = vector.broadcast %cst_51 : f32 to vector<4x2048xf32>
    %182 = arith.maximumf %180, %181 : vector<4x2048xf32>
    %183 = vector.extract_strided_slice %182 {offsets = [0, 0], sizes = [4, 1024], strides = [1, 1]} : vector<4x2048xf32> to vector<4x1024xf32>
    %c0_52 = arith.constant 0 : index
    %c0_53 = arith.constant 0 : index
    %c0_54 = arith.constant 0 : index
    %184 = vector.load %arg10[%c0_52, %c0_53, %c0_54] : memref<2x4x1024xf32, #tpu.memory_space<vmem>>, vector<1x4x1024xf32>
    %185 = vector.shape_cast %184 : vector<1x4x1024xf32> to vector<4x1024xf32>
    %186 = vector.shape_cast %183 : vector<4x1024xf32> to vector<1x4x1024xf32>
    tpu.vector_store %arg10[%c0_52, %c0_53, %c0_54], %186 {strides = array<i32>} : memref<2x4x1024xf32, #tpu.memory_space<vmem>>, vector<1x4x1024xf32>,
    %187 = vector.extract_strided_slice %182 {offsets = [0, 1024], sizes = [4, 1024], strides = [1, 1]} : vector<4x2048xf32> to vector<4x1024xf32>
    %c1_55 = arith.constant 1 : index
    %c0_56 = arith.constant 0 : index
    %c0_57 = arith.constant 0 : index
    %188 = vector.load %arg10[%c1_55, %c0_56, %c0_57] : memref<2x4x1024xf32, #tpu.memory_space<vmem>>, vector<1x4x1024xf32>
    %189 = vector.shape_cast %188 : vector<1x4x1024xf32> to vector<4x1024xf32>
    %190 = vector.shape_cast %187 : vector<4x1024xf32> to vector<1x4x1024xf32>
    tpu.vector_store %arg10[%c1_55, %c0_56, %c0_57], %190 {strides = array<i32>} : memref<2x4x1024xf32, #tpu.memory_space<vmem>>, vector<1x4x1024xf32>,
    return
  }
  func.func @transform_0(%arg0: i32) -> (i32, i32, i32) {
    %c0_i32 = arith.constant 0 : i32
    %c0_i32_0 = arith.constant 0 : i32
    %c0_i32_1 = arith.constant 0 : i32
    return %arg0, %c0_i32, %c0_i32_0 : i32, i32, i32
  }
  func.func @transform_1(%arg0: i32) -> (i32, i32, i32) {
    %c0_i32 = arith.constant 0 : i32
    %c0_i32_0 = arith.constant 0 : i32
    %c0_i32_1 = arith.constant 0 : i32
    return %arg0, %c0_i32, %c0_i32_0 : i32, i32, i32
  }
  func.func @transform_2(%arg0: i32) -> (i32, i32) {
    %c0_i32 = arith.constant 0 : i32
    %c0_i32_0 = arith.constant 0 : i32
    %c0_i32_1 = arith.constant 0 : i32
    return %c0_i32, %c0_i32_0 : i32, i32
  }
  func.func @transform_3(%arg0: i32) -> (i32, i32) {
    %c0_i32 = arith.constant 0 : i32
    %c0_i32_0 = arith.constant 0 : i32
    %c0_i32_1 = arith.constant 0 : i32
    return %c0_i32, %c0_i32_0 : i32, i32
  }
  func.func @transform_4(%arg0: i32) -> (i32, i32) {
    %c0_i32 = arith.constant 0 : i32
    %c0_i32_0 = arith.constant 0 : i32
    %c0_i32_1 = arith.constant 0 : i32
    return %c0_i32, %c0_i32_0 : i32, i32
  }
  func.func @transform_5(%arg0: i32) -> (i32, i32) {
    %c0_i32 = arith.constant 0 : i32
    %c0_i32_0 = arith.constant 0 : i32
    %c0_i32_1 = arith.constant 0 : i32
    return %c0_i32, %c0_i32_0 : i32, i32
  }
  func.func @transform_6(%arg0: i32) -> (i32, i32) {
    %c0_i32 = arith.constant 0 : i32
    %c0_i32_0 = arith.constant 0 : i32
    %c0_i32_1 = arith.constant 0 : i32
    return %c0_i32, %c0_i32_0 : i32, i32
  }
  func.func @transform_7(%arg0: i32) -> (i32, i32) {
    %c0_i32 = arith.constant 0 : i32
    %c0_i32_0 = arith.constant 0 : i32
    %c0_i32_1 = arith.constant 0 : i32
    return %c0_i32, %c0_i32_0 : i32, i32
  }
  func.func @transform_8(%arg0: i32) -> (i32, i32) {
    %c0_i32 = arith.constant 0 : i32
    %c0_i32_0 = arith.constant 0 : i32
    %c0_i32_1 = arith.constant 0 : i32
    return %c0_i32, %c0_i32_0 : i32, i32
  }
  func.func @transform_9(%arg0: i32) -> (i32, i32, i32) {
    %c0_i32 = arith.constant 0 : i32
    %c0_i32_0 = arith.constant 0 : i32
    %c0_i32_1 = arith.constant 0 : i32
    return %arg0, %c0_i32, %c0_i32_0 : i32, i32, i32
  }
}

</mosaic_0001>

<llo_original>
// kernel: up_conv_block_forward.1
$region0: #{up_conv_block_forward.1}
  #allocation0 [shape = 'u32[]', space=smem, size = 0x4, offset = 0x4, fixed_abs, tag = 'smem constant byte address 0x4 - core index']
  #allocation1 [shape = 'u32[144,128]{1,0:T(1,128)}', space=vmem, size = 0x12000, scoped, tag = 'internal scratch']
  %s0 = inlined_call_operand.vmem [shape: bf16[2,8,1024], index: 0, kind: input, shape index: {}]
  %s1 = inlined_call_operand.vmem [shape: f32[2,4,1024], index: 1, kind: input, shape index: {}]
  %s2 = inlined_call_operand.vmem [shape: f32[9,2048], index: 2, kind: input, shape index: {}]
  %s3 = inlined_call_operand.vmem [shape: bf16[4,72], index: 3, kind: input, shape index: {}]
  %s4 = inlined_call_operand.vmem [shape: bf16[4,72], index: 4, kind: input, shape index: {}]
  %s5 = inlined_call_operand.vmem [shape: bf16[4,36], index: 5, kind: input, shape index: {}]
  %s6 = inlined_call_operand.vmem [shape: f32[4,1], index: 6, kind: input, shape index: {}]
  %s7 = inlined_call_operand.vmem [shape: f32[4,1], index: 7, kind: input, shape index: {}]
  %s8 = inlined_call_operand.vmem [shape: f32[4,1], index: 8, kind: input, shape index: {}]
  %s9 = inlined_call_operand.vmem [shape: f32[2,4,1024], index: 9, kind: output, shape index: {}]
  %s10 = sld [smem:[#allocation0]]
  $region46: #{up_conv_block_forward.1} parent=0
    _
  %s12 = ssub.s32 1, %s10
  %s13 = scalar_select 0, %s12, %s10
  // Predicated region
  $region2: #{up_conv_block_forward.1} parent=0 // pred_check
    _
  $region3: #{up_conv_block_forward.1} parent=0 // pred_check_branch
    %15 = sbr.rel (0) target = $region5
  $region4: #{up_conv_block_forward.1} parent=0 // pred_region
    _
  $region5: #{up_conv_block_forward.1} parent=0 // pred_fallthru
    _
  // Predicated region
  $region6: #{up_conv_block_forward.1} parent=0 // pred_check
    _
  $region7: #{up_conv_block_forward.1} parent=0 // pred_check_branch
    %17 = sbr.rel (0) target = $region9
  $region8: #{up_conv_block_forward.1} parent=0 // pred_region
    _
  $region9: #{up_conv_block_forward.1} parent=0 // pred_fallthru
    _
  // Predicated region
  $region10: #{up_conv_block_forward.1} parent=0 // pred_check
    _
  $region11: #{up_conv_block_forward.1} parent=0 // pred_check_branch
    %19 = sbr.rel (0) target = $region13
  $region12: #{up_conv_block_forward.1} parent=0 // pred_region
    _
  $region13: #{up_conv_block_forward.1} parent=0 // pred_fallthru
    _
  // Predicated region
  $region14: #{up_conv_block_forward.1} parent=0 // pred_check
    _
  $region15: #{up_conv_block_forward.1} parent=0 // pred_check_branch
    %21 = sbr.rel (0) target = $region17
  $region16: #{up_conv_block_forward.1} parent=0 // pred_region
    _
  $region17: #{up_conv_block_forward.1} parent=0 // pred_fallthru
    _
  // Predicated region
  $region18: #{up_conv_block_forward.1} parent=0 // pred_check
    _
  $region19: #{up_conv_block_forward.1} parent=0 // pred_check_branch
    %23 = sbr.rel (0) target = $region21
  $region20: #{up_conv_block_forward.1} parent=0 // pred_region
    _
  $region21: #{up_conv_block_forward.1} parent=0 // pred_fallthru
    _
  // Predicated region
  $region22: #{up_conv_block_forward.1} parent=0 // pred_check
    _
  $region23: #{up_conv_block_forward.1} parent=0 // pred_check_branch
    %25 = sbr.rel (0) target = $region25
  $region24: #{up_conv_block_forward.1} parent=0 // pred_region
    _
  $region25: #{up_conv_block_forward.1} parent=0 // pred_fallthru
    _
  // Predicated region
  $region26: #{up_conv_block_forward.1} parent=0 // pred_check
    _
  $region27: #{up_conv_block_forward.1} parent=0 // pred_check_branch
    %27 = sbr.rel (0) target = $region29
  $region28: #{up_conv_block_forward.1} parent=0 // pred_region
    _
  $region29: #{up_conv_block_forward.1} parent=0 // pred_fallthru
    _
  // Predicated region
  $region30: #{up_conv_block_forward.1} parent=0 // pred_check
    _
  $region31: #{up_conv_block_forward.1} parent=0 // pred_check_branch
    %29 = sbr.rel (0) target = $region33
  $region32: #{up_conv_block_forward.1} parent=0 // pred_region
    _
  $region33: #{up_conv_block_forward.1} parent=0 // pred_fallthru
    _
  // Predicated region
  $region34: #{up_conv_block_forward.1} parent=0 // pred_check
    _
  $region35: #{up_conv_block_forward.1} parent=0 // pred_check_branch
    %31 = sbr.rel (0) target = $region37
  $region36: #{up_conv_block_forward.1} parent=0 // pred_region
    _
  $region37: #{up_conv_block_forward.1} parent=0 // pred_fallthru
    _
  %v33 = vld [vmem:[%s2] sm:$0xff]
  %v34 = vld [vmem:[%s2 + $0x8] sm:$0xff]
  %v35 = vld [vmem:[%s2 + $0x10] sm:$0xff]
  %v36 = vld [vmem:[%s2 + $0x18] sm:$0xff]
  %v37 = vld [vmem:[%s2 + $0x20] sm:$0xff]
  %v38 = vld [vmem:[%s2 + $0x28] sm:$0xff]
  %v39 = vld [vmem:[%s2 + $0x30] sm:$0xff]
  %v40 = vld [vmem:[%s2 + $0x38] sm:$0xff]
  %v41 = vld [vmem:[%s2 + $0x40] sm:$0xff]
  %v42 = vld [vmem:[%s2 + $0x48] sm:$0xff]
  %v43 = vld [vmem:[%s2 + $0x50] sm:$0xff]
  %v44 = vld [vmem:[%s2 + $0x58] sm:$0xff]
  %v45 = vld [vmem:[%s2 + $0x60] sm:$0xff]
  %v46 = vld [vmem:[%s2 + $0x68] sm:$0xff]
  %v47 = vld [vmem:[%s2 + $0x70] sm:$0xff]
  %v48 = vld [vmem:[%s2 + $0x78] sm:$0xff]
  %v49 = vld [vmem:[%s2 + $0x80] sm:$0x1]
  %v50 = vld [vmem:[%s2 + $0x88] sm:$0x1]
  %v51 = vld [vmem:[%s2 + $0x90] sm:$0x1]
  %v52 = vld [vmem:[%s2 + $0x98] sm:$0x1]
  %v53 = vld [vmem:[%s2 + $0xa0] sm:$0x1]
  %v54 = vld [vmem:[%s2 + $0xa8] sm:$0x1]
  %v55 = vld [vmem:[%s2 + $0xb0] sm:$0x1]
  %v56 = vld [vmem:[%s2 + $0xb8] sm:$0x1]
  %v57 = vld [vmem:[%s2 + $0xc0] sm:$0x1]
  %v58 = vld [vmem:[%s2 + $0xc8] sm:$0x1]
  %v59 = vld [vmem:[%s2 + $0xd0] sm:$0x1]
  %v60 = vld [vmem:[%s2 + $0xd8] sm:$0x1]
  %v61 = vld [vmem:[%s2 + $0xe0] sm:$0x1]
  %v62 = vld [vmem:[%s2 + $0xe8] sm:$0x1]
  %v63 = vld [vmem:[%s2 + $0xf0] sm:$0x1]
  %v64 = vld [vmem:[%s2 + $0xf8] sm:$0x1]
  %v65 = vld [vmem:[%s0] sm:$0xff]
  %v66 = vld [vmem:[%s0 + $0x8] sm:$0xff]
  %v67 = vld [vmem:[%s0 + $0x10] sm:$0xff]
  %v68 = vld [vmem:[%s0 + $0x18] sm:$0xff]
  %v69 = vunpack.c.l.bf16 %v65
  %v70 = vunpack.c.h.bf16 %v65
  %v71 = vunpack.c.l.bf16 %v66
  %v72 = vunpack.c.h.bf16 %v66
  %v73 = vunpack.c.l.bf16 %v67
  %v74 = vunpack.c.h.bf16 %v67
  %v75 = vunpack.c.l.bf16 %v68
  %v76 = vunpack.c.h.bf16 %v68
  %s77 = scalar_lea.vmem %s0, 32
  %v78 = vld [vmem:[%s77] sm:$0xff]
  %v79 = vld [vmem:[%s77 + $0x8] sm:$0xff]
  %v80 = vld [vmem:[%s77 + $0x10] sm:$0xff]
  %v81 = vld [vmem:[%s77 + $0x18] sm:$0xff]
  %v82 = vunpack.c.l.bf16 %v78
  %v83 = vunpack.c.h.bf16 %v78
  %v84 = vunpack.c.l.bf16 %v79
  %v85 = vunpack.c.h.bf16 %v79
  %v86 = vunpack.c.l.bf16 %v80
  %v87 = vunpack.c.h.bf16 %v80
  %v88 = vunpack.c.l.bf16 %v81
  %v89 = vunpack.c.h.bf16 %v81
  %v90 = vld [vmem:[%s1] sm:$0xff]
  %v91 = vld [vmem:[%s1 + $0x8] sm:$0xff]
  %v92 = vld [vmem:[%s1 + $0x10] sm:$0xff]
  %v93 = vld [vmem:[%s1 + $0x18] sm:$0xff]
  %s94 = scalar_lea.vmem %s1, 32
  %v95 = vld [vmem:[%s94] sm:$0xff]
  %v96 = vld [vmem:[%s94 + $0x8] sm:$0xff]
  %v97 = vld [vmem:[%s94 + $0x10] sm:$0xff]
  %v98 = vld [vmem:[%s94 + $0x18] sm:$0xff]
  %v103 = vcombine.high %v90, %v90
  %v104 = vcombine.high %v91, %v91
  %v105 = vcombine.high %v92, %v92
  %v106 = vcombine.high %v93, %v93
  %v115 = vcombine.high %v95, %v95
  %v116 = vcombine.high %v96, %v96
  %v117 = vcombine.high %v97, %v97
  %v118 = vcombine.high %v98, %v98
  %v123 = vld [vmem:[%s3] sm:$0x3]
  %140 = vrot.lane.b32.xlu0 %v69, 33
  %v141 = vpop.permute.xlu0 %140
  %142 = vrot.lane.b32.xlu0 %v70, 33
  %v143 = vpop.permute.xlu0 %142
  %144 = vrot.lane.b32.xlu0 %v71, 33
  %v145 = vpop.permute.xlu0 %144
  %146 = vrot.lane.b32.xlu0 %v72, 33
  %v147 = vpop.permute.xlu0 %146
  %148 = vrot.lane.b32.xlu0 %v73, 33
  %v149 = vpop.permute.xlu0 %148
  %150 = vrot.lane.b32.xlu0 %v74, 33
  %v151 = vpop.permute.xlu0 %150
  %152 = vrot.lane.b32.xlu0 %v75, 33
  %v153 = vpop.permute.xlu0 %152
  %154 = vrot.lane.b32.xlu0 %v76, 33
  %v155 = vpop.permute.xlu0 %154
  %156 = vrot.lane.b32.xlu0 %v82, 33
  %v157 = vpop.permute.xlu0 %156
  %158 = vrot.lane.b32.xlu0 %v83, 33
  %v159 = vpop.permute.xlu0 %158
  %160 = vrot.lane.b32.xlu0 %v84, 33
  %v161 = vpop.permute.xlu0 %160
  %162 = vrot.lane.b32.xlu0 %v85, 33
  %v163 = vpop.permute.xlu0 %162
  %164 = vrot.lane.b32.xlu0 %v86, 33
  %v165 = vpop.permute.xlu0 %164
  %166 = vrot.lane.b32.xlu0 %v87, 33
  %v167 = vpop.permute.xlu0 %166
  %168 = vrot.lane.b32.xlu0 %v88, 33
  %v169 = vpop.permute.xlu0 %168
  %170 = vrot.lane.b32.xlu0 %v89, 33
  %v171 = vpop.permute.xlu0 %170
  %vm172 = vcmask 269312
  %v173 = vsel %vm172, %v141, %v143
  %v174 = vsel %vm172, %v143, %v145
  %v175 = vsel %vm172, %v145, %v147
  %v176 = vsel %vm172, %v147, %v149
  %v177 = vsel %vm172, %v149, %v151
  %v178 = vsel %vm172, %v151, %v153
  %v179 = vsel %vm172, %v153, %v155
  %v180 = vsel %vm172, %v155, %v157
  %v181 = vsel %vm172, %v157, %v159
  %v182 = vsel %vm172, %v159, %v161
  %v183 = vsel %vm172, %v161, %v163
  %v184 = vsel %vm172, %v163, %v165
  %v185 = vsel %vm172, %v165, %v167
  %v186 = vsel %vm172, %v167, %v169
  %v187 = vsel %vm172, %v169, %v171
  %v204 = vsel %vm172, 0.0, %v141
  %v205 = vlaneseq
  %v206 = vshrl.u32 %v205, 7
  %v207 = vsub.s32 0, %v206
  %v208 = vrot.slane %v33, %v207
  %v209 = vlaneseq
  %v210 = vshrl.u32 %v209, 7
  %v211 = vsub.s32 0, %v210
  %v212 = vrot.slane %v34, %v211
  %v213 = vlaneseq
  %v214 = vshrl.u32 %v213, 7
  %v215 = vsub.s32 0, %v214
  %v216 = vrot.slane %v35, %v215
  %v217 = vlaneseq
  %v218 = vshrl.u32 %v217, 7
  %v219 = vsub.s32 0, %v218
  %v220 = vrot.slane %v36, %v219
  %v221 = vlaneseq
  %v222 = vshrl.u32 %v221, 7
  %v223 = vsub.s32 0, %v222
  %v224 = vrot.slane %v37, %v223
  %v225 = vlaneseq
  %v226 = vshrl.u32 %v225, 7
  %v227 = vsub.s32 0, %v226
  %v228 = vrot.slane %v38, %v227
  %v229 = vlaneseq
  %v230 = vshrl.u32 %v229, 7
  %v231 = vsub.s32 0, %v230
  %v232 = vrot.slane %v39, %v231
  %v233 = vlaneseq
  %v234 = vshrl.u32 %v233, 7
  %v235 = vsub.s32 0, %v234
  %v236 = vrot.slane %v40, %v235
  %v237 = vlaneseq
  %v238 = vshrl.u32 %v237, 7
  %v239 = vsub.s32 0, %v238
  %v240 = vrot.slane %v41, %v239
  %v241 = vlaneseq
  %v242 = vshrl.u32 %v241, 7
  %v243 = vsub.s32 0, %v242
  %v244 = vrot.slane %v42, %v243
  %v245 = vlaneseq
  %v246 = vshrl.u32 %v245, 7
  %v247 = vsub.s32 0, %v246
  %v248 = vrot.slane %v43, %v247
  %v249 = vlaneseq
  %v250 = vshrl.u32 %v249, 7
  %v251 = vsub.s32 0, %v250
  %v252 = vrot.slane %v44, %v251
  %v253 = vlaneseq
  %v254 = vshrl.u32 %v253, 7
  %v255 = vsub.s32 0, %v254
  %v256 = vrot.slane %v45, %v255
  %v257 = vlaneseq
  %v258 = vshrl.u32 %v257, 7
  %v259 = vsub.s32 0, %v258
  %v260 = vrot.slane %v46, %v259
  %v261 = vlaneseq
  %v262 = vshrl.u32 %v261, 7
  %v263 = vsub.s32 0, %v262
  %v264 = vrot.slane %v47, %v263
  %v265 = vlaneseq
  %v266 = vshrl.u32 %v265, 7
  %v267 = vsub.s32 0, %v266
  %v268 = vrot.slane %v48, %v267
  %v269 = vmul.f32 %v204, %v208
  %v270 = vmul.f32 %v173, %v212
  %v271 = vmul.f32 %v174, %v216
  %v272 = vmul.f32 %v175, %v220
  %v273 = vmul.f32 %v176, %v224
  %v274 = vmul.f32 %v177, %v228
  %v275 = vmul.f32 %v178, %v232
  %v276 = vmul.f32 %v179, %v236
  %v277 = vmul.f32 %v180, %v240
  %v278 = vmul.f32 %v181, %v244
  %v279 = vmul.f32 %v182, %v248
  %v280 = vmul.f32 %v183, %v252
  %v281 = vmul.f32 %v184, %v256
  %v282 = vmul.f32 %v185, %v260
  %v283 = vmul.f32 %v186, %v264
  %v284 = vmul.f32 %v187, %v268
  %285 = vrot.lane.b32.xlu0 %v69, 32
  %v286 = vpop.permute.xlu0 %285
  %287 = vrot.lane.b32.xlu0 %v70, 32
  %v288 = vpop.permute.xlu0 %287
  %289 = vrot.lane.b32.xlu0 %v71, 32
  %v290 = vpop.permute.xlu0 %289
  %291 = vrot.lane.b32.xlu0 %v72, 32
  %v292 = vpop.permute.xlu0 %291
  %293 = vrot.lane.b32.xlu0 %v73, 32
  %v294 = vpop.permute.xlu0 %293
  %295 = vrot.lane.b32.xlu0 %v74, 32
  %v296 = vpop.permute.xlu0 %295
  %297 = vrot.lane.b32.xlu0 %v75, 32
  %v298 = vpop.permute.xlu0 %297
  %299 = vrot.lane.b32.xlu0 %v76, 32
  %v300 = vpop.permute.xlu0 %299
  %301 = vrot.lane.b32.xlu0 %v82, 32
  %v302 = vpop.permute.xlu0 %301
  %303 = vrot.lane.b32.xlu0 %v83, 32
  %v304 = vpop.permute.xlu0 %303
  %305 = vrot.lane.b32.xlu0 %v84, 32
  %v306 = vpop.permute.xlu0 %305
  %307 = vrot.lane.b32.xlu0 %v85, 32
  %v308 = vpop.permute.xlu0 %307
  %309 = vrot.lane.b32.xlu0 %v86, 32
  %v310 = vpop.permute.xlu0 %309
  %311 = vrot.lane.b32.xlu0 %v87, 32
  %v312 = vpop.permute.xlu0 %311
  %313 = vrot.lane.b32.xlu0 %v88, 32
  %v314 = vpop.permute.xlu0 %313
  %315 = vrot.lane.b32.xlu0 %v89, 32
  %v316 = vpop.permute.xlu0 %315
  %vm317 = vcmask 261120
  %v318 = vsel %vm317, %v286, %v288
  %v319 = vsel %vm317, %v288, %v290
  %v320 = vsel %vm317, %v290, %v292
  %v321 = vsel %vm317, %v292, %v294
  %v322 = vsel %vm317, %v294, %v296
  %v323 = vsel %vm317, %v296, %v298
  %v324 = vsel %vm317, %v298, %v300
  %v325 = vsel %vm317, %v300, %v302
  %v326 = vsel %vm317, %v302, %v304
  %v327 = vsel %vm317, %v304, %v306
  %v328 = vsel %vm317, %v306, %v308
  %v329 = vsel %vm317, %v308, %v310
  %v330 = vsel %vm317, %v310, %v312
  %v331 = vsel %vm317, %v312, %v314
  %v332 = vsel %vm317, %v314, %v316
  %v349 = vsel %vm317, 0.0, %v286
  %v350 = vlaneseq
  %v351 = vshrl.u32 %v350, 7
  %v352 = vsub.s32 1, %v351
  %v353 = vrot.slane %v33, %v352
  %v354 = vlaneseq
  %v355 = vshrl.u32 %v354, 7
  %v356 = vsub.s32 1, %v355
  %v357 = vrot.slane %v34, %v356
  %v358 = vlaneseq
  %v359 = vshrl.u32 %v358, 7
  %v360 = vsub.s32 1, %v359
  %v361 = vrot.slane %v35, %v360
  %v362 = vlaneseq
  %v363 = vshrl.u32 %v362, 7
  %v364 = vsub.s32 1, %v363
  %v365 = vrot.slane %v36, %v364
  %v366 = vlaneseq
  %v367 = vshrl.u32 %v366, 7
  %v368 = vsub.s32 1, %v367
  %v369 = vrot.slane %v37, %v368
  %v370 = vlaneseq
  %v371 = vshrl.u32 %v370, 7
  %v372 = vsub.s32 1, %v371
  %v373 = vrot.slane %v38, %v372
  %v374 = vlaneseq
  %v375 = vshrl.u32 %v374, 7
  %v376 = vsub.s32 1, %v375
  %v377 = vrot.slane %v39, %v376
  %v378 = vlaneseq
  %v379 = vshrl.u32 %v378, 7
  %v380 = vsub.s32 1, %v379
  %v381 = vrot.slane %v40, %v380
  %v382 = vlaneseq
  %v383 = vshrl.u32 %v382, 7
  %v384 = vsub.s32 1, %v383
  %v385 = vrot.slane %v41, %v384
  %v386 = vlaneseq
  %v387 = vshrl.u32 %v386, 7
  %v388 = vsub.s32 1, %v387
  %v389 = vrot.slane %v42, %v388
  %v390 = vlaneseq
  %v391 = vshrl.u32 %v390, 7
  %v392 = vsub.s32 1, %v391
  %v393 = vrot.slane %v43, %v392
  %v394 = vlaneseq
  %v395 = vshrl.u32 %v394, 7
  %v396 = vsub.s32 1, %v395
  %v397 = vrot.slane %v44, %v396
  %v398 = vlaneseq
  %v399 = vshrl.u32 %v398, 7
  %v400 = vsub.s32 1, %v399
  %v401 = vrot.slane %v45, %v400
  %v402 = vlaneseq
  %v403 = vshrl.u32 %v402, 7
  %v404 = vsub.s32 1, %v403
  %v405 = vrot.slane %v46, %v404
  %v406 = vlaneseq
  %v407 = vshrl.u32 %v406, 7
  %v408 = vsub.s32 1, %v407
  %v409 = vrot.slane %v47, %v408
  %v410 = vlaneseq
  %v411 = vshrl.u32 %v410, 7
  %v412 = vsub.s32 1, %v411
  %v413 = vrot.slane %v48, %v412
  %v414 = vmul.f32 %v349, %v353
  %v415 = vmul.f32 %v318, %v357
  %v416 = vmul.f32 %v319, %v361
  %v417 = vmul.f32 %v320, %v365
  %v418 = vmul.f32 %v321, %v369
  %v419 = vmul.f32 %v322, %v373
  %v420 = vmul.f32 %v323, %v377
  %v421 = vmul.f32 %v324, %v381
  %v422 = vmul.f32 %v325, %v385
  %v423 = vmul.f32 %v326, %v389
  %v424 = vmul.f32 %v327, %v393
  %v425 = vmul.f32 %v328, %v397
  %v426 = vmul.f32 %v329, %v401
  %v427 = vmul.f32 %v330, %v405
  %v428 = vmul.f32 %v331, %v409
  %v429 = vmul.f32 %v332, %v413
  %430 = vrot.lane.b32.xlu0 %v69, 31
  %v431 = vpop.permute.xlu0 %430
  %432 = vrot.lane.b32.xlu0 %v70, 31
  %v433 = vpop.permute.xlu0 %432
  %434 = vrot.lane.b32.xlu0 %v71, 31
  %v435 = vpop.permute.xlu0 %434
  %436 = vrot.lane.b32.xlu0 %v72, 31
  %v437 = vpop.permute.xlu0 %436
  %438 = vrot.lane.b32.xlu0 %v73, 31
  %v439 = vpop.permute.xlu0 %438
  %440 = vrot.lane.b32.xlu0 %v74, 31
  %v441 = vpop.permute.xlu0 %440
  %442 = vrot.lane.b32.xlu0 %v75, 31
  %v443 = vpop.permute.xlu0 %442
  %444 = vrot.lane.b32.xlu0 %v76, 31
  %v445 = vpop.permute.xlu0 %444
  %446 = vrot.lane.b32.xlu0 %v82, 31
  %v447 = vpop.permute.xlu0 %446
  %448 = vrot.lane.b32.xlu0 %v83, 31
  %v449 = vpop.permute.xlu0 %448
  %450 = vrot.lane.b32.xlu0 %v84, 31
  %v451 = vpop.permute.xlu0 %450
  %452 = vrot.lane.b32.xlu0 %v85, 31
  %v453 = vpop.permute.xlu0 %452
  %454 = vrot.lane.b32.xlu0 %v86, 31
  %v455 = vpop.permute.xlu0 %454
  %456 = vrot.lane.b32.xlu0 %v87, 31
  %v457 = vpop.permute.xlu0 %456
  %458 = vrot.lane.b32.xlu0 %v88, 31
  %v459 = vpop.permute.xlu0 %458
  %460 = vrot.lane.b32.xlu0 %v89, 31
  %v461 = vpop.permute.xlu0 %460
  %vm462 = vcmask 252928
  %v463 = vsel %vm462, %v431, %v433
  %v464 = vsel %vm462, %v433, %v435
  %v465 = vsel %vm462, %v435, %v437
  %v466 = vsel %vm462, %v437, %v439
  %v467 = vsel %vm462, %v439, %v441
  %v468 = vsel %vm462, %v441, %v443
  %v469 = vsel %vm462, %v443, %v445
  %v470 = vsel %vm462, %v445, %v447
  %v471 = vsel %vm462, %v447, %v449
  %v472 = vsel %vm462, %v449, %v451
  %v473 = vsel %vm462, %v451, %v453
  %v474 = vsel %vm462, %v453, %v455
  %v475 = vsel %vm462, %v455, %v457
  %v476 = vsel %vm462, %v457, %v459
  %v477 = vsel %vm462, %v459, %v461
  %v494 = vsel %vm462, 0.0, %v431
  %v495 = vlaneseq
  %v496 = vshrl.u32 %v495, 7
  %v497 = vsub.s32 2, %v496
  %v498 = vrot.slane %v33, %v497
  %v499 = vlaneseq
  %v500 = vshrl.u32 %v499, 7
  %v501 = vsub.s32 2, %v500
  %v502 = vrot.slane %v34, %v501
  %v503 = vlaneseq
  %v504 = vshrl.u32 %v503, 7
  %v505 = vsub.s32 2, %v504
  %v506 = vrot.slane %v35, %v505
  %v507 = vlaneseq
  %v508 = vshrl.u32 %v507, 7
  %v509 = vsub.s32 2, %v508
  %v510 = vrot.slane %v36, %v509
  %v511 = vlaneseq
  %v512 = vshrl.u32 %v511, 7
  %v513 = vsub.s32 2, %v512
  %v514 = vrot.slane %v37, %v513
  %v515 = vlaneseq
  %v516 = vshrl.u32 %v515, 7
  %v517 = vsub.s32 2, %v516
  %v518 = vrot.slane %v38, %v517
  %v519 = vlaneseq
  %v520 = vshrl.u32 %v519, 7
  %v521 = vsub.s32 2, %v520
  %v522 = vrot.slane %v39, %v521
  %v523 = vlaneseq
  %v524 = vshrl.u32 %v523, 7
  %v525 = vsub.s32 2, %v524
  %v526 = vrot.slane %v40, %v525
  %v527 = vlaneseq
  %v528 = vshrl.u32 %v527, 7
  %v529 = vsub.s32 2, %v528
  %v530 = vrot.slane %v41, %v529
  %v531 = vlaneseq
  %v532 = vshrl.u32 %v531, 7
  %v533 = vsub.s32 2, %v532
  %v534 = vrot.slane %v42, %v533
  %v535 = vlaneseq
  %v536 = vshrl.u32 %v535, 7
  %v537 = vsub.s32 2, %v536
  %v538 = vrot.slane %v43, %v537
  %v539 = vlaneseq
  %v540 = vshrl.u32 %v539, 7
  %v541 = vsub.s32 2, %v540
  %v542 = vrot.slane %v44, %v541
  %v543 = vlaneseq
  %v544 = vshrl.u32 %v543, 7
  %v545 = vsub.s32 2, %v544
  %v546 = vrot.slane %v45, %v545
  %v547 = vlaneseq
  %v548 = vshrl.u32 %v547, 7
  %v549 = vsub.s32 2, %v548
  %v550 = vrot.slane %v46, %v549
  %v551 = vlaneseq
  %v552 = vshrl.u32 %v551, 7
  %v553 = vsub.s32 2, %v552
  %v554 = vrot.slane %v47, %v553
  %v555 = vlaneseq
  %v556 = vshrl.u32 %v555, 7
  %v557 = vsub.s32 2, %v556
  %v558 = vrot.slane %v48, %v557
  %v559 = vmul.f32 %v494, %v498
  %v560 = vmul.f32 %v463, %v502
  %v561 = vmul.f32 %v464, %v506
  %v562 = vmul.f32 %v465, %v510
  %v563 = vmul.f32 %v466, %v514
  %v564 = vmul.f32 %v467, %v518
  %v565 = vmul.f32 %v468, %v522
  %v566 = vmul.f32 %v469, %v526
  %v567 = vmul.f32 %v470, %v530
  %v568 = vmul.f32 %v471, %v534
  %v569 = vmul.f32 %v472, %v538
  %v570 = vmul.f32 %v473, %v542
  %v571 = vmul.f32 %v474, %v546
  %v572 = vmul.f32 %v475, %v550
  %v573 = vmul.f32 %v476, %v554
  %v574 = vmul.f32 %v477, %v558
  %575 = vrot.lane.b32.xlu0 %v69, 1
  %v576 = vpop.permute.xlu0 %575
  %577 = vrot.lane.b32.xlu0 %v70, 1
  %v578 = vpop.permute.xlu0 %577
  %579 = vrot.lane.b32.xlu0 %v71, 1
  %v580 = vpop.permute.xlu0 %579
  %581 = vrot.lane.b32.xlu0 %v72, 1
  %v582 = vpop.permute.xlu0 %581
  %583 = vrot.lane.b32.xlu0 %v73, 1
  %v584 = vpop.permute.xlu0 %583
  %585 = vrot.lane.b32.xlu0 %v74, 1
  %v586 = vpop.permute.xlu0 %585
  %587 = vrot.lane.b32.xlu0 %v75, 1
  %v588 = vpop.permute.xlu0 %587
  %589 = vrot.lane.b32.xlu0 %v76, 1
  %v590 = vpop.permute.xlu0 %589
  %591 = vrot.lane.b32.xlu0 %v82, 1
  %v592 = vpop.permute.xlu0 %591
  %593 = vrot.lane.b32.xlu0 %v83, 1
  %v594 = vpop.permute.xlu0 %593
  %595 = vrot.lane.b32.xlu0 %v84, 1
  %v596 = vpop.permute.xlu0 %595
  %597 = vrot.lane.b32.xlu0 %v85, 1
  %v598 = vpop.permute.xlu0 %597
  %599 = vrot.lane.b32.xlu0 %v86, 1
  %v600 = vpop.permute.xlu0 %599
  %601 = vrot.lane.b32.xlu0 %v87, 1
  %v602 = vpop.permute.xlu0 %601
  %603 = vrot.lane.b32.xlu0 %v88, 1
  %v604 = vpop.permute.xlu0 %603
  %605 = vrot.lane.b32.xlu0 %v89, 1
  %v606 = vpop.permute.xlu0 %605
  %vm607 = vcmask 7168
  %v608 = vsel %vm607, %v576, %v578
  %v609 = vsel %vm607, %v578, %v580
  %v610 = vsel %vm607, %v580, %v582
  %v611 = vsel %vm607, %v582, %v584
  %v612 = vsel %vm607, %v584, %v586
  %v613 = vsel %vm607, %v586, %v588
  %v614 = vsel %vm607, %v588, %v590
  %v615 = vsel %vm607, %v590, %v592
  %v616 = vsel %vm607, %v592, %v594
  %v617 = vsel %vm607, %v594, %v596
  %v618 = vsel %vm607, %v596, %v598
  %v619 = vsel %vm607, %v598, %v600
  %v620 = vsel %vm607, %v600, %v602
  %v621 = vsel %vm607, %v602, %v604
  %v622 = vsel %vm607, %v604, %v606
  %v639 = vsel %vm607, 0.0, %v576
  %v640 = vlaneseq
  %v641 = vshrl.u32 %v640, 7
  %v642 = vsub.s32 3, %v641
  %v643 = vrot.slane %v33, %v642
  %v644 = vlaneseq
  %v645 = vshrl.u32 %v644, 7
  %v646 = vsub.s32 3, %v645
  %v647 = vrot.slane %v34, %v646
  %v648 = vlaneseq
  %v649 = vshrl.u32 %v648, 7
  %v650 = vsub.s32 3, %v649
  %v651 = vrot.slane %v35, %v650
  %v652 = vlaneseq
  %v653 = vshrl.u32 %v652, 7
  %v654 = vsub.s32 3, %v653
  %v655 = vrot.slane %v36, %v654
  %v656 = vlaneseq
  %v657 = vshrl.u32 %v656, 7
  %v658 = vsub.s32 3, %v657
  %v659 = vrot.slane %v37, %v658
  %v660 = vlaneseq
  %v661 = vshrl.u32 %v660, 7
  %v662 = vsub.s32 3, %v661
  %v663 = vrot.slane %v38, %v662
  %v664 = vlaneseq
  %v665 = vshrl.u32 %v664, 7
  %v666 = vsub.s32 3, %v665
  %v667 = vrot.slane %v39, %v666
  %v668 = vlaneseq
  %v669 = vshrl.u32 %v668, 7
  %v670 = vsub.s32 3, %v669
  %v671 = vrot.slane %v40, %v670
  %v672 = vlaneseq
  %v673 = vshrl.u32 %v672, 7
  %v674 = vsub.s32 3, %v673
  %v675 = vrot.slane %v41, %v674
  %v676 = vlaneseq
  %v677 = vshrl.u32 %v676, 7
  %v678 = vsub.s32 3, %v677
  %v679 = vrot.slane %v42, %v678
  %v680 = vlaneseq
  %v681 = vshrl.u32 %v680, 7
  %v682 = vsub.s32 3, %v681
  %v683 = vrot.slane %v43, %v682
  %v684 = vlaneseq
  %v685 = vshrl.u32 %v684, 7
  %v686 = vsub.s32 3, %v685
  %v687 = vrot.slane %v44, %v686
  %v688 = vlaneseq
  %v689 = vshrl.u32 %v688, 7
  %v690 = vsub.s32 3, %v689
  %v691 = vrot.slane %v45, %v690
  %v692 = vlaneseq
  %v693 = vshrl.u32 %v692, 7
  %v694 = vsub.s32 3, %v693
  %v695 = vrot.slane %v46, %v694
  %v696 = vlaneseq
  %v697 = vshrl.u32 %v696, 7
  %v698 = vsub.s32 3, %v697
  %v699 = vrot.slane %v47, %v698
  %v700 = vlaneseq
  %v701 = vshrl.u32 %v700, 7
  %v702 = vsub.s32 3, %v701
  %v703 = vrot.slane %v48, %v702
  %v704 = vmul.f32 %v639, %v643
  %v705 = vmul.f32 %v608, %v647
  %v706 = vmul.f32 %v609, %v651
  %v707 = vmul.f32 %v610, %v655
  %v708 = vmul.f32 %v611, %v659
  %v709 = vmul.f32 %v612, %v663
  %v710 = vmul.f32 %v613, %v667
  %v711 = vmul.f32 %v614, %v671
  %v712 = vmul.f32 %v615, %v675
  %v713 = vmul.f32 %v616, %v679
  %v714 = vmul.f32 %v617, %v683
  %v715 = vmul.f32 %v618, %v687
  %v716 = vmul.f32 %v619, %v691
  %v717 = vmul.f32 %v620, %v695
  %v718 = vmul.f32 %v621, %v699
  %v719 = vmul.f32 %v622, %v703
  %720 = vrot.lane.b32.xlu0 %v69, 127
  %v721 = vpop.permute.xlu0 %720
  %722 = vrot.lane.b32.xlu0 %v70, 127
  %v723 = vpop.permute.xlu0 %722
  %724 = vrot.lane.b32.xlu0 %v71, 127
  %v725 = vpop.permute.xlu0 %724
  %726 = vrot.lane.b32.xlu0 %v72, 127
  %v727 = vpop.permute.xlu0 %726
  %728 = vrot.lane.b32.xlu0 %v73, 127
  %v729 = vpop.permute.xlu0 %728
  %730 = vrot.lane.b32.xlu0 %v74, 127
  %v731 = vpop.permute.xlu0 %730
  %732 = vrot.lane.b32.xlu0 %v75, 127
  %v733 = vpop.permute.xlu0 %732
  %734 = vrot.lane.b32.xlu0 %v76, 127
  %v735 = vpop.permute.xlu0 %734
  %736 = vrot.lane.b32.xlu0 %v82, 127
  %v737 = vpop.permute.xlu0 %736
  %738 = vrot.lane.b32.xlu0 %v83, 127
  %v739 = vpop.permute.xlu0 %738
  %740 = vrot.lane.b32.xlu0 %v84, 127
  %v741 = vpop.permute.xlu0 %740
  %742 = vrot.lane.b32.xlu0 %v85, 127
  %v743 = vpop.permute.xlu0 %742
  %744 = vrot.lane.b32.xlu0 %v86, 127
  %v745 = vpop.permute.xlu0 %744
  %746 = vrot.lane.b32.xlu0 %v87, 127
  %v747 = vpop.permute.xlu0 %746
  %748 = vrot.lane.b32.xlu0 %v88, 127
  %v749 = vpop.permute.xlu0 %748
  %750 = vrot.lane.b32.xlu0 %v89, 127
  %v751 = vpop.permute.xlu0 %750
  %vm752 = vcmask 1039360
  %v753 = vsel %vm752, %v721, %v723
  %v754 = vsel %vm752, %v723, %v725
  %v755 = vsel %vm752, %v725, %v727
  %v756 = vsel %vm752, %v727, %v729
  %v757 = vsel %vm752, %v729, %v731
  %v758 = vsel %vm752, %v731, %v733
  %v759 = vsel %vm752, %v733, %v735
  %v760 = vsel %vm752, %v735, %v737
  %v761 = vsel %vm752, %v737, %v739
  %v762 = vsel %vm752, %v739, %v741
  %v763 = vsel %vm752, %v741, %v743
  %v764 = vsel %vm752, %v743, %v745
  %v765 = vsel %vm752, %v745, %v747
  %v766 = vsel %vm752, %v747, %v749
  %v767 = vsel %vm752, %v749, %v751
  %v784 = vsel %vm752, %v751, 0.0
  %v785 = vlaneseq
  %v786 = vshrl.u32 %v785, 7
  %v787 = vsub.s32 5, %v786
  %v788 = vrot.slane %v33, %v787
  %v789 = vlaneseq
  %v790 = vshrl.u32 %v789, 7
  %v791 = vsub.s32 5, %v790
  %v792 = vrot.slane %v34, %v791
  %v793 = vlaneseq
  %v794 = vshrl.u32 %v793, 7
  %v795 = vsub.s32 5, %v794
  %v796 = vrot.slane %v35, %v795
  %v797 = vlaneseq
  %v798 = vshrl.u32 %v797, 7
  %v799 = vsub.s32 5, %v798
  %v800 = vrot.slane %v36, %v799
  %v801 = vlaneseq
  %v802 = vshrl.u32 %v801, 7
  %v803 = vsub.s32 5, %v802
  %v804 = vrot.slane %v37, %v803
  %v805 = vlaneseq
  %v806 = vshrl.u32 %v805, 7
  %v807 = vsub.s32 5, %v806
  %v808 = vrot.slane %v38, %v807
  %v809 = vlaneseq
  %v810 = vshrl.u32 %v809, 7
  %v811 = vsub.s32 5, %v810
  %v812 = vrot.slane %v39, %v811
  %v813 = vlaneseq
  %v814 = vshrl.u32 %v813, 7
  %v815 = vsub.s32 5, %v814
  %v816 = vrot.slane %v40, %v815
  %v817 = vlaneseq
  %v818 = vshrl.u32 %v817, 7
  %v819 = vsub.s32 5, %v818
  %v820 = vrot.slane %v41, %v819
  %v821 = vlaneseq
  %v822 = vshrl.u32 %v821, 7
  %v823 = vsub.s32 5, %v822
  %v824 = vrot.slane %v42, %v823
  %v825 = vlaneseq
  %v826 = vshrl.u32 %v825, 7
  %v827 = vsub.s32 5, %v826
  %v828 = vrot.slane %v43, %v827
  %v829 = vlaneseq
  %v830 = vshrl.u32 %v829, 7
  %v831 = vsub.s32 5, %v830
  %v832 = vrot.slane %v44, %v831
  %v833 = vlaneseq
  %v834 = vshrl.u32 %v833, 7
  %v835 = vsub.s32 5, %v834
  %v836 = vrot.slane %v45, %v835
  %v837 = vlaneseq
  %v838 = vshrl.u32 %v837, 7
  %v839 = vsub.s32 5, %v838
  %v840 = vrot.slane %v46, %v839
  %v841 = vlaneseq
  %v842 = vshrl.u32 %v841, 7
  %v843 = vsub.s32 5, %v842
  %v844 = vrot.slane %v47, %v843
  %v845 = vlaneseq
  %v846 = vshrl.u32 %v845, 7
  %v847 = vsub.s32 5, %v846
  %v848 = vrot.slane %v48, %v847
  %v849 = vmul.f32 %v753, %v788
  %v850 = vmul.f32 %v754, %v792
  %v851 = vmul.f32 %v755, %v796
  %v852 = vmul.f32 %v756, %v800
  %v853 = vmul.f32 %v757, %v804
  %v854 = vmul.f32 %v758, %v808
  %v855 = vmul.f32 %v759, %v812
  %v856 = vmul.f32 %v760, %v816
  %v857 = vmul.f32 %v761, %v820
  %v858 = vmul.f32 %v762, %v824
  %v859 = vmul.f32 %v763, %v828
  %v860 = vmul.f32 %v764, %v832
  %v861 = vmul.f32 %v765, %v836
  %v862 = vmul.f32 %v766, %v840
  %v863 = vmul.f32 %v767, %v844
  %v864 = vmul.f32 %v784, %v848
  %865 = vrot.lane.b32.xlu0 %v69, 97
  %v866 = vpop.permute.xlu0 %865
  %867 = vrot.lane.b32.xlu0 %v70, 97
  %v868 = vpop.permute.xlu0 %867
  %869 = vrot.lane.b32.xlu0 %v71, 97
  %v870 = vpop.permute.xlu0 %869
  %871 = vrot.lane.b32.xlu0 %v72, 97
  %v872 = vpop.permute.xlu0 %871
  %873 = vrot.lane.b32.xlu0 %v73, 97
  %v874 = vpop.permute.xlu0 %873
  %875 = vrot.lane.b32.xlu0 %v74, 97
  %v876 = vpop.permute.xlu0 %875
  %877 = vrot.lane.b32.xlu0 %v75, 97
  %v878 = vpop.permute.xlu0 %877
  %879 = vrot.lane.b32.xlu0 %v76, 97
  %v880 = vpop.permute.xlu0 %879
  %881 = vrot.lane.b32.xlu0 %v82, 97
  %v882 = vpop.permute.xlu0 %881
  %883 = vrot.lane.b32.xlu0 %v83, 97
  %v884 = vpop.permute.xlu0 %883
  %885 = vrot.lane.b32.xlu0 %v84, 97
  %v886 = vpop.permute.xlu0 %885
  %887 = vrot.lane.b32.xlu0 %v85, 97
  %v888 = vpop.permute.xlu0 %887
  %889 = vrot.lane.b32.xlu0 %v86, 97
  %v890 = vpop.permute.xlu0 %889
  %891 = vrot.lane.b32.xlu0 %v87, 97
  %v892 = vpop.permute.xlu0 %891
  %893 = vrot.lane.b32.xlu0 %v88, 97
  %v894 = vpop.permute.xlu0 %893
  %895 = vrot.lane.b32.xlu0 %v89, 97
  %v896 = vpop.permute.xlu0 %895
  %vm897 = vcmask 793600
  %v898 = vsel %vm897, %v866, %v868
  %v899 = vsel %vm897, %v868, %v870
  %v900 = vsel %vm897, %v870, %v872
  %v901 = vsel %vm897, %v872, %v874
  %v902 = vsel %vm897, %v874, %v876
  %v903 = vsel %vm897, %v876, %v878
  %v904 = vsel %vm897, %v878, %v880
  %v905 = vsel %vm897, %v880, %v882
  %v906 = vsel %vm897, %v882, %v884
  %v907 = vsel %vm897, %v884, %v886
  %v908 = vsel %vm897, %v886, %v888
  %v909 = vsel %vm897, %v888, %v890
  %v910 = vsel %vm897, %v890, %v892
  %v911 = vsel %vm897, %v892, %v894
  %v912 = vsel %vm897, %v894, %v896
  %v929 = vsel %vm897, %v896, 0.0
  %v930 = vlaneseq
  %v931 = vshrl.u32 %v930, 7
  %v932 = vsub.s32 6, %v931
  %v933 = vrot.slane %v33, %v932
  %v934 = vlaneseq
  %v935 = vshrl.u32 %v934, 7
  %v936 = vsub.s32 6, %v935
  %v937 = vrot.slane %v34, %v936
  %v938 = vlaneseq
  %v939 = vshrl.u32 %v938, 7
  %v940 = vsub.s32 6, %v939
  %v941 = vrot.slane %v35, %v940
  %v942 = vlaneseq
  %v943 = vshrl.u32 %v942, 7
  %v944 = vsub.s32 6, %v943
  %v945 = vrot.slane %v36, %v944
  %v946 = vlaneseq
  %v947 = vshrl.u32 %v946, 7
  %v948 = vsub.s32 6, %v947
  %v949 = vrot.slane %v37, %v948
  %v950 = vlaneseq
  %v951 = vshrl.u32 %v950, 7
  %v952 = vsub.s32 6, %v951
  %v953 = vrot.slane %v38, %v952
  %v954 = vlaneseq
  %v955 = vshrl.u32 %v954, 7
  %v956 = vsub.s32 6, %v955
  %v957 = vrot.slane %v39, %v956
  %v958 = vlaneseq
  %v959 = vshrl.u32 %v958, 7
  %v960 = vsub.s32 6, %v959
  %v961 = vrot.slane %v40, %v960
  %v962 = vlaneseq
  %v963 = vshrl.u32 %v962, 7
  %v964 = vsub.s32 6, %v963
  %v965 = vrot.slane %v41, %v964
  %v966 = vlaneseq
  %v967 = vshrl.u32 %v966, 7
  %v968 = vsub.s32 6, %v967
  %v969 = vrot.slane %v42, %v968
  %v970 = vlaneseq
  %v971 = vshrl.u32 %v970, 7
  %v972 = vsub.s32 6, %v971
  %v973 = vrot.slane %v43, %v972
  %v974 = vlaneseq
  %v975 = vshrl.u32 %v974, 7
  %v976 = vsub.s32 6, %v975
  %v977 = vrot.slane %v44, %v976
  %v978 = vlaneseq
  %v979 = vshrl.u32 %v978, 7
  %v980 = vsub.s32 6, %v979
  %v981 = vrot.slane %v45, %v980
  %v982 = vlaneseq
  %v983 = vshrl.u32 %v982, 7
  %v984 = vsub.s32 6, %v983
  %v985 = vrot.slane %v46, %v984
  %v986 = vlaneseq
  %v987 = vshrl.u32 %v986, 7
  %v988 = vsub.s32 6, %v987
  %v989 = vrot.slane %v47, %v988
  %v990 = vlaneseq
  %v991 = vshrl.u32 %v990, 7
  %v992 = vsub.s32 6, %v991
  %v993 = vrot.slane %v48, %v992
  %v994 = vmul.f32 %v898, %v933
  %v995 = vmul.f32 %v899, %v937
  %v996 = vmul.f32 %v900, %v941
  %v997 = vmul.f32 %v901, %v945
  %v998 = vmul.f32 %v902, %v949
  %v999 = vmul.f32 %v903, %v953
  %v1000 = vmul.f32 %v904, %v957
  %v1001 = vmul.f32 %v905, %v961
  %v1002 = vmul.f32 %v906, %v965
  %v1003 = vmul.f32 %v907, %v969
  %v1004 = vmul.f32 %v908, %v973
  %v1005 = vmul.f32 %v909, %v977
  %v1006 = vmul.f32 %v910, %v981
  %v1007 = vmul.f32 %v911, %v985
  %v1008 = vmul.f32 %v912, %v989
  %v1009 = vmul.f32 %v929, %v993
  %1010 = vrot.lane.b32.xlu0 %v69, 96
  %v1011 = vpop.permute.xlu0 %1010
  %1012 = vrot.lane.b32.xlu0 %v70, 96
  %v1013 = vpop.permute.xlu0 %1012
  %1014 = vrot.lane.b32.xlu0 %v71, 96
  %v1015 = vpop.permute.xlu0 %1014
  %1016 = vrot.lane.b32.xlu0 %v72, 96
  %v1017 = vpop.permute.xlu0 %1016
  %1018 = vrot.lane.b32.xlu0 %v73, 96
  %v1019 = vpop.permute.xlu0 %1018
  %1020 = vrot.lane.b32.xlu0 %v74, 96
  %v1021 = vpop.permute.xlu0 %1020
  %1022 = vrot.lane.b32.xlu0 %v75, 96
  %v1023 = vpop.permute.xlu0 %1022
  %1024 = vrot.lane.b32.xlu0 %v76, 96
  %v1025 = vpop.permute.xlu0 %1024
  %1026 = vrot.lane.b32.xlu0 %v82, 96
  %v1027 = vpop.permute.xlu0 %1026
  %1028 = vrot.lane.b32.xlu0 %v83, 96
  %v1029 = vpop.permute.xlu0 %1028
  %1030 = vrot.lane.b32.xlu0 %v84, 96
  %v1031 = vpop.permute.xlu0 %1030
  %1032 = vrot.lane.b32.xlu0 %v85, 96
  %v1033 = vpop.permute.xlu0 %1032
  %1034 = vrot.lane.b32.xlu0 %v86, 96
  %v1035 = vpop.permute.xlu0 %1034
  %1036 = vrot.lane.b32.xlu0 %v87, 96
  %v1037 = vpop.permute.xlu0 %1036
  %1038 = vrot.lane.b32.xlu0 %v88, 96
  %v1039 = vpop.permute.xlu0 %1038
  %1040 = vrot.lane.b32.xlu0 %v89, 96
  %v1041 = vpop.permute.xlu0 %1040
  %vm1042 = vcmask 785408
  %v1043 = vsel %vm1042, %v1011, %v1013
  %v1044 = vsel %vm1042, %v1013, %v1015
  %v1045 = vsel %vm1042, %v1015, %v1017
  %v1046 = vsel %vm1042, %v1017, %v1019
  %v1047 = vsel %vm1042, %v1019, %v1021
  %v1048 = vsel %vm1042, %v1021, %v1023
  %v1049 = vsel %vm1042, %v1023, %v1025
  %v1050 = vsel %vm1042, %v1025, %v1027
  %v1051 = vsel %vm1042, %v1027, %v1029
  %v1052 = vsel %vm1042, %v1029, %v1031
  %v1053 = vsel %vm1042, %v1031, %v1033
  %v1054 = vsel %vm1042, %v1033, %v1035
  %v1055 = vsel %vm1042, %v1035, %v1037
  %v1056 = vsel %vm1042, %v1037, %v1039
  %v1057 = vsel %vm1042, %v1039, %v1041
  %v1074 = vsel %vm1042, %v1041, 0.0
  %v1075 = vlaneseq
  %v1076 = vshrl.u32 %v1075, 7
  %v1077 = vsub.s32 7, %v1076
  %v1078 = vrot.slane %v33, %v1077
  %v1079 = vlaneseq
  %v1080 = vshrl.u32 %v1079, 7
  %v1081 = vsub.s32 7, %v1080
  %v1082 = vrot.slane %v34, %v1081
  %v1083 = vlaneseq
  %v1084 = vshrl.u32 %v1083, 7
  %v1085 = vsub.s32 7, %v1084
  %v1086 = vrot.slane %v35, %v1085
  %v1087 = vlaneseq
  %v1088 = vshrl.u32 %v1087, 7
  %v1089 = vsub.s32 7, %v1088
  %v1090 = vrot.slane %v36, %v1089
  %v1091 = vlaneseq
  %v1092 = vshrl.u32 %v1091, 7
  %v1093 = vsub.s32 7, %v1092
  %v1094 = vrot.slane %v37, %v1093
  %v1095 = vlaneseq
  %v1096 = vshrl.u32 %v1095, 7
  %v1097 = vsub.s32 7, %v1096
  %v1098 = vrot.slane %v38, %v1097
  %v1099 = vlaneseq
  %v1100 = vshrl.u32 %v1099, 7
  %v1101 = vsub.s32 7, %v1100
  %v1102 = vrot.slane %v39, %v1101
  %v1103 = vlaneseq
  %v1104 = vshrl.u32 %v1103, 7
  %v1105 = vsub.s32 7, %v1104
  %v1106 = vrot.slane %v40, %v1105
  %v1107 = vlaneseq
  %v1108 = vshrl.u32 %v1107, 7
  %v1109 = vsub.s32 7, %v1108
  %v1110 = vrot.slane %v41, %v1109
  %v1111 = vlaneseq
  %v1112 = vshrl.u32 %v1111, 7
  %v1113 = vsub.s32 7, %v1112
  %v1114 = vrot.slane %v42, %v1113
  %v1115 = vlaneseq
  %v1116 = vshrl.u32 %v1115, 7
  %v1117 = vsub.s32 7, %v1116
  %v1118 = vrot.slane %v43, %v1117
  %v1119 = vlaneseq
  %v1120 = vshrl.u32 %v1119, 7
  %v1121 = vsub.s32 7, %v1120
  %v1122 = vrot.slane %v44, %v1121
  %v1123 = vlaneseq
  %v1124 = vshrl.u32 %v1123, 7
  %v1125 = vsub.s32 7, %v1124
  %v1126 = vrot.slane %v45, %v1125
  %v1127 = vlaneseq
  %v1128 = vshrl.u32 %v1127, 7
  %v1129 = vsub.s32 7, %v1128
  %v1130 = vrot.slane %v46, %v1129
  %v1131 = vlaneseq
  %v1132 = vshrl.u32 %v1131, 7
  %v1133 = vsub.s32 7, %v1132
  %v1134 = vrot.slane %v47, %v1133
  %v1135 = vlaneseq
  %v1136 = vshrl.u32 %v1135, 7
  %v1137 = vsub.s32 7, %v1136
  %v1138 = vrot.slane %v48, %v1137
  %v1139 = vmul.f32 %v1043, %v1078
  %v1140 = vmul.f32 %v1044, %v1082
  %v1141 = vmul.f32 %v1045, %v1086
  %v1142 = vmul.f32 %v1046, %v1090
  %v1143 = vmul.f32 %v1047, %v1094
  %v1144 = vmul.f32 %v1048, %v1098
  %v1145 = vmul.f32 %v1049, %v1102
  %v1146 = vmul.f32 %v1050, %v1106
  %v1147 = vmul.f32 %v1051, %v1110
  %v1148 = vmul.f32 %v1052, %v1114
  %v1149 = vmul.f32 %v1053, %v1118
  %v1150 = vmul.f32 %v1054, %v1122
  %v1151 = vmul.f32 %v1055, %v1126
  %v1152 = vmul.f32 %v1056, %v1130
  %v1153 = vmul.f32 %v1057, %v1134
  %v1154 = vmul.f32 %v1074, %v1138
  %1155 = vrot.lane.b32.xlu0 %v69, 95
  %v1156 = vpop.permute.xlu0 %1155
  %1157 = vrot.lane.b32.xlu0 %v70, 95
  %v1158 = vpop.permute.xlu0 %1157
  %1159 = vrot.lane.b32.xlu0 %v71, 95
  %v1160 = vpop.permute.xlu0 %1159
  %1161 = vrot.lane.b32.xlu0 %v72, 95
  %v1162 = vpop.permute.xlu0 %1161
  %1163 = vrot.lane.b32.xlu0 %v73, 95
  %v1164 = vpop.permute.xlu0 %1163
  %1165 = vrot.lane.b32.xlu0 %v74, 95
  %v1166 = vpop.permute.xlu0 %1165
  %1167 = vrot.lane.b32.xlu0 %v75, 95
  %v1168 = vpop.permute.xlu0 %1167
  %1169 = vrot.lane.b32.xlu0 %v76, 95
  %v1170 = vpop.permute.xlu0 %1169
  %1171 = vrot.lane.b32.xlu0 %v82, 95
  %v1172 = vpop.permute.xlu0 %1171
  %1173 = vrot.lane.b32.xlu0 %v83, 95
  %v1174 = vpop.permute.xlu0 %1173
  %1175 = vrot.lane.b32.xlu0 %v84, 95
  %v1176 = vpop.permute.xlu0 %1175
  %1177 = vrot.lane.b32.xlu0 %v85, 95
  %v1178 = vpop.permute.xlu0 %1177
  %1179 = vrot.lane.b32.xlu0 %v86, 95
  %v1180 = vpop.permute.xlu0 %1179
  %1181 = vrot.lane.b32.xlu0 %v87, 95
  %v1182 = vpop.permute.xlu0 %1181
  %1183 = vrot.lane.b32.xlu0 %v88, 95
  %v1184 = vpop.permute.xlu0 %1183
  %1185 = vrot.lane.b32.xlu0 %v89, 95
  %v1186 = vpop.permute.xlu0 %1185
  %vm1187 = vcmask 777216
  %v1188 = vsel %vm1187, %v1156, %v1158
  %v1189 = vsel %vm1187, %v1158, %v1160
  %v1190 = vsel %vm1187, %v1160, %v1162
  %v1191 = vsel %vm1187, %v1162, %v1164
  %v1192 = vsel %vm1187, %v1164, %v1166
  %v1193 = vsel %vm1187, %v1166, %v1168
  %v1194 = vsel %vm1187, %v1168, %v1170
  %v1195 = vsel %vm1187, %v1170, %v1172
  %v1196 = vsel %vm1187, %v1172, %v1174
  %v1197 = vsel %vm1187, %v1174, %v1176
  %v1198 = vsel %vm1187, %v1176, %v1178
  %v1199 = vsel %vm1187, %v1178, %v1180
  %v1200 = vsel %vm1187, %v1180, %v1182
  %v1201 = vsel %vm1187, %v1182, %v1184
  %v1202 = vsel %vm1187, %v1184, %v1186
  %v1219 = vsel %vm1187, %v1186, 0.0
  %v1220 = vlaneseq
  %v1221 = vshrl.u32 %v1220, 7
  %v1222 = vsub.s32 0, %v1221
  %v1223 = vrot.slane %v49, %v1222
  %v1224 = vlaneseq
  %v1225 = vshrl.u32 %v1224, 7
  %v1226 = vsub.s32 0, %v1225
  %v1227 = vrot.slane %v50, %v1226
  %v1228 = vlaneseq
  %v1229 = vshrl.u32 %v1228, 7
  %v1230 = vsub.s32 0, %v1229
  %v1231 = vrot.slane %v51, %v1230
  %v1232 = vlaneseq
  %v1233 = vshrl.u32 %v1232, 7
  %v1234 = vsub.s32 0, %v1233
  %v1235 = vrot.slane %v52, %v1234
  %v1236 = vlaneseq
  %v1237 = vshrl.u32 %v1236, 7
  %v1238 = vsub.s32 0, %v1237
  %v1239 = vrot.slane %v53, %v1238
  %v1240 = vlaneseq
  %v1241 = vshrl.u32 %v1240, 7
  %v1242 = vsub.s32 0, %v1241
  %v1243 = vrot.slane %v54, %v1242
  %v1244 = vlaneseq
  %v1245 = vshrl.u32 %v1244, 7
  %v1246 = vsub.s32 0, %v1245
  %v1247 = vrot.slane %v55, %v1246
  %v1248 = vlaneseq
  %v1249 = vshrl.u32 %v1248, 7
  %v1250 = vsub.s32 0, %v1249
  %v1251 = vrot.slane %v56, %v1250
  %v1252 = vlaneseq
  %v1253 = vshrl.u32 %v1252, 7
  %v1254 = vsub.s32 0, %v1253
  %v1255 = vrot.slane %v57, %v1254
  %v1256 = vlaneseq
  %v1257 = vshrl.u32 %v1256, 7
  %v1258 = vsub.s32 0, %v1257
  %v1259 = vrot.slane %v58, %v1258
  %v1260 = vlaneseq
  %v1261 = vshrl.u32 %v1260, 7
  %v1262 = vsub.s32 0, %v1261
  %v1263 = vrot.slane %v59, %v1262
  %v1264 = vlaneseq
  %v1265 = vshrl.u32 %v1264, 7
  %v1266 = vsub.s32 0, %v1265
  %v1267 = vrot.slane %v60, %v1266
  %v1268 = vlaneseq
  %v1269 = vshrl.u32 %v1268, 7
  %v1270 = vsub.s32 0, %v1269
  %v1271 = vrot.slane %v61, %v1270
  %v1272 = vlaneseq
  %v1273 = vshrl.u32 %v1272, 7
  %v1274 = vsub.s32 0, %v1273
  %v1275 = vrot.slane %v62, %v1274
  %v1276 = vlaneseq
  %v1277 = vshrl.u32 %v1276, 7
  %v1278 = vsub.s32 0, %v1277
  %v1279 = vrot.slane %v63, %v1278
  %v1280 = vlaneseq
  %v1281 = vshrl.u32 %v1280, 7
  %v1282 = vsub.s32 0, %v1281
  %v1283 = vrot.slane %v64, %v1282
  %v1284 = vmul.f32 %v1188, %v1223
  %v1285 = vmul.f32 %v1189, %v1227
  %v1286 = vmul.f32 %v1190, %v1231
  %v1287 = vmul.f32 %v1191, %v1235
  %v1288 = vmul.f32 %v1192, %v1239
  %v1289 = vmul.f32 %v1193, %v1243
  %v1290 = vmul.f32 %v1194, %v1247
  %v1291 = vmul.f32 %v1195, %v1251
  %v1292 = vmul.f32 %v1196, %v1255
  %v1293 = vmul.f32 %v1197, %v1259
  %v1294 = vmul.f32 %v1198, %v1263
  %v1295 = vmul.f32 %v1199, %v1267
  %v1296 = vmul.f32 %v1200, %v1271
  %v1297 = vmul.f32 %v1201, %v1275
  %v1298 = vmul.f32 %v1202, %v1279
  %v1299 = vmul.f32 %v1219, %v1283
  %v1300 = vpack.c.bf16 %v414, %v269
  %v1301 = vpack.c.bf16 %v415, %v270
  %v1302 = vpack.c.bf16 %v416, %v271
  %v1303 = vpack.c.bf16 %v417, %v272
  %v1304 = vpack.c.bf16 %v418, %v273
  %v1305 = vpack.c.bf16 %v419, %v274
  %v1306 = vpack.c.bf16 %v420, %v275
  %v1307 = vpack.c.bf16 %v421, %v276
  %v1308 = vpack.c.bf16 %v422, %v277
  %v1309 = vpack.c.bf16 %v423, %v278
  %v1310 = vpack.c.bf16 %v424, %v279
  %v1311 = vpack.c.bf16 %v425, %v280
  %v1312 = vpack.c.bf16 %v426, %v281
  %v1313 = vpack.c.bf16 %v427, %v282
  %v1314 = vpack.c.bf16 %v428, %v283
  %v1315 = vpack.c.bf16 %v429, %v284
  %v1316 = vpack.c.bf16 %v704, %v559
  %v1317 = vpack.c.bf16 %v705, %v560
  %v1318 = vpack.c.bf16 %v706, %v561
  %v1319 = vpack.c.bf16 %v707, %v562
  %v1320 = vpack.c.bf16 %v708, %v563
  %v1321 = vpack.c.bf16 %v709, %v564
  %v1322 = vpack.c.bf16 %v710, %v565
  %v1323 = vpack.c.bf16 %v711, %v566
  %v1324 = vpack.c.bf16 %v712, %v567
  %v1325 = vpack.c.bf16 %v713, %v568
  %v1326 = vpack.c.bf16 %v714, %v569
  %v1327 = vpack.c.bf16 %v715, %v570
  %v1328 = vpack.c.bf16 %v716, %v571
  %v1329 = vpack.c.bf16 %v717, %v572
  %v1330 = vpack.c.bf16 %v718, %v573
  %v1331 = vpack.c.bf16 %v719, %v574
  %v1332 = vpack.c.bf16 %v849, %v69
  %v1333 = vpack.c.bf16 %v850, %v70
  %v1334 = vpack.c.bf16 %v851, %v71
  %v1335 = vpack.c.bf16 %v852, %v72
  %v1336 = vpack.c.bf16 %v853, %v73
  %v1337 = vpack.c.bf16 %v854, %v74
  %v1338 = vpack.c.bf16 %v855, %v75
  %v1339 = vpack.c.bf16 %v856, %v76
  %v1340 = vpack.c.bf16 %v857, %v82
  %v1341 = vpack.c.bf16 %v858, %v83
  %v1342 = vpack.c.bf16 %v859, %v84
  %v1343 = vpack.c.bf16 %v860, %v85
  %v1344 = vpack.c.bf16 %v861, %v86
  %v1345 = vpack.c.bf16 %v862, %v87
  %v1346 = vpack.c.bf16 %v863, %v88
  %v1347 = vpack.c.bf16 %v864, %v89
  %v1348 = vpack.c.bf16 %v1139, %v994
  %v1349 = vpack.c.bf16 %v1140, %v995
  %v1350 = vpack.c.bf16 %v1141, %v996
  %v1351 = vpack.c.bf16 %v1142, %v997
  %v1352 = vpack.c.bf16 %v1143, %v998
  %v1353 = vpack.c.bf16 %v1144, %v999
  %v1354 = vpack.c.bf16 %v1145, %v1000
  %v1355 = vpack.c.bf16 %v1146, %v1001
  %v1356 = vpack.c.bf16 %v1147, %v1002
  %v1357 = vpack.c.bf16 %v1148, %v1003
  %v1358 = vpack.c.bf16 %v1149, %v1004
  %v1359 = vpack.c.bf16 %v1150, %v1005
  %v1360 = vpack.c.bf16 %v1151, %v1006
  %v1361 = vpack.c.bf16 %v1152, %v1007
  %v1362 = vpack.c.bf16 %v1153, %v1008
  %v1363 = vpack.c.bf16 %v1154, %v1009
  %v1364 = vpack.c.bf16 %v1284, %v1284
  %v1365 = vpack.c.bf16 %v1285, %v1285
  %v1366 = vpack.c.bf16 %v1286, %v1286
  %v1367 = vpack.c.bf16 %v1287, %v1287
  %v1368 = vpack.c.bf16 %v1288, %v1288
  %v1369 = vpack.c.bf16 %v1289, %v1289
  %v1370 = vpack.c.bf16 %v1290, %v1290
  %v1371 = vpack.c.bf16 %v1291, %v1291
  %v1372 = vpack.c.bf16 %v1292, %v1292
  %v1373 = vpack.c.bf16 %v1293, %v1293
  %v1374 = vpack.c.bf16 %v1294, %v1294
  %v1375 = vpack.c.bf16 %v1295, %v1295
  %v1376 = vpack.c.bf16 %v1296, %v1296
  %v1377 = vpack.c.bf16 %v1297, %v1297
  %v1378 = vpack.c.bf16 %v1298, %v1298
  %v1379 = vpack.c.bf16 %v1299, %v1299
  %v1380 = vld [vmem:[%s6] sm:$0xf]
  %1382 = vset.pattern.permute.xlu0 0
  %1383 = vperm.xlu0 %1382, %v1380
  %v1384 = vpop.permute.xlu0 %1383
  %vm1386 = vcmask 588800
  %v1388 = vsel %vm1386, %v123, 0
  %vm1390 = vcmask 1043456
  %v1392 = vsel %vm1390, %v1364, 0
  %v1395 = vsel %vm1390, %v1365, 0
  %v1398 = vsel %vm1390, %v1366, 0
  %v1401 = vsel %vm1390, %v1367, 0
  %v1404 = vsel %vm1390, %v1368, 0
  %v1407 = vsel %vm1390, %v1369, 0
  %v1410 = vsel %vm1390, %v1370, 0
  %v1413 = vsel %vm1390, %v1371, 0
  %v1416 = vsel %vm1390, %v1372, 0
  %v1419 = vsel %vm1390, %v1373, 0
  %v1422 = vsel %vm1390, %v1374, 0
  %v1425 = vsel %vm1390, %v1375, 0
  %v1428 = vsel %vm1390, %v1376, 0
  %v1431 = vsel %vm1390, %v1377, 0
  %v1434 = vsel %vm1390, %v1378, 0
  %v1437 = vsel %vm1390, %v1379, 0
  %1439 = vmatprep.subr.bf16.mxu0 0
  %1440 = vmatpush1.bf16.msra.mxu0 0
  %1441 = vmatprep.subr.bf16.mxu0 0
  %1442 = vmatpush1.bf16.msra.mxu0 0
  %1443 = vmatprep.subr.bf16.mxu0 0
  %1444 = vmatpush1.bf16.msra.mxu0 0
  %1445 = vmatprep.subr.bf16.mxu0 %v1395
  %1446 = vmatpush1.bf16.msra.mxu0 %v1392
  %1447 = vmatprep.subr.bf16.mxu0 %v1349
  %1448 = vmatpush1.bf16.msra.mxu0 %v1348
  %1449 = vmatprep.subr.bf16.mxu0 %v1333
  %1450 = vmatpush1.bf16.msra.mxu0 %v1332
  %1451 = vmatprep.subr.bf16.mxu0 %v1317
  %1452 = vmatpush1.bf16.msra.mxu0 %v1316
  %1453 = vmatprep.subr.bf16.mxu0 %v1301
  %1454 = vmatpush1.bf16.msra.mxu0 %v1300
  %1455 = vmatprep.subr.bf16.mxu0 0
  %1456 = vmatpush2.bf16.msra.mxu0 0
  %1457 = vmatprep.subr.bf16.mxu0 0
  %1458 = vmatpush2.bf16.msra.mxu0 0
  %1459 = vmatprep.subr.bf16.mxu0 0
  %1460 = vmatpush2.bf16.msra.mxu0 0
  %1461 = vmatprep.subr.bf16.mxu0 0
  %1462 = vmatpush2.bf16.msra.mxu0 0
  %1463 = vmatprep.subr.bf16.mxu0 0
  %1464 = vmatpush2.bf16.msra.mxu0 0
  %1465 = vmatprep.subr.bf16.mxu0 0
  %1466 = vmatpush2.bf16.msra.mxu0 0
  %1467 = vmatprep.subr.bf16.mxu0 0
  %1468 = vmatpush2.bf16.msra.mxu0 0
  %1469 = vmatprep.subr.bf16.mxu0 0
  %1470 = vmatpush2.bf16.msra.mxu0 0
  %1471 = vmatprep.mubr.bf16.mxu0 0
  %1472 = vmatmul.mubr.bf16.gmra.mxu0 %v1388
  %v1473 = vpop.f32.mrf.mxu0
  %v1474 = vadd.f32 %v1384, %v1473
  %v1475 = vpop.f32.mrf.mxu0
  %v1476 = vadd.f32 %v1384, %v1475
  %v1477 = vpop.f32.mrf.mxu0
  %v1478 = vpop.f32.mrf.mxu0
  %1479 = vdwg.mxu0
  %1480 = vmatprep.subr.bf16.mxu0 0
  %1481 = vmatpush1.bf16.msra.mxu0 0
  %1482 = vmatprep.subr.bf16.mxu0 0
  %1483 = vmatpush1.bf16.msra.mxu0 0
  %1484 = vmatprep.subr.bf16.mxu0 0
  %1485 = vmatpush1.bf16.msra.mxu0 0
  %1486 = vmatprep.subr.bf16.mxu0 %v1401
  %1487 = vmatpush1.bf16.msra.mxu0 %v1398
  %1488 = vmatprep.subr.bf16.mxu0 %v1351
  %1489 = vmatpush1.bf16.msra.mxu0 %v1350
  %1490 = vmatprep.subr.bf16.mxu0 %v1335
  %1491 = vmatpush1.bf16.msra.mxu0 %v1334
  %1492 = vmatprep.subr.bf16.mxu0 %v1319
  %1493 = vmatpush1.bf16.msra.mxu0 %v1318
  %1494 = vmatprep.subr.bf16.mxu0 %v1303
  %1495 = vmatpush1.bf16.msra.mxu0 %v1302
  %1496 = vmatprep.subr.bf16.mxu0 0
  %1497 = vmatpush2.bf16.msra.mxu0 0
  %1498 = vmatprep.subr.bf16.mxu0 0
  %1499 = vmatpush2.bf16.msra.mxu0 0
  %1500 = vmatprep.subr.bf16.mxu0 0
  %1501 = vmatpush2.bf16.msra.mxu0 0
  %1502 = vmatprep.subr.bf16.mxu0 0
  %1503 = vmatpush2.bf16.msra.mxu0 0
  %1504 = vmatprep.subr.bf16.mxu0 0
  %1505 = vmatpush2.bf16.msra.mxu0 0
  %1506 = vmatprep.subr.bf16.mxu0 0
  %1507 = vmatpush2.bf16.msra.mxu0 0
  %1508 = vmatprep.subr.bf16.mxu0 0
  %1509 = vmatpush2.bf16.msra.mxu0 0
  %1510 = vmatprep.subr.bf16.mxu0 0
  %1511 = vmatpush2.bf16.msra.mxu0 0
  %1512 = vmatprep.mubr.bf16.mxu0 0
  %1513 = vmatmul.mubr.bf16.gmra.mxu0 %v1388
  %v1514 = vpop.f32.mrf.mxu0
  %v1515 = vadd.f32 %v1384, %v1514
  %v1516 = vpop.f32.mrf.mxu0
  %v1517 = vadd.f32 %v1384, %v1516
  %v1518 = vpop.f32.mrf.mxu0
  %v1519 = vpop.f32.mrf.mxu0
  %1520 = vdwg.mxu0
  %1521 = vmatprep.subr.bf16.mxu0 0
  %1522 = vmatpush1.bf16.msra.mxu0 0
  %1523 = vmatprep.subr.bf16.mxu0 0
  %1524 = vmatpush1.bf16.msra.mxu0 0
  %1525 = vmatprep.subr.bf16.mxu0 0
  %1526 = vmatpush1.bf16.msra.mxu0 0
  %1527 = vmatprep.subr.bf16.mxu0 %v1407
  %1528 = vmatpush1.bf16.msra.mxu0 %v1404
  %1529 = vmatprep.subr.bf16.mxu0 %v1353
  %1530 = vmatpush1.bf16.msra.mxu0 %v1352
  %1531 = vmatprep.subr.bf16.mxu0 %v1337
  %1532 = vmatpush1.bf16.msra.mxu0 %v1336
  %1533 = vmatprep.subr.bf16.mxu0 %v1321
  %1534 = vmatpush1.bf16.msra.mxu0 %v1320
  %1535 = vmatprep.subr.bf16.mxu0 %v1305
  %1536 = vmatpush1.bf16.msra.mxu0 %v1304
  %1537 = vmatprep.subr.bf16.mxu0 0
  %1538 = vmatpush2.bf16.msra.mxu0 0
  %1539 = vmatprep.subr.bf16.mxu0 0
  %1540 = vmatpush2.bf16.msra.mxu0 0
  %1541 = vmatprep.subr.bf16.mxu0 0
  %1542 = vmatpush2.bf16.msra.mxu0 0
  %1543 = vmatprep.subr.bf16.mxu0 0
  %1544 = vmatpush2.bf16.msra.mxu0 0
  %1545 = vmatprep.subr.bf16.mxu0 0
  %1546 = vmatpush2.bf16.msra.mxu0 0
  %1547 = vmatprep.subr.bf16.mxu0 0
  %1548 = vmatpush2.bf16.msra.mxu0 0
  %1549 = vmatprep.subr.bf16.mxu0 0
  %1550 = vmatpush2.bf16.msra.mxu0 0
  %1551 = vmatprep.subr.bf16.mxu0 0
  %1552 = vmatpush2.bf16.msra.mxu0 0
  %1553 = vmatprep.mubr.bf16.mxu0 0
  %1554 = vmatmul.mubr.bf16.gmra.mxu0 %v1388
  %v1555 = vpop.f32.mrf.mxu0
  %v1556 = vadd.f32 %v1384, %v1555
  %v1557 = vpop.f32.mrf.mxu0
  %v1558 = vadd.f32 %v1384, %v1557
  %v1559 = vpop.f32.mrf.mxu0
  %v1560 = vpop.f32.mrf.mxu0
  %1561 = vdwg.mxu0
  %1562 = vmatprep.subr.bf16.mxu0 0
  %1563 = vmatpush1.bf16.msra.mxu0 0
  %1564 = vmatprep.subr.bf16.mxu0 0
  %1565 = vmatpush1.bf16.msra.mxu0 0
  %1566 = vmatprep.subr.bf16.mxu0 0
  %1567 = vmatpush1.bf16.msra.mxu0 0
  %1568 = vmatprep.subr.bf16.mxu0 %v1413
  %1569 = vmatpush1.bf16.msra.mxu0 %v1410
  %1570 = vmatprep.subr.bf16.mxu0 %v1355
  %1571 = vmatpush1.bf16.msra.mxu0 %v1354
  %1572 = vmatprep.subr.bf16.mxu0 %v1339
  %1573 = vmatpush1.bf16.msra.mxu0 %v1338
  %1574 = vmatprep.subr.bf16.mxu0 %v1323
  %1575 = vmatpush1.bf16.msra.mxu0 %v1322
  %1576 = vmatprep.subr.bf16.mxu0 %v1307
  %1577 = vmatpush1.bf16.msra.mxu0 %v1306
  %1578 = vmatprep.subr.bf16.mxu0 0
  %1579 = vmatpush2.bf16.msra.mxu0 0
  %1580 = vmatprep.subr.bf16.mxu0 0
  %1581 = vmatpush2.bf16.msra.mxu0 0
  %1582 = vmatprep.subr.bf16.mxu0 0
  %1583 = vmatpush2.bf16.msra.mxu0 0
  %1584 = vmatprep.subr.bf16.mxu0 0
  %1585 = vmatpush2.bf16.msra.mxu0 0
  %1586 = vmatprep.subr.bf16.mxu0 0
  %1587 = vmatpush2.bf16.msra.mxu0 0
  %1588 = vmatprep.subr.bf16.mxu0 0
  %1589 = vmatpush2.bf16.msra.mxu0 0
  %1590 = vmatprep.subr.bf16.mxu0 0
  %1591 = vmatpush2.bf16.msra.mxu0 0
  %1592 = vmatprep.subr.bf16.mxu0 0
  %1593 = vmatpush2.bf16.msra.mxu0 0
  %1594 = vmatprep.mubr.bf16.mxu0 0
  %1595 = vmatmul.mubr.bf16.gmra.mxu0 %v1388
  %v1596 = vpop.f32.mrf.mxu0
  %v1597 = vadd.f32 %v1384, %v1596
  %v1598 = vpop.f32.mrf.mxu0
  %v1599 = vadd.f32 %v1384, %v1598
  %v1600 = vpop.f32.mrf.mxu0
  %v1601 = vpop.f32.mrf.mxu0
  %1602 = vdwg.mxu0
  %1603 = vmatprep.subr.bf16.mxu0 0
  %1604 = vmatpush1.bf16.msra.mxu0 0
  %1605 = vmatprep.subr.bf16.mxu0 0
  %1606 = vmatpush1.bf16.msra.mxu0 0
  %1607 = vmatprep.subr.bf16.mxu0 0
  %1608 = vmatpush1.bf16.msra.mxu0 0
  %1609 = vmatprep.subr.bf16.mxu0 %v1419
  %1610 = vmatpush1.bf16.msra.mxu0 %v1416
  %1611 = vmatprep.subr.bf16.mxu0 %v1357
  %1612 = vmatpush1.bf16.msra.mxu0 %v1356
  %1613 = vmatprep.subr.bf16.mxu0 %v1341
  %1614 = vmatpush1.bf16.msra.mxu0 %v1340
  %1615 = vmatprep.subr.bf16.mxu0 %v1325
  %1616 = vmatpush1.bf16.msra.mxu0 %v1324
  %1617 = vmatprep.subr.bf16.mxu0 %v1309
  %1618 = vmatpush1.bf16.msra.mxu0 %v1308
  %1619 = vmatprep.subr.bf16.mxu0 0
  %1620 = vmatpush2.bf16.msra.mxu0 0
  %1621 = vmatprep.subr.bf16.mxu0 0
  %1622 = vmatpush2.bf16.msra.mxu0 0
  %1623 = vmatprep.subr.bf16.mxu0 0
  %1624 = vmatpush2.bf16.msra.mxu0 0
  %1625 = vmatprep.subr.bf16.mxu0 0
  %1626 = vmatpush2.bf16.msra.mxu0 0
  %1627 = vmatprep.subr.bf16.mxu0 0
  %1628 = vmatpush2.bf16.msra.mxu0 0
  %1629 = vmatprep.subr.bf16.mxu0 0
  %1630 = vmatpush2.bf16.msra.mxu0 0
  %1631 = vmatprep.subr.bf16.mxu0 0
  %1632 = vmatpush2.bf16.msra.mxu0 0
  %1633 = vmatprep.subr.bf16.mxu0 0
  %1634 = vmatpush2.bf16.msra.mxu0 0
  %1635 = vmatprep.mubr.bf16.mxu0 0
  %1636 = vmatmul.mubr.bf16.gmra.mxu0 %v1388
  %v1637 = vpop.f32.mrf.mxu0
  %v1638 = vadd.f32 %v1384, %v1637
  %v1639 = vpop.f32.mrf.mxu0
  %v1640 = vadd.f32 %v1384, %v1639
  %v1641 = vpop.f32.mrf.mxu0
  %v1642 = vpop.f32.mrf.mxu0
  %1643 = vdwg.mxu0
  %1644 = vmatprep.subr.bf16.mxu0 0
  %1645 = vmatpush1.bf16.msra.mxu0 0
  %1646 = vmatprep.subr.bf16.mxu0 0
  %1647 = vmatpush1.bf16.msra.mxu0 0
  %1648 = vmatprep.subr.bf16.mxu0 0
  %1649 = vmatpush1.bf16.msra.mxu0 0
  %1650 = vmatprep.subr.bf16.mxu0 %v1425
  %1651 = vmatpush1.bf16.msra.mxu0 %v1422
  %1652 = vmatprep.subr.bf16.mxu0 %v1359
  %1653 = vmatpush1.bf16.msra.mxu0 %v1358
  %1654 = vmatprep.subr.bf16.mxu0 %v1343
  %1655 = vmatpush1.bf16.msra.mxu0 %v1342
  %1656 = vmatprep.subr.bf16.mxu0 %v1327
  %1657 = vmatpush1.bf16.msra.mxu0 %v1326
  %1658 = vmatprep.subr.bf16.mxu0 %v1311
  %1659 = vmatpush1.bf16.msra.mxu0 %v1310
  %1660 = vmatprep.subr.bf16.mxu0 0
  %1661 = vmatpush2.bf16.msra.mxu0 0
  %1662 = vmatprep.subr.bf16.mxu0 0
  %1663 = vmatpush2.bf16.msra.mxu0 0
  %1664 = vmatprep.subr.bf16.mxu0 0
  %1665 = vmatpush2.bf16.msra.mxu0 0
  %1666 = vmatprep.subr.bf16.mxu0 0
  %1667 = vmatpush2.bf16.msra.mxu0 0
  %1668 = vmatprep.subr.bf16.mxu0 0
  %1669 = vmatpush2.bf16.msra.mxu0 0
  %1670 = vmatprep.subr.bf16.mxu0 0
  %1671 = vmatpush2.bf16.msra.mxu0 0
  %1672 = vmatprep.subr.bf16.mxu0 0
  %1673 = vmatpush2.bf16.msra.mxu0 0
  %1674 = vmatprep.subr.bf16.mxu0 0
  %1675 = vmatpush2.bf16.msra.mxu0 0
  %1676 = vmatprep.mubr.bf16.mxu0 0
  %1677 = vmatmul.mubr.bf16.gmra.mxu0 %v1388
  %v1678 = vpop.f32.mrf.mxu0
  %v1679 = vadd.f32 %v1384, %v1678
  %v1680 = vpop.f32.mrf.mxu0
  %v1681 = vadd.f32 %v1384, %v1680
  %v1682 = vpop.f32.mrf.mxu0
  %v1683 = vpop.f32.mrf.mxu0
  %1684 = vdwg.mxu0
  %1685 = vmatprep.subr.bf16.mxu0 0
  %1686 = vmatpush1.bf16.msra.mxu0 0
  %1687 = vmatprep.subr.bf16.mxu0 0
  %1688 = vmatpush1.bf16.msra.mxu0 0
  %1689 = vmatprep.subr.bf16.mxu0 0
  %1690 = vmatpush1.bf16.msra.mxu0 0
  %1691 = vmatprep.subr.bf16.mxu0 %v1431
  %1692 = vmatpush1.bf16.msra.mxu0 %v1428
  %1693 = vmatprep.subr.bf16.mxu0 %v1361
  %1694 = vmatpush1.bf16.msra.mxu0 %v1360
  %1695 = vmatprep.subr.bf16.mxu0 %v1345
  %1696 = vmatpush1.bf16.msra.mxu0 %v1344
  %1697 = vmatprep.subr.bf16.mxu0 %v1329
  %1698 = vmatpush1.bf16.msra.mxu0 %v1328
  %1699 = vmatprep.subr.bf16.mxu0 %v1313
  %1700 = vmatpush1.bf16.msra.mxu0 %v1312
  %1701 = vmatprep.subr.bf16.mxu0 0
  %1702 = vmatpush2.bf16.msra.mxu0 0
  %1703 = vmatprep.subr.bf16.mxu0 0
  %1704 = vmatpush2.bf16.msra.mxu0 0
  %1705 = vmatprep.subr.bf16.mxu0 0
  %1706 = vmatpush2.bf16.msra.mxu0 0
  %1707 = vmatprep.subr.bf16.mxu0 0
  %1708 = vmatpush2.bf16.msra.mxu0 0
  %1709 = vmatprep.subr.bf16.mxu0 0
  %1710 = vmatpush2.bf16.msra.mxu0 0
  %1711 = vmatprep.subr.bf16.mxu0 0
  %1712 = vmatpush2.bf16.msra.mxu0 0
  %1713 = vmatprep.subr.bf16.mxu0 0
  %1714 = vmatpush2.bf16.msra.mxu0 0
  %1715 = vmatprep.subr.bf16.mxu0 0
  %1716 = vmatpush2.bf16.msra.mxu0 0
  %1717 = vmatprep.mubr.bf16.mxu0 0
  %1718 = vmatmul.mubr.bf16.gmra.mxu0 %v1388
  %v1719 = vpop.f32.mrf.mxu0
  %v1720 = vadd.f32 %v1384, %v1719
  %v1721 = vpop.f32.mrf.mxu0
  %v1722 = vadd.f32 %v1384, %v1721
  %v1723 = vpop.f32.mrf.mxu0
  %v1724 = vpop.f32.mrf.mxu0
  %1725 = vdwg.mxu0
  %1726 = vmatprep.subr.bf16.mxu0 0
  %1727 = vmatpush1.bf16.msra.mxu0 0
  %1728 = vmatprep.subr.bf16.mxu0 0
  %1729 = vmatpush1.bf16.msra.mxu0 0
  %1730 = vmatprep.subr.bf16.mxu0 0
  %1731 = vmatpush1.bf16.msra.mxu0 0
  %1732 = vmatprep.subr.bf16.mxu0 %v1437
  %1733 = vmatpush1.bf16.msra.mxu0 %v1434
  %1734 = vmatprep.subr.bf16.mxu0 %v1363
  %1735 = vmatpush1.bf16.msra.mxu0 %v1362
  %1736 = vmatprep.subr.bf16.mxu0 %v1347
  %1737 = vmatpush1.bf16.msra.mxu0 %v1346
  %1738 = vmatprep.subr.bf16.mxu0 %v1331
  %1739 = vmatpush1.bf16.msra.mxu0 %v1330
  %1740 = vmatprep.subr.bf16.mxu0 %v1315
  %1741 = vmatpush1.bf16.msra.mxu0 %v1314
  %1742 = vmatprep.subr.bf16.mxu0 0
  %1743 = vmatpush2.bf16.msra.mxu0 0
  %1744 = vmatprep.subr.bf16.mxu0 0
  %1745 = vmatpush2.bf16.msra.mxu0 0
  %1746 = vmatprep.subr.bf16.mxu0 0
  %1747 = vmatpush2.bf16.msra.mxu0 0
  %1748 = vmatprep.subr.bf16.mxu0 0
  %1749 = vmatpush2.bf16.msra.mxu0 0
  %1750 = vmatprep.subr.bf16.mxu0 0
  %1751 = vmatpush2.bf16.msra.mxu0 0
  %1752 = vmatprep.subr.bf16.mxu0 0
  %1753 = vmatpush2.bf16.msra.mxu0 0
  %1754 = vmatprep.subr.bf16.mxu0 0
  %1755 = vmatpush2.bf16.msra.mxu0 0
  %1756 = vmatprep.subr.bf16.mxu0 0
  %1757 = vmatpush2.bf16.msra.mxu0 0
  %1758 = vmatprep.mubr.bf16.mxu0 0
  %1759 = vmatmul.mubr.bf16.gmra.mxu0 %v1388
  %v1760 = vpop.f32.mrf.mxu0
  %v1761 = vadd.f32 %v1384, %v1760
  %v1762 = vpop.f32.mrf.mxu0
  %v1763 = vadd.f32 %v1384, %v1762
  %v1764 = vpop.f32.mrf.mxu0
  %v1765 = vpop.f32.mrf.mxu0
  %1766 = vdwg.mxu0
  %v1783 = vrot.slane %v1474, 4
  %v1784 = vrot.slane %v1476, 4
  %v1785 = vrot.slane %v1515, 4
  %v1786 = vrot.slane %v1517, 4
  %v1787 = vrot.slane %v1556, 4
  %v1788 = vrot.slane %v1558, 4
  %v1789 = vrot.slane %v1597, 4
  %v1790 = vrot.slane %v1599, 4
  %v1791 = vrot.slane %v1638, 4
  %v1792 = vrot.slane %v1640, 4
  %v1793 = vrot.slane %v1679, 4
  %v1794 = vrot.slane %v1681, 4
  %v1795 = vrot.slane %v1720, 4
  %v1796 = vrot.slane %v1722, 4
  %v1797 = vrot.slane %v1761, 4
  %v1798 = vrot.slane %v1763, 4
  %v1815 = vsel %vm1390, %v90, %v1783
  %v1816 = vsel %vm1390, %v103, %v1784
  %v1817 = vsel %vm1390, %v91, %v1785
  %v1818 = vsel %vm1390, %v104, %v1786
  %v1819 = vsel %vm1390, %v92, %v1787
  %v1820 = vsel %vm1390, %v105, %v1788
  %v1821 = vsel %vm1390, %v93, %v1789
  %v1822 = vsel %vm1390, %v106, %v1790
  %v1823 = vsel %vm1390, %v95, %v1791
  %v1824 = vsel %vm1390, %v115, %v1792
  %v1825 = vsel %vm1390, %v96, %v1793
  %v1826 = vsel %vm1390, %v116, %v1794
  %v1827 = vsel %vm1390, %v97, %v1795
  %v1828 = vsel %vm1390, %v117, %v1796
  %v1829 = vsel %vm1390, %v98, %v1797
  %v1830 = vsel %vm1390, %v118, %v1798
  %v1831 = vld [vmem:[%s4] sm:$0x3]
  %1848 = vrot.lane.b32.xlu0 %v1815, 33
  %v1849 = vpop.permute.xlu0 %1848
  %1850 = vrot.lane.b32.xlu0 %v1816, 33
  %v1851 = vpop.permute.xlu0 %1850
  %1852 = vrot.lane.b32.xlu0 %v1817, 33
  %v1853 = vpop.permute.xlu0 %1852
  %1854 = vrot.lane.b32.xlu0 %v1818, 33
  %v1855 = vpop.permute.xlu0 %1854
  %1856 = vrot.lane.b32.xlu0 %v1819, 33
  %v1857 = vpop.permute.xlu0 %1856
  %1858 = vrot.lane.b32.xlu0 %v1820, 33
  %v1859 = vpop.permute.xlu0 %1858
  %1860 = vrot.lane.b32.xlu0 %v1821, 33
  %v1861 = vpop.permute.xlu0 %1860
  %1862 = vrot.lane.b32.xlu0 %v1822, 33
  %v1863 = vpop.permute.xlu0 %1862
  %1864 = vrot.lane.b32.xlu0 %v1823, 33
  %v1865 = vpop.permute.xlu0 %1864
  %1866 = vrot.lane.b32.xlu0 %v1824, 33
  %v1867 = vpop.permute.xlu0 %1866
  %1868 = vrot.lane.b32.xlu0 %v1825, 33
  %v1869 = vpop.permute.xlu0 %1868
  %1870 = vrot.lane.b32.xlu0 %v1826, 33
  %v1871 = vpop.permute.xlu0 %1870
  %1872 = vrot.lane.b32.xlu0 %v1827, 33
  %v1873 = vpop.permute.xlu0 %1872
  %1874 = vrot.lane.b32.xlu0 %v1828, 33
  %v1875 = vpop.permute.xlu0 %1874
  %1876 = vrot.lane.b32.xlu0 %v1829, 33
  %v1877 = vpop.permute.xlu0 %1876
  %1878 = vrot.lane.b32.xlu0 %v1830, 33
  %v1879 = vpop.permute.xlu0 %1878
  %v1880 = vsel %vm172, %v1849, %v1851
  %v1881 = vsel %vm172, %v1851, %v1853
  %v1882 = vsel %vm172, %v1853, %v1855
  %v1883 = vsel %vm172, %v1855, %v1857
  %v1884 = vsel %vm172, %v1857, %v1859
  %v1885 = vsel %vm172, %v1859, %v1861
  %v1886 = vsel %vm172, %v1861, %v1863
  %v1887 = vsel %vm172, %v1863, %v1865
  %v1888 = vsel %vm172, %v1865, %v1867
  %v1889 = vsel %vm172, %v1867, %v1869
  %v1890 = vsel %vm172, %v1869, %v1871
  %v1891 = vsel %vm172, %v1871, %v1873
  %v1892 = vsel %vm172, %v1873, %v1875
  %v1893 = vsel %vm172, %v1875, %v1877
  %v1894 = vsel %vm172, %v1877, %v1879
  %v1911 = vsel %vm172, 0.0, %v1849
  %v1912 = vmul.f32 %v1911, %v208
  %v1913 = vmul.f32 %v1880, %v212
  %v1914 = vmul.f32 %v1881, %v216
  %v1915 = vmul.f32 %v1882, %v220
  %v1916 = vmul.f32 %v1883, %v224
  %v1917 = vmul.f32 %v1884, %v228
  %v1918 = vmul.f32 %v1885, %v232
  %v1919 = vmul.f32 %v1886, %v236
  %v1920 = vmul.f32 %v1887, %v240
  %v1921 = vmul.f32 %v1888, %v244
  %v1922 = vmul.f32 %v1889, %v248
  %v1923 = vmul.f32 %v1890, %v252
  %v1924 = vmul.f32 %v1891, %v256
  %v1925 = vmul.f32 %v1892, %v260
  %v1926 = vmul.f32 %v1893, %v264
  %v1927 = vmul.f32 %v1894, %v268
  %1928 = vrot.lane.b32.xlu0 %v1815, 32
  %v1929 = vpop.permute.xlu0 %1928
  %1930 = vrot.lane.b32.xlu0 %v1816, 32
  %v1931 = vpop.permute.xlu0 %1930
  %1932 = vrot.lane.b32.xlu0 %v1817, 32
  %v1933 = vpop.permute.xlu0 %1932
  %1934 = vrot.lane.b32.xlu0 %v1818, 32
  %v1935 = vpop.permute.xlu0 %1934
  %1936 = vrot.lane.b32.xlu0 %v1819, 32
  %v1937 = vpop.permute.xlu0 %1936
  %1938 = vrot.lane.b32.xlu0 %v1820, 32
  %v1939 = vpop.permute.xlu0 %1938
  %1940 = vrot.lane.b32.xlu0 %v1821, 32
  %v1941 = vpop.permute.xlu0 %1940
  %1942 = vrot.lane.b32.xlu0 %v1822, 32
  %v1943 = vpop.permute.xlu0 %1942
  %1944 = vrot.lane.b32.xlu0 %v1823, 32
  %v1945 = vpop.permute.xlu0 %1944
  %1946 = vrot.lane.b32.xlu0 %v1824, 32
  %v1947 = vpop.permute.xlu0 %1946
  %1948 = vrot.lane.b32.xlu0 %v1825, 32
  %v1949 = vpop.permute.xlu0 %1948
  %1950 = vrot.lane.b32.xlu0 %v1826, 32
  %v1951 = vpop.permute.xlu0 %1950
  %1952 = vrot.lane.b32.xlu0 %v1827, 32
  %v1953 = vpop.permute.xlu0 %1952
  %1954 = vrot.lane.b32.xlu0 %v1828, 32
  %v1955 = vpop.permute.xlu0 %1954
  %1956 = vrot.lane.b32.xlu0 %v1829, 32
  %v1957 = vpop.permute.xlu0 %1956
  %1958 = vrot.lane.b32.xlu0 %v1830, 32
  %v1959 = vpop.permute.xlu0 %1958
  %v1960 = vsel %vm317, %v1929, %v1931
  %v1961 = vsel %vm317, %v1931, %v1933
  %v1962 = vsel %vm317, %v1933, %v1935
  %v1963 = vsel %vm317, %v1935, %v1937
  %v1964 = vsel %vm317, %v1937, %v1939
  %v1965 = vsel %vm317, %v1939, %v1941
  %v1966 = vsel %vm317, %v1941, %v1943
  %v1967 = vsel %vm317, %v1943, %v1945
  %v1968 = vsel %vm317, %v1945, %v1947
  %v1969 = vsel %vm317, %v1947, %v1949
  %v1970 = vsel %vm317, %v1949, %v1951
  %v1971 = vsel %vm317, %v1951, %v1953
  %v1972 = vsel %vm317, %v1953, %v1955
  %v1973 = vsel %vm317, %v1955, %v1957
  %v1974 = vsel %vm317, %v1957, %v1959
  %v1991 = vsel %vm317, 0.0, %v1929
  %v1992 = vmul.f32 %v1991, %v353
  %v1993 = vmul.f32 %v1960, %v357
  %v1994 = vmul.f32 %v1961, %v361
  %v1995 = vmul.f32 %v1962, %v365
  %v1996 = vmul.f32 %v1963, %v369
  %v1997 = vmul.f32 %v1964, %v373
  %v1998 = vmul.f32 %v1965, %v377
  %v1999 = vmul.f32 %v1966, %v381
  %v2000 = vmul.f32 %v1967, %v385
  %v2001 = vmul.f32 %v1968, %v389
  %v2002 = vmul.f32 %v1969, %v393
  %v2003 = vmul.f32 %v1970, %v397
  %v2004 = vmul.f32 %v1971, %v401
  %v2005 = vmul.f32 %v1972, %v405
  %v2006 = vmul.f32 %v1973, %v409
  %v2007 = vmul.f32 %v1974, %v413
  %2008 = vrot.lane.b32.xlu0 %v1815, 31
  %v2009 = vpop.permute.xlu0 %2008
  %2010 = vrot.lane.b32.xlu0 %v1816, 31
  %v2011 = vpop.permute.xlu0 %2010
  %2012 = vrot.lane.b32.xlu0 %v1817, 31
  %v2013 = vpop.permute.xlu0 %2012
  %2014 = vrot.lane.b32.xlu0 %v1818, 31
  %v2015 = vpop.permute.xlu0 %2014
  %2016 = vrot.lane.b32.xlu0 %v1819, 31
  %v2017 = vpop.permute.xlu0 %2016
  %2018 = vrot.lane.b32.xlu0 %v1820, 31
  %v2019 = vpop.permute.xlu0 %2018
  %2020 = vrot.lane.b32.xlu0 %v1821, 31
  %v2021 = vpop.permute.xlu0 %2020
  %2022 = vrot.lane.b32.xlu0 %v1822, 31
  %v2023 = vpop.permute.xlu0 %2022
  %2024 = vrot.lane.b32.xlu0 %v1823, 31
  %v2025 = vpop.permute.xlu0 %2024
  %2026 = vrot.lane.b32.xlu0 %v1824, 31
  %v2027 = vpop.permute.xlu0 %2026
  %2028 = vrot.lane.b32.xlu0 %v1825, 31
  %v2029 = vpop.permute.xlu0 %2028
  %2030 = vrot.lane.b32.xlu0 %v1826, 31
  %v2031 = vpop.permute.xlu0 %2030
  %2032 = vrot.lane.b32.xlu0 %v1827, 31
  %v2033 = vpop.permute.xlu0 %2032
  %2034 = vrot.lane.b32.xlu0 %v1828, 31
  %v2035 = vpop.permute.xlu0 %2034
  %2036 = vrot.lane.b32.xlu0 %v1829, 31
  %v2037 = vpop.permute.xlu0 %2036
  %2038 = vrot.lane.b32.xlu0 %v1830, 31
  %v2039 = vpop.permute.xlu0 %2038
  %v2040 = vsel %vm462, %v2009, %v2011
  %v2041 = vsel %vm462, %v2011, %v2013
  %v2042 = vsel %vm462, %v2013, %v2015
  %v2043 = vsel %vm462, %v2015, %v2017
  %v2044 = vsel %vm462, %v2017, %v2019
  %v2045 = vsel %vm462, %v2019, %v2021
  %v2046 = vsel %vm462, %v2021, %v2023
  %v2047 = vsel %vm462, %v2023, %v2025
  %v2048 = vsel %vm462, %v2025, %v2027
  %v2049 = vsel %vm462, %v2027, %v2029
  %v2050 = vsel %vm462, %v2029, %v2031
  %v2051 = vsel %vm462, %v2031, %v2033
  %v2052 = vsel %vm462, %v2033, %v2035
  %v2053 = vsel %vm462, %v2035, %v2037
  %v2054 = vsel %vm462, %v2037, %v2039
  %v2071 = vsel %vm462, 0.0, %v2009
  %v2072 = vmul.f32 %v2071, %v498
  %v2073 = vmul.f32 %v2040, %v502
  %v2074 = vmul.f32 %v2041, %v506
  %v2075 = vmul.f32 %v2042, %v510
  %v2076 = vmul.f32 %v2043, %v514
  %v2077 = vmul.f32 %v2044, %v518
  %v2078 = vmul.f32 %v2045, %v522
  %v2079 = vmul.f32 %v2046, %v526
  %v2080 = vmul.f32 %v2047, %v530
  %v2081 = vmul.f32 %v2048, %v534
  %v2082 = vmul.f32 %v2049, %v538
  %v2083 = vmul.f32 %v2050, %v542
  %v2084 = vmul.f32 %v2051, %v546
  %v2085 = vmul.f32 %v2052, %v550
  %v2086 = vmul.f32 %v2053, %v554
  %v2087 = vmul.f32 %v2054, %v558
  %2088 = vrot.lane.b32.xlu0 %v1815, 1
  %v2089 = vpop.permute.xlu0 %2088
  %2090 = vrot.lane.b32.xlu0 %v1816, 1
  %v2091 = vpop.permute.xlu0 %2090
  %2092 = vrot.lane.b32.xlu0 %v1817, 1
  %v2093 = vpop.permute.xlu0 %2092
  %2094 = vrot.lane.b32.xlu0 %v1818, 1
  %v2095 = vpop.permute.xlu0 %2094
  %2096 = vrot.lane.b32.xlu0 %v1819, 1
  %v2097 = vpop.permute.xlu0 %2096
  %2098 = vrot.lane.b32.xlu0 %v1820, 1
  %v2099 = vpop.permute.xlu0 %2098
  %2100 = vrot.lane.b32.xlu0 %v1821, 1
  %v2101 = vpop.permute.xlu0 %2100
  %2102 = vrot.lane.b32.xlu0 %v1822, 1
  %v2103 = vpop.permute.xlu0 %2102
  %2104 = vrot.lane.b32.xlu0 %v1823, 1
  %v2105 = vpop.permute.xlu0 %2104
  %2106 = vrot.lane.b32.xlu0 %v1824, 1
  %v2107 = vpop.permute.xlu0 %2106
  %2108 = vrot.lane.b32.xlu0 %v1825, 1
  %v2109 = vpop.permute.xlu0 %2108
  %2110 = vrot.lane.b32.xlu0 %v1826, 1
  %v2111 = vpop.permute.xlu0 %2110
  %2112 = vrot.lane.b32.xlu0 %v1827, 1
  %v2113 = vpop.permute.xlu0 %2112
  %2114 = vrot.lane.b32.xlu0 %v1828, 1
  %v2115 = vpop.permute.xlu0 %2114
  %2116 = vrot.lane.b32.xlu0 %v1829, 1
  %v2117 = vpop.permute.xlu0 %2116
  %2118 = vrot.lane.b32.xlu0 %v1830, 1
  %v2119 = vpop.permute.xlu0 %2118
  %v2120 = vsel %vm607, %v2089, %v2091
  %v2121 = vsel %vm607, %v2091, %v2093
  %v2122 = vsel %vm607, %v2093, %v2095
  %v2123 = vsel %vm607, %v2095, %v2097
  %v2124 = vsel %vm607, %v2097, %v2099
  %v2125 = vsel %vm607, %v2099, %v2101
  %v2126 = vsel %vm607, %v2101, %v2103
  %v2127 = vsel %vm607, %v2103, %v2105
  %v2128 = vsel %vm607, %v2105, %v2107
  %v2129 = vsel %vm607, %v2107, %v2109
  %v2130 = vsel %vm607, %v2109, %v2111
  %v2131 = vsel %vm607, %v2111, %v2113
  %v2132 = vsel %vm607, %v2113, %v2115
  %v2133 = vsel %vm607, %v2115, %v2117
  %v2134 = vsel %vm607, %v2117, %v2119
  %v2151 = vsel %vm607, 0.0, %v2089
  %v2152 = vmul.f32 %v2151, %v643
  %v2153 = vmul.f32 %v2120, %v647
  %v2154 = vmul.f32 %v2121, %v651
  %v2155 = vmul.f32 %v2122, %v655
  %v2156 = vmul.f32 %v2123, %v659
  %v2157 = vmul.f32 %v2124, %v663
  %v2158 = vmul.f32 %v2125, %v667
  %v2159 = vmul.f32 %v2126, %v671
  %v2160 = vmul.f32 %v2127, %v675
  %v2161 = vmul.f32 %v2128, %v679
  %v2162 = vmul.f32 %v2129, %v683
  %v2163 = vmul.f32 %v2130, %v687
  %v2164 = vmul.f32 %v2131, %v691
  %v2165 = vmul.f32 %v2132, %v695
  %v2166 = vmul.f32 %v2133, %v699
  %v2167 = vmul.f32 %v2134, %v703
  %2168 = vrot.lane.b32.xlu0 %v1815, 127
  %v2169 = vpop.permute.xlu0 %2168
  %2170 = vrot.lane.b32.xlu0 %v1816, 127
  %v2171 = vpop.permute.xlu0 %2170
  %2172 = vrot.lane.b32.xlu0 %v1817, 127
  %v2173 = vpop.permute.xlu0 %2172
  %2174 = vrot.lane.b32.xlu0 %v1818, 127
  %v2175 = vpop.permute.xlu0 %2174
  %2176 = vrot.lane.b32.xlu0 %v1819, 127
  %v2177 = vpop.permute.xlu0 %2176
  %2178 = vrot.lane.b32.xlu0 %v1820, 127
  %v2179 = vpop.permute.xlu0 %2178
  %2180 = vrot.lane.b32.xlu0 %v1821, 127
  %v2181 = vpop.permute.xlu0 %2180
  %2182 = vrot.lane.b32.xlu0 %v1822, 127
  %v2183 = vpop.permute.xlu0 %2182
  %2184 = vrot.lane.b32.xlu0 %v1823, 127
  %v2185 = vpop.permute.xlu0 %2184
  %2186 = vrot.lane.b32.xlu0 %v1824, 127
  %v2187 = vpop.permute.xlu0 %2186
  %2188 = vrot.lane.b32.xlu0 %v1825, 127
  %v2189 = vpop.permute.xlu0 %2188
  %2190 = vrot.lane.b32.xlu0 %v1826, 127
  %v2191 = vpop.permute.xlu0 %2190
  %2192 = vrot.lane.b32.xlu0 %v1827, 127
  %v2193 = vpop.permute.xlu0 %2192
  %2194 = vrot.lane.b32.xlu0 %v1828, 127
  %v2195 = vpop.permute.xlu0 %2194
  %2196 = vrot.lane.b32.xlu0 %v1829, 127
  %v2197 = vpop.permute.xlu0 %2196
  %2198 = vrot.lane.b32.xlu0 %v1830, 127
  %v2199 = vpop.permute.xlu0 %2198
  %v2200 = vsel %vm752, %v2169, %v2171
  %v2201 = vsel %vm752, %v2171, %v2173
  %v2202 = vsel %vm752, %v2173, %v2175
  %v2203 = vsel %vm752, %v2175, %v2177
  %v2204 = vsel %vm752, %v2177, %v2179
  %v2205 = vsel %vm752, %v2179, %v2181
  %v2206 = vsel %vm752, %v2181, %v2183
  %v2207 = vsel %vm752, %v2183, %v2185
  %v2208 = vsel %vm752, %v2185, %v2187
  %v2209 = vsel %vm752, %v2187, %v2189
  %v2210 = vsel %vm752, %v2189, %v2191
  %v2211 = vsel %vm752, %v2191, %v2193
  %v2212 = vsel %vm752, %v2193, %v2195
  %v2213 = vsel %vm752, %v2195, %v2197
  %v2214 = vsel %vm752, %v2197, %v2199
  %v2231 = vsel %vm752, %v2199, 0.0
  %v2232 = vmul.f32 %v2200, %v788
  %v2233 = vmul.f32 %v2201, %v792
  %v2234 = vmul.f32 %v2202, %v796
  %v2235 = vmul.f32 %v2203, %v800
  %v2236 = vmul.f32 %v2204, %v804
  %v2237 = vmul.f32 %v2205, %v808
  %v2238 = vmul.f32 %v2206, %v812
  %v2239 = vmul.f32 %v2207, %v816
  %v2240 = vmul.f32 %v2208, %v820
  %v2241 = vmul.f32 %v2209, %v824
  %v2242 = vmul.f32 %v2210, %v828
  %v2243 = vmul.f32 %v2211, %v832
  %v2244 = vmul.f32 %v2212, %v836
  %v2245 = vmul.f32 %v2213, %v840
  %v2246 = vmul.f32 %v2214, %v844
  %v2247 = vmul.f32 %v2231, %v848
  %2248 = vrot.lane.b32.xlu0 %v1815, 97
  %v2249 = vpop.permute.xlu0 %2248
  %2250 = vrot.lane.b32.xlu0 %v1816, 97
  %v2251 = vpop.permute.xlu0 %2250
  %2252 = vrot.lane.b32.xlu0 %v1817, 97
  %v2253 = vpop.permute.xlu0 %2252
  %2254 = vrot.lane.b32.xlu0 %v1818, 97
  %v2255 = vpop.permute.xlu0 %2254
  %2256 = vrot.lane.b32.xlu0 %v1819, 97
  %v2257 = vpop.permute.xlu0 %2256
  %2258 = vrot.lane.b32.xlu0 %v1820, 97
  %v2259 = vpop.permute.xlu0 %2258
  %2260 = vrot.lane.b32.xlu0 %v1821, 97
  %v2261 = vpop.permute.xlu0 %2260
  %2262 = vrot.lane.b32.xlu0 %v1822, 97
  %v2263 = vpop.permute.xlu0 %2262
  %2264 = vrot.lane.b32.xlu0 %v1823, 97
  %v2265 = vpop.permute.xlu0 %2264
  %2266 = vrot.lane.b32.xlu0 %v1824, 97
  %v2267 = vpop.permute.xlu0 %2266
  %2268 = vrot.lane.b32.xlu0 %v1825, 97
  %v2269 = vpop.permute.xlu0 %2268
  %2270 = vrot.lane.b32.xlu0 %v1826, 97
  %v2271 = vpop.permute.xlu0 %2270
  %2272 = vrot.lane.b32.xlu0 %v1827, 97
  %v2273 = vpop.permute.xlu0 %2272
  %2274 = vrot.lane.b32.xlu0 %v1828, 97
  %v2275 = vpop.permute.xlu0 %2274
  %2276 = vrot.lane.b32.xlu0 %v1829, 97
  %v2277 = vpop.permute.xlu0 %2276
  %2278 = vrot.lane.b32.xlu0 %v1830, 97
  %v2279 = vpop.permute.xlu0 %2278
  %v2280 = vsel %vm897, %v2249, %v2251
  %v2281 = vsel %vm897, %v2251, %v2253
  %v2282 = vsel %vm897, %v2253, %v2255
  %v2283 = vsel %vm897, %v2255, %v2257
  %v2284 = vsel %vm897, %v2257, %v2259
  %v2285 = vsel %vm897, %v2259, %v2261
  %v2286 = vsel %vm897, %v2261, %v2263
  %v2287 = vsel %vm897, %v2263, %v2265
  %v2288 = vsel %vm897, %v2265, %v2267
  %v2289 = vsel %vm897, %v2267, %v2269
  %v2290 = vsel %vm897, %v2269, %v2271
  %v2291 = vsel %vm897, %v2271, %v2273
  %v2292 = vsel %vm897, %v2273, %v2275
  %v2293 = vsel %vm897, %v2275, %v2277
  %v2294 = vsel %vm897, %v2277, %v2279
  %v2311 = vsel %vm897, %v2279, 0.0
  %v2312 = vmul.f32 %v2280, %v933
  %v2313 = vmul.f32 %v2281, %v937
  %v2314 = vmul.f32 %v2282, %v941
  %v2315 = vmul.f32 %v2283, %v945
  %v2316 = vmul.f32 %v2284, %v949
  %v2317 = vmul.f32 %v2285, %v953
  %v2318 = vmul.f32 %v2286, %v957
  %v2319 = vmul.f32 %v2287, %v961
  %v2320 = vmul.f32 %v2288, %v965
  %v2321 = vmul.f32 %v2289, %v969
  %v2322 = vmul.f32 %v2290, %v973
  %v2323 = vmul.f32 %v2291, %v977
  %v2324 = vmul.f32 %v2292, %v981
  %v2325 = vmul.f32 %v2293, %v985
  %v2326 = vmul.f32 %v2294, %v989
  %v2327 = vmul.f32 %v2311, %v993
  %2328 = vrot.lane.b32.xlu0 %v1815, 96
  %v2329 = vpop.permute.xlu0 %2328
  %2330 = vrot.lane.b32.xlu0 %v1816, 96
  %v2331 = vpop.permute.xlu0 %2330
  %2332 = vrot.lane.b32.xlu0 %v1817, 96
  %v2333 = vpop.permute.xlu0 %2332
  %2334 = vrot.lane.b32.xlu0 %v1818, 96
  %v2335 = vpop.permute.xlu0 %2334
  %2336 = vrot.lane.b32.xlu0 %v1819, 96
  %v2337 = vpop.permute.xlu0 %2336
  %2338 = vrot.lane.b32.xlu0 %v1820, 96
  %v2339 = vpop.permute.xlu0 %2338
  %2340 = vrot.lane.b32.xlu0 %v1821, 96
  %v2341 = vpop.permute.xlu0 %2340
  %2342 = vrot.lane.b32.xlu0 %v1822, 96
  %v2343 = vpop.permute.xlu0 %2342
  %2344 = vrot.lane.b32.xlu0 %v1823, 96
  %v2345 = vpop.permute.xlu0 %2344
  %2346 = vrot.lane.b32.xlu0 %v1824, 96
  %v2347 = vpop.permute.xlu0 %2346
  %2348 = vrot.lane.b32.xlu0 %v1825, 96
  %v2349 = vpop.permute.xlu0 %2348
  %2350 = vrot.lane.b32.xlu0 %v1826, 96
  %v2351 = vpop.permute.xlu0 %2350
  %2352 = vrot.lane.b32.xlu0 %v1827, 96
  %v2353 = vpop.permute.xlu0 %2352
  %2354 = vrot.lane.b32.xlu0 %v1828, 96
  %v2355 = vpop.permute.xlu0 %2354
  %2356 = vrot.lane.b32.xlu0 %v1829, 96
  %v2357 = vpop.permute.xlu0 %2356
  %2358 = vrot.lane.b32.xlu0 %v1830, 96
  %v2359 = vpop.permute.xlu0 %2358
  %v2360 = vsel %vm1042, %v2329, %v2331
  %v2361 = vsel %vm1042, %v2331, %v2333
  %v2362 = vsel %vm1042, %v2333, %v2335
  %v2363 = vsel %vm1042, %v2335, %v2337
  %v2364 = vsel %vm1042, %v2337, %v2339
  %v2365 = vsel %vm1042, %v2339, %v2341
  %v2366 = vsel %vm1042, %v2341, %v2343
  %v2367 = vsel %vm1042, %v2343, %v2345
  %v2368 = vsel %vm1042, %v2345, %v2347
  %v2369 = vsel %vm1042, %v2347, %v2349
  %v2370 = vsel %vm1042, %v2349, %v2351
  %v2371 = vsel %vm1042, %v2351, %v2353
  %v2372 = vsel %vm1042, %v2353, %v2355
  %v2373 = vsel %vm1042, %v2355, %v2357
  %v2374 = vsel %vm1042, %v2357, %v2359
  %v2391 = vsel %vm1042, %v2359, 0.0
  %v2392 = vmul.f32 %v2360, %v1078
  %v2393 = vmul.f32 %v2361, %v1082
  %v2394 = vmul.f32 %v2362, %v1086
  %v2395 = vmul.f32 %v2363, %v1090
  %v2396 = vmul.f32 %v2364, %v1094
  %v2397 = vmul.f32 %v2365, %v1098
  %v2398 = vmul.f32 %v2366, %v1102
  %v2399 = vmul.f32 %v2367, %v1106
  %v2400 = vmul.f32 %v2368, %v1110
  %v2401 = vmul.f32 %v2369, %v1114
  %v2402 = vmul.f32 %v2370, %v1118
  %v2403 = vmul.f32 %v2371, %v1122
  %v2404 = vmul.f32 %v2372, %v1126
  %v2405 = vmul.f32 %v2373, %v1130
  %v2406 = vmul.f32 %v2374, %v1134
  %v2407 = vmul.f32 %v2391, %v1138
  %2408 = vrot.lane.b32.xlu0 %v1815, 95
  %v2409 = vpop.permute.xlu0 %2408
  %2410 = vrot.lane.b32.xlu0 %v1816, 95
  %v2411 = vpop.permute.xlu0 %2410
  %2412 = vrot.lane.b32.xlu0 %v1817, 95
  %v2413 = vpop.permute.xlu0 %2412
  %2414 = vrot.lane.b32.xlu0 %v1818, 95
  %v2415 = vpop.permute.xlu0 %2414
  %2416 = vrot.lane.b32.xlu0 %v1819, 95
  %v2417 = vpop.permute.xlu0 %2416
  %2418 = vrot.lane.b32.xlu0 %v1820, 95
  %v2419 = vpop.permute.xlu0 %2418
  %2420 = vrot.lane.b32.xlu0 %v1821, 95
  %v2421 = vpop.permute.xlu0 %2420
  %2422 = vrot.lane.b32.xlu0 %v1822, 95
  %v2423 = vpop.permute.xlu0 %2422
  %2424 = vrot.lane.b32.xlu0 %v1823, 95
  %v2425 = vpop.permute.xlu0 %2424
  %2426 = vrot.lane.b32.xlu0 %v1824, 95
  %v2427 = vpop.permute.xlu0 %2426
  %2428 = vrot.lane.b32.xlu0 %v1825, 95
  %v2429 = vpop.permute.xlu0 %2428
  %2430 = vrot.lane.b32.xlu0 %v1826, 95
  %v2431 = vpop.permute.xlu0 %2430
  %2432 = vrot.lane.b32.xlu0 %v1827, 95
  %v2433 = vpop.permute.xlu0 %2432
  %2434 = vrot.lane.b32.xlu0 %v1828, 95
  %v2435 = vpop.permute.xlu0 %2434
  %2436 = vrot.lane.b32.xlu0 %v1829, 95
  %v2437 = vpop.permute.xlu0 %2436
  %2438 = vrot.lane.b32.xlu0 %v1830, 95
  %v2439 = vpop.permute.xlu0 %2438
  %v2440 = vsel %vm1187, %v2409, %v2411
  %v2441 = vsel %vm1187, %v2411, %v2413
  %v2442 = vsel %vm1187, %v2413, %v2415
  %v2443 = vsel %vm1187, %v2415, %v2417
  %v2444 = vsel %vm1187, %v2417, %v2419
  %v2445 = vsel %vm1187, %v2419, %v2421
  %v2446 = vsel %vm1187, %v2421, %v2423
  %v2447 = vsel %vm1187, %v2423, %v2425
  %v2448 = vsel %vm1187, %v2425, %v2427
  %v2449 = vsel %vm1187, %v2427, %v2429
  %v2450 = vsel %vm1187, %v2429, %v2431
  %v2451 = vsel %vm1187, %v2431, %v2433
  %v2452 = vsel %vm1187, %v2433, %v2435
  %v2453 = vsel %vm1187, %v2435, %v2437
  %v2454 = vsel %vm1187, %v2437, %v2439
  %v2471 = vsel %vm1187, %v2439, 0.0
  %v2472 = vmul.f32 %v2440, %v1223
  %v2473 = vmul.f32 %v2441, %v1227
  %v2474 = vmul.f32 %v2442, %v1231
  %v2475 = vmul.f32 %v2443, %v1235
  %v2476 = vmul.f32 %v2444, %v1239
  %v2477 = vmul.f32 %v2445, %v1243
  %v2478 = vmul.f32 %v2446, %v1247
  %v2479 = vmul.f32 %v2447, %v1251
  %v2480 = vmul.f32 %v2448, %v1255
  %v2481 = vmul.f32 %v2449, %v1259
  %v2482 = vmul.f32 %v2450, %v1263
  %v2483 = vmul.f32 %v2451, %v1267
  %v2484 = vmul.f32 %v2452, %v1271
  %v2485 = vmul.f32 %v2453, %v1275
  %v2486 = vmul.f32 %v2454, %v1279
  %v2487 = vmul.f32 %v2471, %v1283
  %v2488 = vpack.c.bf16 %v1992, %v1912
  %v2489 = vpack.c.bf16 %v1993, %v1913
  %v2490 = vpack.c.bf16 %v1994, %v1914
  %v2491 = vpack.c.bf16 %v1995, %v1915
  %v2492 = vpack.c.bf16 %v1996, %v1916
  %v2493 = vpack.c.bf16 %v1997, %v1917
  %v2494 = vpack.c.bf16 %v1998, %v1918
  %v2495 = vpack.c.bf16 %v1999, %v1919
  %v2496 = vpack.c.bf16 %v2000, %v1920
  %v2497 = vpack.c.bf16 %v2001, %v1921
  %v2498 = vpack.c.bf16 %v2002, %v1922
  %v2499 = vpack.c.bf16 %v2003, %v1923
  %v2500 = vpack.c.bf16 %v2004, %v1924
  %v2501 = vpack.c.bf16 %v2005, %v1925
  %v2502 = vpack.c.bf16 %v2006, %v1926
  %v2503 = vpack.c.bf16 %v2007, %v1927
  %v2504 = vpack.c.bf16 %v2152, %v2072
  %v2505 = vpack.c.bf16 %v2153, %v2073
  %v2506 = vpack.c.bf16 %v2154, %v2074
  %v2507 = vpack.c.bf16 %v2155, %v2075
  %v2508 = vpack.c.bf16 %v2156, %v2076
  %v2509 = vpack.c.bf16 %v2157, %v2077
  %v2510 = vpack.c.bf16 %v2158, %v2078
  %v2511 = vpack.c.bf16 %v2159, %v2079
  %v2512 = vpack.c.bf16 %v2160, %v2080
  %v2513 = vpack.c.bf16 %v2161, %v2081
  %v2514 = vpack.c.bf16 %v2162, %v2082
  %v2515 = vpack.c.bf16 %v2163, %v2083
  %v2516 = vpack.c.bf16 %v2164, %v2084
  %v2517 = vpack.c.bf16 %v2165, %v2085
  %v2518 = vpack.c.bf16 %v2166, %v2086
  %v2519 = vpack.c.bf16 %v2167, %v2087
  %v2520 = vpack.c.bf16 %v2232, %v1815
  %v2521 = vpack.c.bf16 %v2233, %v1816
  %v2522 = vpack.c.bf16 %v2234, %v1817
  %v2523 = vpack.c.bf16 %v2235, %v1818
  %v2524 = vpack.c.bf16 %v2236, %v1819
  %v2525 = vpack.c.bf16 %v2237, %v1820
  %v2526 = vpack.c.bf16 %v2238, %v1821
  %v2527 = vpack.c.bf16 %v2239, %v1822
  %v2528 = vpack.c.bf16 %v2240, %v1823
  %v2529 = vpack.c.bf16 %v2241, %v1824
  %v2530 = vpack.c.bf16 %v2242, %v1825
  %v2531 = vpack.c.bf16 %v2243, %v1826
  %v2532 = vpack.c.bf16 %v2244, %v1827
  %v2533 = vpack.c.bf16 %v2245, %v1828
  %v2534 = vpack.c.bf16 %v2246, %v1829
  %v2535 = vpack.c.bf16 %v2247, %v1830
  %v2536 = vpack.c.bf16 %v2392, %v2312
  %v2537 = vpack.c.bf16 %v2393, %v2313
  %v2538 = vpack.c.bf16 %v2394, %v2314
  %v2539 = vpack.c.bf16 %v2395, %v2315
  %v2540 = vpack.c.bf16 %v2396, %v2316
  %v2541 = vpack.c.bf16 %v2397, %v2317
  %v2542 = vpack.c.bf16 %v2398, %v2318
  %v2543 = vpack.c.bf16 %v2399, %v2319
  %v2544 = vpack.c.bf16 %v2400, %v2320
  %v2545 = vpack.c.bf16 %v2401, %v2321
  %v2546 = vpack.c.bf16 %v2402, %v2322
  %v2547 = vpack.c.bf16 %v2403, %v2323
  %v2548 = vpack.c.bf16 %v2404, %v2324
  %v2549 = vpack.c.bf16 %v2405, %v2325
  %v2550 = vpack.c.bf16 %v2406, %v2326
  %v2551 = vpack.c.bf16 %v2407, %v2327
  %v2552 = vpack.c.bf16 %v2472, %v2472
  %v2553 = vpack.c.bf16 %v2473, %v2473
  %v2554 = vpack.c.bf16 %v2474, %v2474
  %v2555 = vpack.c.bf16 %v2475, %v2475
  %v2556 = vpack.c.bf16 %v2476, %v2476
  %v2557 = vpack.c.bf16 %v2477, %v2477
  %v2558 = vpack.c.bf16 %v2478, %v2478
  %v2559 = vpack.c.bf16 %v2479, %v2479
  %v2560 = vpack.c.bf16 %v2480, %v2480
  %v2561 = vpack.c.bf16 %v2481, %v2481
  %v2562 = vpack.c.bf16 %v2482, %v2482
  %v2563 = vpack.c.bf16 %v2483, %v2483
  %v2564 = vpack.c.bf16 %v2484, %v2484
  %v2565 = vpack.c.bf16 %v2485, %v2485
  %v2566 = vpack.c.bf16 %v2486, %v2486
  %v2567 = vpack.c.bf16 %v2487, %v2487
  %v2568 = vld [vmem:[%s7] sm:$0xf]
  %2570 = vset.pattern.permute.xlu0 0
  %2571 = vperm.xlu0 %2570, %v2568
  %v2572 = vpop.permute.xlu0 %2571
  %v2575 = vsel %vm1386, %v1831, 0
  %v2578 = vsel %vm1390, %v2552, 0
  %v2581 = vsel %vm1390, %v2553, 0
  %v2584 = vsel %vm1390, %v2554, 0
  %v2587 = vsel %vm1390, %v2555, 0
  %v2590 = vsel %vm1390, %v2556, 0
  %v2593 = vsel %vm1390, %v2557, 0
  %v2596 = vsel %vm1390, %v2558, 0
  %v2599 = vsel %vm1390, %v2559, 0
  %v2602 = vsel %vm1390, %v2560, 0
  %v2605 = vsel %vm1390, %v2561, 0
  %v2608 = vsel %vm1390, %v2562, 0
  %v2611 = vsel %vm1390, %v2563, 0
  %v2614 = vsel %vm1390, %v2564, 0
  %v2617 = vsel %vm1390, %v2565, 0
  %v2620 = vsel %vm1390, %v2566, 0
  %v2623 = vsel %vm1390, %v2567, 0
  %2625 = vmatprep.subr.bf16.mxu0 0
  %2626 = vmatpush1.bf16.msra.mxu0 0
  %2627 = vmatprep.subr.bf16.mxu0 0
  %2628 = vmatpush1.bf16.msra.mxu0 0
  %2629 = vmatprep.subr.bf16.mxu0 0
  %2630 = vmatpush1.bf16.msra.mxu0 0
  %2631 = vmatprep.subr.bf16.mxu0 %v2581
  %2632 = vmatpush1.bf16.msra.mxu0 %v2578
  %2633 = vmatprep.subr.bf16.mxu0 %v2537
  %2634 = vmatpush1.bf16.msra.mxu0 %v2536
  %2635 = vmatprep.subr.bf16.mxu0 %v2521
  %2636 = vmatpush1.bf16.msra.mxu0 %v2520
  %2637 = vmatprep.subr.bf16.mxu0 %v2505
  %2638 = vmatpush1.bf16.msra.mxu0 %v2504
  %2639 = vmatprep.subr.bf16.mxu0 %v2489
  %2640 = vmatpush1.bf16.msra.mxu0 %v2488
  %2641 = vmatprep.subr.bf16.mxu0 0
  %2642 = vmatpush2.bf16.msra.mxu0 0
  %2643 = vmatprep.subr.bf16.mxu0 0
  %2644 = vmatpush2.bf16.msra.mxu0 0
  %2645 = vmatprep.subr.bf16.mxu0 0
  %2646 = vmatpush2.bf16.msra.mxu0 0
  %2647 = vmatprep.subr.bf16.mxu0 0
  %2648 = vmatpush2.bf16.msra.mxu0 0
  %2649 = vmatprep.subr.bf16.mxu0 0
  %2650 = vmatpush2.bf16.msra.mxu0 0
  %2651 = vmatprep.subr.bf16.mxu0 0
  %2652 = vmatpush2.bf16.msra.mxu0 0
  %2653 = vmatprep.subr.bf16.mxu0 0
  %2654 = vmatpush2.bf16.msra.mxu0 0
  %2655 = vmatprep.subr.bf16.mxu0 0
  %2656 = vmatpush2.bf16.msra.mxu0 0
  %2657 = vmatprep.mubr.bf16.mxu0 0
  %2658 = vmatmul.mubr.bf16.gmra.mxu0 %v2575
  %v2659 = vpop.f32.mrf.mxu0
  %v2660 = vadd.f32 %v2572, %v2659
  %v2661 = vpop.f32.mrf.mxu0
  %v2662 = vadd.f32 %v2572, %v2661
  %v2663 = vpop.f32.mrf.mxu0
  %v2664 = vpop.f32.mrf.mxu0
  %2665 = vdwg.mxu0
  %2666 = vmatprep.subr.bf16.mxu0 0
  %2667 = vmatpush1.bf16.msra.mxu0 0
  %2668 = vmatprep.subr.bf16.mxu0 0
  %2669 = vmatpush1.bf16.msra.mxu0 0
  %2670 = vmatprep.subr.bf16.mxu0 0
  %2671 = vmatpush1.bf16.msra.mxu0 0
  %2672 = vmatprep.subr.bf16.mxu0 %v2587
  %2673 = vmatpush1.bf16.msra.mxu0 %v2584
  %2674 = vmatprep.subr.bf16.mxu0 %v2539
  %2675 = vmatpush1.bf16.msra.mxu0 %v2538
  %2676 = vmatprep.subr.bf16.mxu0 %v2523
  %2677 = vmatpush1.bf16.msra.mxu0 %v2522
  %2678 = vmatprep.subr.bf16.mxu0 %v2507
  %2679 = vmatpush1.bf16.msra.mxu0 %v2506
  %2680 = vmatprep.subr.bf16.mxu0 %v2491
  %2681 = vmatpush1.bf16.msra.mxu0 %v2490
  %2682 = vmatprep.subr.bf16.mxu0 0
  %2683 = vmatpush2.bf16.msra.mxu0 0
  %2684 = vmatprep.subr.bf16.mxu0 0
  %2685 = vmatpush2.bf16.msra.mxu0 0
  %2686 = vmatprep.subr.bf16.mxu0 0
  %2687 = vmatpush2.bf16.msra.mxu0 0
  %2688 = vmatprep.subr.bf16.mxu0 0
  %2689 = vmatpush2.bf16.msra.mxu0 0
  %2690 = vmatprep.subr.bf16.mxu0 0
  %2691 = vmatpush2.bf16.msra.mxu0 0
  %2692 = vmatprep.subr.bf16.mxu0 0
  %2693 = vmatpush2.bf16.msra.mxu0 0
  %2694 = vmatprep.subr.bf16.mxu0 0
  %2695 = vmatpush2.bf16.msra.mxu0 0
  %2696 = vmatprep.subr.bf16.mxu0 0
  %2697 = vmatpush2.bf16.msra.mxu0 0
  %2698 = vmatprep.mubr.bf16.mxu0 0
  %2699 = vmatmul.mubr.bf16.gmra.mxu0 %v2575
  %v2700 = vpop.f32.mrf.mxu0
  %v2701 = vadd.f32 %v2572, %v2700
  %v2702 = vpop.f32.mrf.mxu0
  %v2703 = vadd.f32 %v2572, %v2702
  %v2704 = vpop.f32.mrf.mxu0
  %v2705 = vpop.f32.mrf.mxu0
  %2706 = vdwg.mxu0
  %2707 = vmatprep.subr.bf16.mxu0 0
  %2708 = vmatpush1.bf16.msra.mxu0 0
  %2709 = vmatprep.subr.bf16.mxu0 0
  %2710 = vmatpush1.bf16.msra.mxu0 0
  %2711 = vmatprep.subr.bf16.mxu0 0
  %2712 = vmatpush1.bf16.msra.mxu0 0
  %2713 = vmatprep.subr.bf16.mxu0 %v2593
  %2714 = vmatpush1.bf16.msra.mxu0 %v2590
  %2715 = vmatprep.subr.bf16.mxu0 %v2541
  %2716 = vmatpush1.bf16.msra.mxu0 %v2540
  %2717 = vmatprep.subr.bf16.mxu0 %v2525
  %2718 = vmatpush1.bf16.msra.mxu0 %v2524
  %2719 = vmatprep.subr.bf16.mxu0 %v2509
  %2720 = vmatpush1.bf16.msra.mxu0 %v2508
  %2721 = vmatprep.subr.bf16.mxu0 %v2493
  %2722 = vmatpush1.bf16.msra.mxu0 %v2492
  %2723 = vmatprep.subr.bf16.mxu0 0
  %2724 = vmatpush2.bf16.msra.mxu0 0
  %2725 = vmatprep.subr.bf16.mxu0 0
  %2726 = vmatpush2.bf16.msra.mxu0 0
  %2727 = vmatprep.subr.bf16.mxu0 0
  %2728 = vmatpush2.bf16.msra.mxu0 0
  %2729 = vmatprep.subr.bf16.mxu0 0
  %2730 = vmatpush2.bf16.msra.mxu0 0
  %2731 = vmatprep.subr.bf16.mxu0 0
  %2732 = vmatpush2.bf16.msra.mxu0 0
  %2733 = vmatprep.subr.bf16.mxu0 0
  %2734 = vmatpush2.bf16.msra.mxu0 0
  %2735 = vmatprep.subr.bf16.mxu0 0
  %2736 = vmatpush2.bf16.msra.mxu0 0
  %2737 = vmatprep.subr.bf16.mxu0 0
  %2738 = vmatpush2.bf16.msra.mxu0 0
  %2739 = vmatprep.mubr.bf16.mxu0 0
  %2740 = vmatmul.mubr.bf16.gmra.mxu0 %v2575
  %v2741 = vpop.f32.mrf.mxu0
  %v2742 = vadd.f32 %v2572, %v2741
  %v2743 = vpop.f32.mrf.mxu0
  %v2744 = vadd.f32 %v2572, %v2743
  %v2745 = vpop.f32.mrf.mxu0
  %v2746 = vpop.f32.mrf.mxu0
  %2747 = vdwg.mxu0
  %2748 = vmatprep.subr.bf16.mxu0 0
  %2749 = vmatpush1.bf16.msra.mxu0 0
  %2750 = vmatprep.subr.bf16.mxu0 0
  %2751 = vmatpush1.bf16.msra.mxu0 0
  %2752 = vmatprep.subr.bf16.mxu0 0
  %2753 = vmatpush1.bf16.msra.mxu0 0
  %2754 = vmatprep.subr.bf16.mxu0 %v2599
  %2755 = vmatpush1.bf16.msra.mxu0 %v2596
  %2756 = vmatprep.subr.bf16.mxu0 %v2543
  %2757 = vmatpush1.bf16.msra.mxu0 %v2542
  %2758 = vmatprep.subr.bf16.mxu0 %v2527
  %2759 = vmatpush1.bf16.msra.mxu0 %v2526
  %2760 = vmatprep.subr.bf16.mxu0 %v2511
  %2761 = vmatpush1.bf16.msra.mxu0 %v2510
  %2762 = vmatprep.subr.bf16.mxu0 %v2495
  %2763 = vmatpush1.bf16.msra.mxu0 %v2494
  %2764 = vmatprep.subr.bf16.mxu0 0
  %2765 = vmatpush2.bf16.msra.mxu0 0
  %2766 = vmatprep.subr.bf16.mxu0 0
  %2767 = vmatpush2.bf16.msra.mxu0 0
  %2768 = vmatprep.subr.bf16.mxu0 0
  %2769 = vmatpush2.bf16.msra.mxu0 0
  %2770 = vmatprep.subr.bf16.mxu0 0
  %2771 = vmatpush2.bf16.msra.mxu0 0
  %2772 = vmatprep.subr.bf16.mxu0 0
  %2773 = vmatpush2.bf16.msra.mxu0 0
  %2774 = vmatprep.subr.bf16.mxu0 0
  %2775 = vmatpush2.bf16.msra.mxu0 0
  %2776 = vmatprep.subr.bf16.mxu0 0
  %2777 = vmatpush2.bf16.msra.mxu0 0
  %2778 = vmatprep.subr.bf16.mxu0 0
  %2779 = vmatpush2.bf16.msra.mxu0 0
  %2780 = vmatprep.mubr.bf16.mxu0 0
  %2781 = vmatmul.mubr.bf16.gmra.mxu0 %v2575
  %v2782 = vpop.f32.mrf.mxu0
  %v2783 = vadd.f32 %v2572, %v2782
  %v2784 = vpop.f32.mrf.mxu0
  %v2785 = vadd.f32 %v2572, %v2784
  %v2786 = vpop.f32.mrf.mxu0
  %v2787 = vpop.f32.mrf.mxu0
  %2788 = vdwg.mxu0
  %2789 = vmatprep.subr.bf16.mxu0 0
  %2790 = vmatpush1.bf16.msra.mxu0 0
  %2791 = vmatprep.subr.bf16.mxu0 0
  %2792 = vmatpush1.bf16.msra.mxu0 0
  %2793 = vmatprep.subr.bf16.mxu0 0
  %2794 = vmatpush1.bf16.msra.mxu0 0
  %2795 = vmatprep.subr.bf16.mxu0 %v2605
  %2796 = vmatpush1.bf16.msra.mxu0 %v2602
  %2797 = vmatprep.subr.bf16.mxu0 %v2545
  %2798 = vmatpush1.bf16.msra.mxu0 %v2544
  %2799 = vmatprep.subr.bf16.mxu0 %v2529
  %2800 = vmatpush1.bf16.msra.mxu0 %v2528
  %2801 = vmatprep.subr.bf16.mxu0 %v2513
  %2802 = vmatpush1.bf16.msra.mxu0 %v2512
  %2803 = vmatprep.subr.bf16.mxu0 %v2497
  %2804 = vmatpush1.bf16.msra.mxu0 %v2496
  %2805 = vmatprep.subr.bf16.mxu0 0
  %2806 = vmatpush2.bf16.msra.mxu0 0
  %2807 = vmatprep.subr.bf16.mxu0 0
  %2808 = vmatpush2.bf16.msra.mxu0 0
  %2809 = vmatprep.subr.bf16.mxu0 0
  %2810 = vmatpush2.bf16.msra.mxu0 0
  %2811 = vmatprep.subr.bf16.mxu0 0
  %2812 = vmatpush2.bf16.msra.mxu0 0
  %2813 = vmatprep.subr.bf16.mxu0 0
  %2814 = vmatpush2.bf16.msra.mxu0 0
  %2815 = vmatprep.subr.bf16.mxu0 0
  %2816 = vmatpush2.bf16.msra.mxu0 0
  %2817 = vmatprep.subr.bf16.mxu0 0
  %2818 = vmatpush2.bf16.msra.mxu0 0
  %2819 = vmatprep.subr.bf16.mxu0 0
  %2820 = vmatpush2.bf16.msra.mxu0 0
  %2821 = vmatprep.mubr.bf16.mxu0 0
  %2822 = vmatmul.mubr.bf16.gmra.mxu0 %v2575
  %v2823 = vpop.f32.mrf.mxu0
  %v2824 = vadd.f32 %v2572, %v2823
  %v2825 = vpop.f32.mrf.mxu0
  %v2826 = vadd.f32 %v2572, %v2825
  %v2827 = vpop.f32.mrf.mxu0
  %v2828 = vpop.f32.mrf.mxu0
  %2829 = vdwg.mxu0
  %2830 = vmatprep.subr.bf16.mxu0 0
  %2831 = vmatpush1.bf16.msra.mxu0 0
  %2832 = vmatprep.subr.bf16.mxu0 0
  %2833 = vmatpush1.bf16.msra.mxu0 0
  %2834 = vmatprep.subr.bf16.mxu0 0
  %2835 = vmatpush1.bf16.msra.mxu0 0
  %2836 = vmatprep.subr.bf16.mxu0 %v2611
  %2837 = vmatpush1.bf16.msra.mxu0 %v2608
  %2838 = vmatprep.subr.bf16.mxu0 %v2547
  %2839 = vmatpush1.bf16.msra.mxu0 %v2546
  %2840 = vmatprep.subr.bf16.mxu0 %v2531
  %2841 = vmatpush1.bf16.msra.mxu0 %v2530
  %2842 = vmatprep.subr.bf16.mxu0 %v2515
  %2843 = vmatpush1.bf16.msra.mxu0 %v2514
  %2844 = vmatprep.subr.bf16.mxu0 %v2499
  %2845 = vmatpush1.bf16.msra.mxu0 %v2498
  %2846 = vmatprep.subr.bf16.mxu0 0
  %2847 = vmatpush2.bf16.msra.mxu0 0
  %2848 = vmatprep.subr.bf16.mxu0 0
  %2849 = vmatpush2.bf16.msra.mxu0 0
  %2850 = vmatprep.subr.bf16.mxu0 0
  %2851 = vmatpush2.bf16.msra.mxu0 0
  %2852 = vmatprep.subr.bf16.mxu0 0
  %2853 = vmatpush2.bf16.msra.mxu0 0
  %2854 = vmatprep.subr.bf16.mxu0 0
  %2855 = vmatpush2.bf16.msra.mxu0 0
  %2856 = vmatprep.subr.bf16.mxu0 0
  %2857 = vmatpush2.bf16.msra.mxu0 0
  %2858 = vmatprep.subr.bf16.mxu0 0
  %2859 = vmatpush2.bf16.msra.mxu0 0
  %2860 = vmatprep.subr.bf16.mxu0 0
  %2861 = vmatpush2.bf16.msra.mxu0 0
  %2862 = vmatprep.mubr.bf16.mxu0 0
  %2863 = vmatmul.mubr.bf16.gmra.mxu0 %v2575
  %v2864 = vpop.f32.mrf.mxu0
  %v2865 = vadd.f32 %v2572, %v2864
  %v2866 = vpop.f32.mrf.mxu0
  %v2867 = vadd.f32 %v2572, %v2866
  %v2868 = vpop.f32.mrf.mxu0
  %v2869 = vpop.f32.mrf.mxu0
  %2870 = vdwg.mxu0
  %2871 = vmatprep.subr.bf16.mxu0 0
  %2872 = vmatpush1.bf16.msra.mxu0 0
  %2873 = vmatprep.subr.bf16.mxu0 0
  %2874 = vmatpush1.bf16.msra.mxu0 0
  %2875 = vmatprep.subr.bf16.mxu0 0
  %2876 = vmatpush1.bf16.msra.mxu0 0
  %2877 = vmatprep.subr.bf16.mxu0 %v2617
  %2878 = vmatpush1.bf16.msra.mxu0 %v2614
  %2879 = vmatprep.subr.bf16.mxu0 %v2549
  %2880 = vmatpush1.bf16.msra.mxu0 %v2548
  %2881 = vmatprep.subr.bf16.mxu0 %v2533
  %2882 = vmatpush1.bf16.msra.mxu0 %v2532
  %2883 = vmatprep.subr.bf16.mxu0 %v2517
  %2884 = vmatpush1.bf16.msra.mxu0 %v2516
  %2885 = vmatprep.subr.bf16.mxu0 %v2501
  %2886 = vmatpush1.bf16.msra.mxu0 %v2500
  %2887 = vmatprep.subr.bf16.mxu0 0
  %2888 = vmatpush2.bf16.msra.mxu0 0
  %2889 = vmatprep.subr.bf16.mxu0 0
  %2890 = vmatpush2.bf16.msra.mxu0 0
  %2891 = vmatprep.subr.bf16.mxu0 0
  %2892 = vmatpush2.bf16.msra.mxu0 0
  %2893 = vmatprep.subr.bf16.mxu0 0
  %2894 = vmatpush2.bf16.msra.mxu0 0
  %2895 = vmatprep.subr.bf16.mxu0 0
  %2896 = vmatpush2.bf16.msra.mxu0 0
  %2897 = vmatprep.subr.bf16.mxu0 0
  %2898 = vmatpush2.bf16.msra.mxu0 0
  %2899 = vmatprep.subr.bf16.mxu0 0
  %2900 = vmatpush2.bf16.msra.mxu0 0
  %2901 = vmatprep.subr.bf16.mxu0 0
  %2902 = vmatpush2.bf16.msra.mxu0 0
  %2903 = vmatprep.mubr.bf16.mxu0 0
  %2904 = vmatmul.mubr.bf16.gmra.mxu0 %v2575
  %v2905 = vpop.f32.mrf.mxu0
  %v2906 = vadd.f32 %v2572, %v2905
  %v2907 = vpop.f32.mrf.mxu0
  %v2908 = vadd.f32 %v2572, %v2907
  %v2909 = vpop.f32.mrf.mxu0
  %v2910 = vpop.f32.mrf.mxu0
  %2911 = vdwg.mxu0
  %2912 = vmatprep.subr.bf16.mxu0 0
  %2913 = vmatpush1.bf16.msra.mxu0 0
  %2914 = vmatprep.subr.bf16.mxu0 0
  %2915 = vmatpush1.bf16.msra.mxu0 0
  %2916 = vmatprep.subr.bf16.mxu0 0
  %2917 = vmatpush1.bf16.msra.mxu0 0
  %2918 = vmatprep.subr.bf16.mxu0 %v2623
  %2919 = vmatpush1.bf16.msra.mxu0 %v2620
  %2920 = vmatprep.subr.bf16.mxu0 %v2551
  %2921 = vmatpush1.bf16.msra.mxu0 %v2550
  %2922 = vmatprep.subr.bf16.mxu0 %v2535
  %2923 = vmatpush1.bf16.msra.mxu0 %v2534
  %2924 = vmatprep.subr.bf16.mxu0 %v2519
  %2925 = vmatpush1.bf16.msra.mxu0 %v2518
  %2926 = vmatprep.subr.bf16.mxu0 %v2503
  %2927 = vmatpush1.bf16.msra.mxu0 %v2502
  %2928 = vmatprep.subr.bf16.mxu0 0
  %2929 = vmatpush2.bf16.msra.mxu0 0
  %2930 = vmatprep.subr.bf16.mxu0 0
  %2931 = vmatpush2.bf16.msra.mxu0 0
  %2932 = vmatprep.subr.bf16.mxu0 0
  %2933 = vmatpush2.bf16.msra.mxu0 0
  %2934 = vmatprep.subr.bf16.mxu0 0
  %2935 = vmatpush2.bf16.msra.mxu0 0
  %2936 = vmatprep.subr.bf16.mxu0 0
  %2937 = vmatpush2.bf16.msra.mxu0 0
  %2938 = vmatprep.subr.bf16.mxu0 0
  %2939 = vmatpush2.bf16.msra.mxu0 0
  %2940 = vmatprep.subr.bf16.mxu0 0
  %2941 = vmatpush2.bf16.msra.mxu0 0
  %2942 = vmatprep.subr.bf16.mxu0 0
  %2943 = vmatpush2.bf16.msra.mxu0 0
  %2944 = vmatprep.mubr.bf16.mxu0 0
  %2945 = vmatmul.mubr.bf16.gmra.mxu0 %v2575
  %v2946 = vpop.f32.mrf.mxu0
  %v2947 = vadd.f32 %v2572, %v2946
  %v2948 = vpop.f32.mrf.mxu0
  %v2949 = vadd.f32 %v2572, %v2948
  %v2950 = vpop.f32.mrf.mxu0
  %v2951 = vpop.f32.mrf.mxu0
  %2952 = vdwg.mxu0
  %v2953 = vmax.f32 %v2660, 0.0
  %v2954 = vmax.f32 %v2662, 0.0
  %v2955 = vmax.f32 %v2701, 0.0
  %v2956 = vmax.f32 %v2703, 0.0
  %v2957 = vmax.f32 %v2742, 0.0
  %v2958 = vmax.f32 %v2744, 0.0
  %v2959 = vmax.f32 %v2783, 0.0
  %v2960 = vmax.f32 %v2785, 0.0
  %v2961 = vmax.f32 %v2824, 0.0
  %v2962 = vmax.f32 %v2826, 0.0
  %v2963 = vmax.f32 %v2865, 0.0
  %v2964 = vmax.f32 %v2867, 0.0
  %v2965 = vmax.f32 %v2906, 0.0
  %v2966 = vmax.f32 %v2908, 0.0
  %v2967 = vmax.f32 %v2947, 0.0
  %v2968 = vmax.f32 %v2949, 0.0
  %v2969 = vld [vmem:[%s5] sm:$0x3]
  %2986 = vrot.lane.b32.xlu0 %v2953, 33
  %v2987 = vpop.permute.xlu0 %2986
  %2988 = vrot.lane.b32.xlu0 %v2954, 33
  %v2989 = vpop.permute.xlu0 %2988
  %2990 = vrot.lane.b32.xlu0 %v2955, 33
  %v2991 = vpop.permute.xlu0 %2990
  %2992 = vrot.lane.b32.xlu0 %v2956, 33
  %v2993 = vpop.permute.xlu0 %2992
  %2994 = vrot.lane.b32.xlu0 %v2957, 33
  %v2995 = vpop.permute.xlu0 %2994
  %2996 = vrot.lane.b32.xlu0 %v2958, 33
  %v2997 = vpop.permute.xlu0 %2996
  %2998 = vrot.lane.b32.xlu0 %v2959, 33
  %v2999 = vpop.permute.xlu0 %2998
  %3000 = vrot.lane.b32.xlu0 %v2960, 33
  %v3001 = vpop.permute.xlu0 %3000
  %3002 = vrot.lane.b32.xlu0 %v2961, 33
  %v3003 = vpop.permute.xlu0 %3002
  %3004 = vrot.lane.b32.xlu0 %v2962, 33
  %v3005 = vpop.permute.xlu0 %3004
  %3006 = vrot.lane.b32.xlu0 %v2963, 33
  %v3007 = vpop.permute.xlu0 %3006
  %3008 = vrot.lane.b32.xlu0 %v2964, 33
  %v3009 = vpop.permute.xlu0 %3008
  %3010 = vrot.lane.b32.xlu0 %v2965, 33
  %v3011 = vpop.permute.xlu0 %3010
  %3012 = vrot.lane.b32.xlu0 %v2966, 33
  %v3013 = vpop.permute.xlu0 %3012
  %3014 = vrot.lane.b32.xlu0 %v2967, 33
  %v3015 = vpop.permute.xlu0 %3014
  %3016 = vrot.lane.b32.xlu0 %v2968, 33
  %v3017 = vpop.permute.xlu0 %3016
  %v3018 = vsel %vm172, %v2987, %v2989
  %v3019 = vsel %vm172, %v2989, %v2991
  %v3020 = vsel %vm172, %v2991, %v2993
  %v3021 = vsel %vm172, %v2993, %v2995
  %v3022 = vsel %vm172, %v2995, %v2997
  %v3023 = vsel %vm172, %v2997, %v2999
  %v3024 = vsel %vm172, %v2999, %v3001
  %v3025 = vsel %vm172, %v3001, %v3003
  %v3026 = vsel %vm172, %v3003, %v3005
  %v3027 = vsel %vm172, %v3005, %v3007
  %v3028 = vsel %vm172, %v3007, %v3009
  %v3029 = vsel %vm172, %v3009, %v3011
  %v3030 = vsel %vm172, %v3011, %v3013
  %v3031 = vsel %vm172, %v3013, %v3015
  %v3032 = vsel %vm172, %v3015, %v3017
  %v3049 = vsel %vm172, 0.0, %v2987
  %v3050 = vmul.f32 %v3049, %v208
  %v3051 = vmul.f32 %v3018, %v212
  %v3052 = vmul.f32 %v3019, %v216
  %v3053 = vmul.f32 %v3020, %v220
  %v3054 = vmul.f32 %v3021, %v224
  %v3055 = vmul.f32 %v3022, %v228
  %v3056 = vmul.f32 %v3023, %v232
  %v3057 = vmul.f32 %v3024, %v236
  %v3058 = vmul.f32 %v3025, %v240
  %v3059 = vmul.f32 %v3026, %v244
  %v3060 = vmul.f32 %v3027, %v248
  %v3061 = vmul.f32 %v3028, %v252
  %v3062 = vmul.f32 %v3029, %v256
  %v3063 = vmul.f32 %v3030, %v260
  %v3064 = vmul.f32 %v3031, %v264
  %v3065 = vmul.f32 %v3032, %v268
  %3066 = vrot.lane.b32.xlu0 %v2953, 32
  %v3067 = vpop.permute.xlu0 %3066
  %3068 = vrot.lane.b32.xlu0 %v2954, 32
  %v3069 = vpop.permute.xlu0 %3068
  %3070 = vrot.lane.b32.xlu0 %v2955, 32
  %v3071 = vpop.permute.xlu0 %3070
  %3072 = vrot.lane.b32.xlu0 %v2956, 32
  %v3073 = vpop.permute.xlu0 %3072
  %3074 = vrot.lane.b32.xlu0 %v2957, 32
  %v3075 = vpop.permute.xlu0 %3074
  %3076 = vrot.lane.b32.xlu0 %v2958, 32
  %v3077 = vpop.permute.xlu0 %3076
  %3078 = vrot.lane.b32.xlu0 %v2959, 32
  %v3079 = vpop.permute.xlu0 %3078
  %3080 = vrot.lane.b32.xlu0 %v2960, 32
  %v3081 = vpop.permute.xlu0 %3080
  %3082 = vrot.lane.b32.xlu0 %v2961, 32
  %v3083 = vpop.permute.xlu0 %3082
  %3084 = vrot.lane.b32.xlu0 %v2962, 32
  %v3085 = vpop.permute.xlu0 %3084
  %3086 = vrot.lane.b32.xlu0 %v2963, 32
  %v3087 = vpop.permute.xlu0 %3086
  %3088 = vrot.lane.b32.xlu0 %v2964, 32
  %v3089 = vpop.permute.xlu0 %3088
  %3090 = vrot.lane.b32.xlu0 %v2965, 32
  %v3091 = vpop.permute.xlu0 %3090
  %3092 = vrot.lane.b32.xlu0 %v2966, 32
  %v3093 = vpop.permute.xlu0 %3092
  %3094 = vrot.lane.b32.xlu0 %v2967, 32
  %v3095 = vpop.permute.xlu0 %3094
  %3096 = vrot.lane.b32.xlu0 %v2968, 32
  %v3097 = vpop.permute.xlu0 %3096
  %v3098 = vsel %vm317, %v3067, %v3069
  %v3099 = vsel %vm317, %v3069, %v3071
  %v3100 = vsel %vm317, %v3071, %v3073
  %v3101 = vsel %vm317, %v3073, %v3075
  %v3102 = vsel %vm317, %v3075, %v3077
  %v3103 = vsel %vm317, %v3077, %v3079
  %v3104 = vsel %vm317, %v3079, %v3081
  %v3105 = vsel %vm317, %v3081, %v3083
  %v3106 = vsel %vm317, %v3083, %v3085
  %v3107 = vsel %vm317, %v3085, %v3087
  %v3108 = vsel %vm317, %v3087, %v3089
  %v3109 = vsel %vm317, %v3089, %v3091
  %v3110 = vsel %vm317, %v3091, %v3093
  %v3111 = vsel %vm317, %v3093, %v3095
  %v3112 = vsel %vm317, %v3095, %v3097
  %v3129 = vsel %vm317, 0.0, %v3067
  %v3130 = vmul.f32 %v3129, %v353
  %v3131 = vmul.f32 %v3098, %v357
  %v3132 = vmul.f32 %v3099, %v361
  %v3133 = vmul.f32 %v3100, %v365
  %v3134 = vmul.f32 %v3101, %v369
  %v3135 = vmul.f32 %v3102, %v373
  %v3136 = vmul.f32 %v3103, %v377
  %v3137 = vmul.f32 %v3104, %v381
  %v3138 = vmul.f32 %v3105, %v385
  %v3139 = vmul.f32 %v3106, %v389
  %v3140 = vmul.f32 %v3107, %v393
  %v3141 = vmul.f32 %v3108, %v397
  %v3142 = vmul.f32 %v3109, %v401
  %v3143 = vmul.f32 %v3110, %v405
  %v3144 = vmul.f32 %v3111, %v409
  %v3145 = vmul.f32 %v3112, %v413
  %3146 = vrot.lane.b32.xlu0 %v2953, 31
  %v3147 = vpop.permute.xlu0 %3146
  %3148 = vrot.lane.b32.xlu0 %v2954, 31
  %v3149 = vpop.permute.xlu0 %3148
  %3150 = vrot.lane.b32.xlu0 %v2955, 31
  %v3151 = vpop.permute.xlu0 %3150
  %3152 = vrot.lane.b32.xlu0 %v2956, 31
  %v3153 = vpop.permute.xlu0 %3152
  %3154 = vrot.lane.b32.xlu0 %v2957, 31
  %v3155 = vpop.permute.xlu0 %3154
  %3156 = vrot.lane.b32.xlu0 %v2958, 31
  %v3157 = vpop.permute.xlu0 %3156
  %3158 = vrot.lane.b32.xlu0 %v2959, 31
  %v3159 = vpop.permute.xlu0 %3158
  %3160 = vrot.lane.b32.xlu0 %v2960, 31
  %v3161 = vpop.permute.xlu0 %3160
  %3162 = vrot.lane.b32.xlu0 %v2961, 31
  %v3163 = vpop.permute.xlu0 %3162
  %3164 = vrot.lane.b32.xlu0 %v2962, 31
  %v3165 = vpop.permute.xlu0 %3164
  %3166 = vrot.lane.b32.xlu0 %v2963, 31
  %v3167 = vpop.permute.xlu0 %3166
  %3168 = vrot.lane.b32.xlu0 %v2964, 31
  %v3169 = vpop.permute.xlu0 %3168
  %3170 = vrot.lane.b32.xlu0 %v2965, 31
  %v3171 = vpop.permute.xlu0 %3170
  %3172 = vrot.lane.b32.xlu0 %v2966, 31
  %v3173 = vpop.permute.xlu0 %3172
  %3174 = vrot.lane.b32.xlu0 %v2967, 31
  %v3175 = vpop.permute.xlu0 %3174
  %3176 = vrot.lane.b32.xlu0 %v2968, 31
  %v3177 = vpop.permute.xlu0 %3176
  %v3178 = vsel %vm462, %v3147, %v3149
  %v3179 = vsel %vm462, %v3149, %v3151
  %v3180 = vsel %vm462, %v3151, %v3153
  %v3181 = vsel %vm462, %v3153, %v3155
  %v3182 = vsel %vm462, %v3155, %v3157
  %v3183 = vsel %vm462, %v3157, %v3159
  %v3184 = vsel %vm462, %v3159, %v3161
  %v3185 = vsel %vm462, %v3161, %v3163
  %v3186 = vsel %vm462, %v3163, %v3165
  %v3187 = vsel %vm462, %v3165, %v3167
  %v3188 = vsel %vm462, %v3167, %v3169
  %v3189 = vsel %vm462, %v3169, %v3171
  %v3190 = vsel %vm462, %v3171, %v3173
  %v3191 = vsel %vm462, %v3173, %v3175
  %v3192 = vsel %vm462, %v3175, %v3177
  %v3209 = vsel %vm462, 0.0, %v3147
  %v3210 = vmul.f32 %v3209, %v498
  %v3211 = vmul.f32 %v3178, %v502
  %v3212 = vmul.f32 %v3179, %v506
  %v3213 = vmul.f32 %v3180, %v510
  %v3214 = vmul.f32 %v3181, %v514
  %v3215 = vmul.f32 %v3182, %v518
  %v3216 = vmul.f32 %v3183, %v522
  %v3217 = vmul.f32 %v3184, %v526
  %v3218 = vmul.f32 %v3185, %v530
  %v3219 = vmul.f32 %v3186, %v534
  %v3220 = vmul.f32 %v3187, %v538
  %v3221 = vmul.f32 %v3188, %v542
  %v3222 = vmul.f32 %v3189, %v546
  %v3223 = vmul.f32 %v3190, %v550
  %v3224 = vmul.f32 %v3191, %v554
  %v3225 = vmul.f32 %v3192, %v558
  %3226 = vrot.lane.b32.xlu0 %v2953, 1
  %v3227 = vpop.permute.xlu0 %3226
  %3228 = vrot.lane.b32.xlu0 %v2954, 1
  %v3229 = vpop.permute.xlu0 %3228
  %3230 = vrot.lane.b32.xlu0 %v2955, 1
  %v3231 = vpop.permute.xlu0 %3230
  %3232 = vrot.lane.b32.xlu0 %v2956, 1
  %v3233 = vpop.permute.xlu0 %3232
  %3234 = vrot.lane.b32.xlu0 %v2957, 1
  %v3235 = vpop.permute.xlu0 %3234
  %3236 = vrot.lane.b32.xlu0 %v2958, 1
  %v3237 = vpop.permute.xlu0 %3236
  %3238 = vrot.lane.b32.xlu0 %v2959, 1
  %v3239 = vpop.permute.xlu0 %3238
  %3240 = vrot.lane.b32.xlu0 %v2960, 1
  %v3241 = vpop.permute.xlu0 %3240
  %3242 = vrot.lane.b32.xlu0 %v2961, 1
  %v3243 = vpop.permute.xlu0 %3242
  %3244 = vrot.lane.b32.xlu0 %v2962, 1
  %v3245 = vpop.permute.xlu0 %3244
  %3246 = vrot.lane.b32.xlu0 %v2963, 1
  %v3247 = vpop.permute.xlu0 %3246
  %3248 = vrot.lane.b32.xlu0 %v2964, 1
  %v3249 = vpop.permute.xlu0 %3248
  %3250 = vrot.lane.b32.xlu0 %v2965, 1
  %v3251 = vpop.permute.xlu0 %3250
  %3252 = vrot.lane.b32.xlu0 %v2966, 1
  %v3253 = vpop.permute.xlu0 %3252
  %3254 = vrot.lane.b32.xlu0 %v2967, 1
  %v3255 = vpop.permute.xlu0 %3254
  %3256 = vrot.lane.b32.xlu0 %v2968, 1
  %v3257 = vpop.permute.xlu0 %3256
  %v3258 = vsel %vm607, %v3227, %v3229
  %v3259 = vsel %vm607, %v3229, %v3231
  %v3260 = vsel %vm607, %v3231, %v3233
  %v3261 = vsel %vm607, %v3233, %v3235
  %v3262 = vsel %vm607, %v3235, %v3237
  %v3263 = vsel %vm607, %v3237, %v3239
  %v3264 = vsel %vm607, %v3239, %v3241
  %v3265 = vsel %vm607, %v3241, %v3243
  %v3266 = vsel %vm607, %v3243, %v3245
  %v3267 = vsel %vm607, %v3245, %v3247
  %v3268 = vsel %vm607, %v3247, %v3249
  %v3269 = vsel %vm607, %v3249, %v3251
  %v3270 = vsel %vm607, %v3251, %v3253
  %v3271 = vsel %vm607, %v3253, %v3255
  %v3272 = vsel %vm607, %v3255, %v3257
  %v3289 = vsel %vm607, 0.0, %v3227
  %v3290 = vmul.f32 %v3289, %v643
  %v3291 = vmul.f32 %v3258, %v647
  %v3292 = vmul.f32 %v3259, %v651
  %v3293 = vmul.f32 %v3260, %v655
  %v3294 = vmul.f32 %v3261, %v659
  %v3295 = vmul.f32 %v3262, %v663
  %v3296 = vmul.f32 %v3263, %v667
  %v3297 = vmul.f32 %v3264, %v671
  %v3298 = vmul.f32 %v3265, %v675
  %v3299 = vmul.f32 %v3266, %v679
  %v3300 = vmul.f32 %v3267, %v683
  %v3301 = vmul.f32 %v3268, %v687
  %v3302 = vmul.f32 %v3269, %v691
  %v3303 = vmul.f32 %v3270, %v695
  %v3304 = vmul.f32 %v3271, %v699
  %v3305 = vmul.f32 %v3272, %v703
  %3306 = vrot.lane.b32.xlu0 %v2953, 127
  %v3307 = vpop.permute.xlu0 %3306
  %3308 = vrot.lane.b32.xlu0 %v2954, 127
  %v3309 = vpop.permute.xlu0 %3308
  %3310 = vrot.lane.b32.xlu0 %v2955, 127
  %v3311 = vpop.permute.xlu0 %3310
  %3312 = vrot.lane.b32.xlu0 %v2956, 127
  %v3313 = vpop.permute.xlu0 %3312
  %3314 = vrot.lane.b32.xlu0 %v2957, 127
  %v3315 = vpop.permute.xlu0 %3314
  %3316 = vrot.lane.b32.xlu0 %v2958, 127
  %v3317 = vpop.permute.xlu0 %3316
  %3318 = vrot.lane.b32.xlu0 %v2959, 127
  %v3319 = vpop.permute.xlu0 %3318
  %3320 = vrot.lane.b32.xlu0 %v2960, 127
  %v3321 = vpop.permute.xlu0 %3320
  %3322 = vrot.lane.b32.xlu0 %v2961, 127
  %v3323 = vpop.permute.xlu0 %3322
  %3324 = vrot.lane.b32.xlu0 %v2962, 127
  %v3325 = vpop.permute.xlu0 %3324
  %3326 = vrot.lane.b32.xlu0 %v2963, 127
  %v3327 = vpop.permute.xlu0 %3326
  %3328 = vrot.lane.b32.xlu0 %v2964, 127
  %v3329 = vpop.permute.xlu0 %3328
  %3330 = vrot.lane.b32.xlu0 %v2965, 127
  %v3331 = vpop.permute.xlu0 %3330
  %3332 = vrot.lane.b32.xlu0 %v2966, 127
  %v3333 = vpop.permute.xlu0 %3332
  %3334 = vrot.lane.b32.xlu0 %v2967, 127
  %v3335 = vpop.permute.xlu0 %3334
  %3336 = vrot.lane.b32.xlu0 %v2968, 127
  %v3337 = vpop.permute.xlu0 %3336
  %v3338 = vsel %vm752, %v3307, %v3309
  %v3339 = vsel %vm752, %v3309, %v3311
  %v3340 = vsel %vm752, %v3311, %v3313
  %v3341 = vsel %vm752, %v3313, %v3315
  %v3342 = vsel %vm752, %v3315, %v3317
  %v3343 = vsel %vm752, %v3317, %v3319
  %v3344 = vsel %vm752, %v3319, %v3321
  %v3345 = vsel %vm752, %v3321, %v3323
  %v3346 = vsel %vm752, %v3323, %v3325
  %v3347 = vsel %vm752, %v3325, %v3327
  %v3348 = vsel %vm752, %v3327, %v3329
  %v3349 = vsel %vm752, %v3329, %v3331
  %v3350 = vsel %vm752, %v3331, %v3333
  %v3351 = vsel %vm752, %v3333, %v3335
  %v3352 = vsel %vm752, %v3335, %v3337
  %v3369 = vsel %vm752, %v3337, 0.0
  %v3370 = vmul.f32 %v3338, %v788
  %v3371 = vmul.f32 %v3339, %v792
  %v3372 = vmul.f32 %v3340, %v796
  %v3373 = vmul.f32 %v3341, %v800
  %v3374 = vmul.f32 %v3342, %v804
  %v3375 = vmul.f32 %v3343, %v808
  %v3376 = vmul.f32 %v3344, %v812
  %v3377 = vmul.f32 %v3345, %v816
  %v3378 = vmul.f32 %v3346, %v820
  %v3379 = vmul.f32 %v3347, %v824
  %v3380 = vmul.f32 %v3348, %v828
  %v3381 = vmul.f32 %v3349, %v832
  %v3382 = vmul.f32 %v3350, %v836
  %v3383 = vmul.f32 %v3351, %v840
  %v3384 = vmul.f32 %v3352, %v844
  %v3385 = vmul.f32 %v3369, %v848
  %3386 = vrot.lane.b32.xlu0 %v2953, 97
  %v3387 = vpop.permute.xlu0 %3386
  %3388 = vrot.lane.b32.xlu0 %v2954, 97
  %v3389 = vpop.permute.xlu0 %3388
  %3390 = vrot.lane.b32.xlu0 %v2955, 97
  %v3391 = vpop.permute.xlu0 %3390
  %3392 = vrot.lane.b32.xlu0 %v2956, 97
  %v3393 = vpop.permute.xlu0 %3392
  %3394 = vrot.lane.b32.xlu0 %v2957, 97
  %v3395 = vpop.permute.xlu0 %3394
  %3396 = vrot.lane.b32.xlu0 %v2958, 97
  %v3397 = vpop.permute.xlu0 %3396
  %3398 = vrot.lane.b32.xlu0 %v2959, 97
  %v3399 = vpop.permute.xlu0 %3398
  %3400 = vrot.lane.b32.xlu0 %v2960, 97
  %v3401 = vpop.permute.xlu0 %3400
  %3402 = vrot.lane.b32.xlu0 %v2961, 97
  %v3403 = vpop.permute.xlu0 %3402
  %3404 = vrot.lane.b32.xlu0 %v2962, 97
  %v3405 = vpop.permute.xlu0 %3404
  %3406 = vrot.lane.b32.xlu0 %v2963, 97
  %v3407 = vpop.permute.xlu0 %3406
  %3408 = vrot.lane.b32.xlu0 %v2964, 97
  %v3409 = vpop.permute.xlu0 %3408
  %3410 = vrot.lane.b32.xlu0 %v2965, 97
  %v3411 = vpop.permute.xlu0 %3410
  %3412 = vrot.lane.b32.xlu0 %v2966, 97
  %v3413 = vpop.permute.xlu0 %3412
  %3414 = vrot.lane.b32.xlu0 %v2967, 97
  %v3415 = vpop.permute.xlu0 %3414
  %3416 = vrot.lane.b32.xlu0 %v2968, 97
  %v3417 = vpop.permute.xlu0 %3416
  %v3418 = vsel %vm897, %v3387, %v3389
  %v3419 = vsel %vm897, %v3389, %v3391
  %v3420 = vsel %vm897, %v3391, %v3393
  %v3421 = vsel %vm897, %v3393, %v3395
  %v3422 = vsel %vm897, %v3395, %v3397
  %v3423 = vsel %vm897, %v3397, %v3399
  %v3424 = vsel %vm897, %v3399, %v3401
  %v3425 = vsel %vm897, %v3401, %v3403
  %v3426 = vsel %vm897, %v3403, %v3405
  %v3427 = vsel %vm897, %v3405, %v3407
  %v3428 = vsel %vm897, %v3407, %v3409
  %v3429 = vsel %vm897, %v3409, %v3411
  %v3430 = vsel %vm897, %v3411, %v3413
  %v3431 = vsel %vm897, %v3413, %v3415
  %v3432 = vsel %vm897, %v3415, %v3417
  %v3449 = vsel %vm897, %v3417, 0.0
  %v3450 = vmul.f32 %v3418, %v933
  %v3451 = vmul.f32 %v3419, %v937
  %v3452 = vmul.f32 %v3420, %v941
  %v3453 = vmul.f32 %v3421, %v945
  %v3454 = vmul.f32 %v3422, %v949
  %v3455 = vmul.f32 %v3423, %v953
  %v3456 = vmul.f32 %v3424, %v957
  %v3457 = vmul.f32 %v3425, %v961
  %v3458 = vmul.f32 %v3426, %v965
  %v3459 = vmul.f32 %v3427, %v969
  %v3460 = vmul.f32 %v3428, %v973
  %v3461 = vmul.f32 %v3429, %v977
  %v3462 = vmul.f32 %v3430, %v981
  %v3463 = vmul.f32 %v3431, %v985
  %v3464 = vmul.f32 %v3432, %v989
  %v3465 = vmul.f32 %v3449, %v993
  %3466 = vrot.lane.b32.xlu0 %v2953, 96
  %v3467 = vpop.permute.xlu0 %3466
  %3468 = vrot.lane.b32.xlu0 %v2954, 96
  %v3469 = vpop.permute.xlu0 %3468
  %3470 = vrot.lane.b32.xlu0 %v2955, 96
  %v3471 = vpop.permute.xlu0 %3470
  %3472 = vrot.lane.b32.xlu0 %v2956, 96
  %v3473 = vpop.permute.xlu0 %3472
  %3474 = vrot.lane.b32.xlu0 %v2957, 96
  %v3475 = vpop.permute.xlu0 %3474
  %3476 = vrot.lane.b32.xlu0 %v2958, 96
  %v3477 = vpop.permute.xlu0 %3476
  %3478 = vrot.lane.b32.xlu0 %v2959, 96
  %v3479 = vpop.permute.xlu0 %3478
  %3480 = vrot.lane.b32.xlu0 %v2960, 96
  %v3481 = vpop.permute.xlu0 %3480
  %3482 = vrot.lane.b32.xlu0 %v2961, 96
  %v3483 = vpop.permute.xlu0 %3482
  %3484 = vrot.lane.b32.xlu0 %v2962, 96
  %v3485 = vpop.permute.xlu0 %3484
  %3486 = vrot.lane.b32.xlu0 %v2963, 96
  %v3487 = vpop.permute.xlu0 %3486
  %3488 = vrot.lane.b32.xlu0 %v2964, 96
  %v3489 = vpop.permute.xlu0 %3488
  %3490 = vrot.lane.b32.xlu0 %v2965, 96
  %v3491 = vpop.permute.xlu0 %3490
  %3492 = vrot.lane.b32.xlu0 %v2966, 96
  %v3493 = vpop.permute.xlu0 %3492
  %3494 = vrot.lane.b32.xlu0 %v2967, 96
  %v3495 = vpop.permute.xlu0 %3494
  %3496 = vrot.lane.b32.xlu0 %v2968, 96
  %v3497 = vpop.permute.xlu0 %3496
  %v3498 = vsel %vm1042, %v3467, %v3469
  %v3499 = vsel %vm1042, %v3469, %v3471
  %v3500 = vsel %vm1042, %v3471, %v3473
  %v3501 = vsel %vm1042, %v3473, %v3475
  %v3502 = vsel %vm1042, %v3475, %v3477
  %v3503 = vsel %vm1042, %v3477, %v3479
  %v3504 = vsel %vm1042, %v3479, %v3481
  %v3505 = vsel %vm1042, %v3481, %v3483
  %v3506 = vsel %vm1042, %v3483, %v3485
  %v3507 = vsel %vm1042, %v3485, %v3487
  %v3508 = vsel %vm1042, %v3487, %v3489
  %v3509 = vsel %vm1042, %v3489, %v3491
  %v3510 = vsel %vm1042, %v3491, %v3493
  %v3511 = vsel %vm1042, %v3493, %v3495
  %v3512 = vsel %vm1042, %v3495, %v3497
  %v3529 = vsel %vm1042, %v3497, 0.0
  %v3530 = vmul.f32 %v3498, %v1078
  %v3531 = vmul.f32 %v3499, %v1082
  %v3532 = vmul.f32 %v3500, %v1086
  %v3533 = vmul.f32 %v3501, %v1090
  %v3534 = vmul.f32 %v3502, %v1094
  %v3535 = vmul.f32 %v3503, %v1098
  %v3536 = vmul.f32 %v3504, %v1102
  %v3537 = vmul.f32 %v3505, %v1106
  %v3538 = vmul.f32 %v3506, %v1110
  %v3539 = vmul.f32 %v3507, %v1114
  %v3540 = vmul.f32 %v3508, %v1118
  %v3541 = vmul.f32 %v3509, %v1122
  %v3542 = vmul.f32 %v3510, %v1126
  %v3543 = vmul.f32 %v3511, %v1130
  %v3544 = vmul.f32 %v3512, %v1134
  %v3545 = vmul.f32 %v3529, %v1138
  %3546 = vrot.lane.b32.xlu0 %v2953, 95
  %v3547 = vpop.permute.xlu0 %3546
  %3548 = vrot.lane.b32.xlu0 %v2954, 95
  %v3549 = vpop.permute.xlu0 %3548
  %3550 = vrot.lane.b32.xlu0 %v2955, 95
  %v3551 = vpop.permute.xlu0 %3550
  %3552 = vrot.lane.b32.xlu0 %v2956, 95
  %v3553 = vpop.permute.xlu0 %3552
  %3554 = vrot.lane.b32.xlu0 %v2957, 95
  %v3555 = vpop.permute.xlu0 %3554
  %3556 = vrot.lane.b32.xlu0 %v2958, 95
  %v3557 = vpop.permute.xlu0 %3556
  %3558 = vrot.lane.b32.xlu0 %v2959, 95
  %v3559 = vpop.permute.xlu0 %3558
  %3560 = vrot.lane.b32.xlu0 %v2960, 95
  %v3561 = vpop.permute.xlu0 %3560
  %3562 = vrot.lane.b32.xlu0 %v2961, 95
  %v3563 = vpop.permute.xlu0 %3562
  %3564 = vrot.lane.b32.xlu0 %v2962, 95
  %v3565 = vpop.permute.xlu0 %3564
  %3566 = vrot.lane.b32.xlu0 %v2963, 95
  %v3567 = vpop.permute.xlu0 %3566
  %3568 = vrot.lane.b32.xlu0 %v2964, 95
  %v3569 = vpop.permute.xlu0 %3568
  %3570 = vrot.lane.b32.xlu0 %v2965, 95
  %v3571 = vpop.permute.xlu0 %3570
  %3572 = vrot.lane.b32.xlu0 %v2966, 95
  %v3573 = vpop.permute.xlu0 %3572
  %3574 = vrot.lane.b32.xlu0 %v2967, 95
  %v3575 = vpop.permute.xlu0 %3574
  %3576 = vrot.lane.b32.xlu0 %v2968, 95
  %v3577 = vpop.permute.xlu0 %3576
  %v3578 = vsel %vm1187, %v3547, %v3549
  %v3579 = vsel %vm1187, %v3549, %v3551
  %v3580 = vsel %vm1187, %v3551, %v3553
  %v3581 = vsel %vm1187, %v3553, %v3555
  %v3582 = vsel %vm1187, %v3555, %v3557
  %v3583 = vsel %vm1187, %v3557, %v3559
  %v3584 = vsel %vm1187, %v3559, %v3561
  %v3585 = vsel %vm1187, %v3561, %v3563
  %v3586 = vsel %vm1187, %v3563, %v3565
  %v3587 = vsel %vm1187, %v3565, %v3567
  %v3588 = vsel %vm1187, %v3567, %v3569
  %v3589 = vsel %vm1187, %v3569, %v3571
  %v3590 = vsel %vm1187, %v3571, %v3573
  %v3591 = vsel %vm1187, %v3573, %v3575
  %v3592 = vsel %vm1187, %v3575, %v3577
  %v3609 = vsel %vm1187, %v3577, 0.0
  %v3610 = vmul.f32 %v3578, %v1223
  %v3611 = vmul.f32 %v3579, %v1227
  %v3612 = vmul.f32 %v3580, %v1231
  %v3613 = vmul.f32 %v3581, %v1235
  %v3614 = vmul.f32 %v3582, %v1239
  %v3615 = vmul.f32 %v3583, %v1243
  %v3616 = vmul.f32 %v3584, %v1247
  %v3617 = vmul.f32 %v3585, %v1251
  %v3618 = vmul.f32 %v3586, %v1255
  %v3619 = vmul.f32 %v3587, %v1259
  %v3620 = vmul.f32 %v3588, %v1263
  %v3621 = vmul.f32 %v3589, %v1267
  %v3622 = vmul.f32 %v3590, %v1271
  %v3623 = vmul.f32 %v3591, %v1275
  %v3624 = vmul.f32 %v3592, %v1279
  %v3625 = vmul.f32 %v3609, %v1283
  %v3642 = vrot.slane %v3130, 4
  %v3643 = vrot.slane %v3131, 4
  %v3644 = vrot.slane %v3132, 4
  %v3645 = vrot.slane %v3133, 4
  %v3646 = vrot.slane %v3134, 4
  %v3647 = vrot.slane %v3135, 4
  %v3648 = vrot.slane %v3136, 4
  %v3649 = vrot.slane %v3137, 4
  %v3650 = vrot.slane %v3138, 4
  %v3651 = vrot.slane %v3139, 4
  %v3652 = vrot.slane %v3140, 4
  %v3653 = vrot.slane %v3141, 4
  %v3654 = vrot.slane %v3142, 4
  %v3655 = vrot.slane %v3143, 4
  %v3656 = vrot.slane %v3144, 4
  %v3657 = vrot.slane %v3145, 4
  %v3690 = vrot.slane %v3290, 4
  %v3691 = vrot.slane %v3291, 4
  %v3692 = vrot.slane %v3292, 4
  %v3693 = vrot.slane %v3293, 4
  %v3694 = vrot.slane %v3294, 4
  %v3695 = vrot.slane %v3295, 4
  %v3696 = vrot.slane %v3296, 4
  %v3697 = vrot.slane %v3297, 4
  %v3698 = vrot.slane %v3298, 4
  %v3699 = vrot.slane %v3299, 4
  %v3700 = vrot.slane %v3300, 4
  %v3701 = vrot.slane %v3301, 4
  %v3702 = vrot.slane %v3302, 4
  %v3703 = vrot.slane %v3303, 4
  %v3704 = vrot.slane %v3304, 4
  %v3705 = vrot.slane %v3305, 4
  %v3738 = vrot.slane %v3370, 4
  %v3739 = vrot.slane %v3371, 4
  %v3740 = vrot.slane %v3372, 4
  %v3741 = vrot.slane %v3373, 4
  %v3742 = vrot.slane %v3374, 4
  %v3743 = vrot.slane %v3375, 4
  %v3744 = vrot.slane %v3376, 4
  %v3745 = vrot.slane %v3377, 4
  %v3746 = vrot.slane %v3378, 4
  %v3747 = vrot.slane %v3379, 4
  %v3748 = vrot.slane %v3380, 4
  %v3749 = vrot.slane %v3381, 4
  %v3750 = vrot.slane %v3382, 4
  %v3751 = vrot.slane %v3383, 4
  %v3752 = vrot.slane %v3384, 4
  %v3753 = vrot.slane %v3385, 4
  %v3786 = vrot.slane %v3530, 4
  %v3787 = vrot.slane %v3531, 4
  %v3788 = vrot.slane %v3532, 4
  %v3789 = vrot.slane %v3533, 4
  %v3790 = vrot.slane %v3534, 4
  %v3791 = vrot.slane %v3535, 4
  %v3792 = vrot.slane %v3536, 4
  %v3793 = vrot.slane %v3537, 4
  %v3794 = vrot.slane %v3538, 4
  %v3795 = vrot.slane %v3539, 4
  %v3796 = vrot.slane %v3540, 4
  %v3797 = vrot.slane %v3541, 4
  %v3798 = vrot.slane %v3542, 4
  %v3799 = vrot.slane %v3543, 4
  %v3800 = vrot.slane %v3544, 4
  %v3801 = vrot.slane %v3545, 4
  %v3818 = vsel %vm1390, %v3050, %v3642
  %v3819 = vsel %vm1390, %v3051, %v3643
  %v3820 = vsel %vm1390, %v3052, %v3644
  %v3821 = vsel %vm1390, %v3053, %v3645
  %v3822 = vsel %vm1390, %v3054, %v3646
  %v3823 = vsel %vm1390, %v3055, %v3647
  %v3824 = vsel %vm1390, %v3056, %v3648
  %v3825 = vsel %vm1390, %v3057, %v3649
  %v3826 = vsel %vm1390, %v3058, %v3650
  %v3827 = vsel %vm1390, %v3059, %v3651
  %v3828 = vsel %vm1390, %v3060, %v3652
  %v3829 = vsel %vm1390, %v3061, %v3653
  %v3830 = vsel %vm1390, %v3062, %v3654
  %v3831 = vsel %vm1390, %v3063, %v3655
  %v3832 = vsel %vm1390, %v3064, %v3656
  %v3833 = vsel %vm1390, %v3065, %v3657
  %v3834 = vsel %vm1390, %v3210, %v3690
  %v3835 = vsel %vm1390, %v3211, %v3691
  %v3836 = vsel %vm1390, %v3212, %v3692
  %v3837 = vsel %vm1390, %v3213, %v3693
  %v3838 = vsel %vm1390, %v3214, %v3694
  %v3839 = vsel %vm1390, %v3215, %v3695
  %v3840 = vsel %vm1390, %v3216, %v3696
  %v3841 = vsel %vm1390, %v3217, %v3697
  %v3842 = vsel %vm1390, %v3218, %v3698
  %v3843 = vsel %vm1390, %v3219, %v3699
  %v3844 = vsel %vm1390, %v3220, %v3700
  %v3845 = vsel %vm1390, %v3221, %v3701
  %v3846 = vsel %vm1390, %v3222, %v3702
  %v3847 = vsel %vm1390, %v3223, %v3703
  %v3848 = vsel %vm1390, %v3224, %v3704
  %v3849 = vsel %vm1390, %v3225, %v3705
  %v3850 = vsel %vm1390, %v2953, %v3738
  %v3851 = vsel %vm1390, %v2954, %v3739
  %v3852 = vsel %vm1390, %v2955, %v3740
  %v3853 = vsel %vm1390, %v2956, %v3741
  %v3854 = vsel %vm1390, %v2957, %v3742
  %v3855 = vsel %vm1390, %v2958, %v3743
  %v3856 = vsel %vm1390, %v2959, %v3744
  %v3857 = vsel %vm1390, %v2960, %v3745
  %v3858 = vsel %vm1390, %v2961, %v3746
  %v3859 = vsel %vm1390, %v2962, %v3747
  %v3860 = vsel %vm1390, %v2963, %v3748
  %v3861 = vsel %vm1390, %v2964, %v3749
  %v3862 = vsel %vm1390, %v2965, %v3750
  %v3863 = vsel %vm1390, %v2966, %v3751
  %v3864 = vsel %vm1390, %v2967, %v3752
  %v3865 = vsel %vm1390, %v2968, %v3753
  %v3866 = vsel %vm1390, %v3450, %v3786
  %v3867 = vsel %vm1390, %v3451, %v3787
  %v3868 = vsel %vm1390, %v3452, %v3788
  %v3869 = vsel %vm1390, %v3453, %v3789
  %v3870 = vsel %vm1390, %v3454, %v3790
  %v3871 = vsel %vm1390, %v3455, %v3791
  %v3872 = vsel %vm1390, %v3456, %v3792
  %v3873 = vsel %vm1390, %v3457, %v3793
  %v3874 = vsel %vm1390, %v3458, %v3794
  %v3875 = vsel %vm1390, %v3459, %v3795
  %v3876 = vsel %vm1390, %v3460, %v3796
  %v3877 = vsel %vm1390, %v3461, %v3797
  %v3878 = vsel %vm1390, %v3462, %v3798
  %v3879 = vsel %vm1390, %v3463, %v3799
  %v3880 = vsel %vm1390, %v3464, %v3800
  %v3881 = vsel %vm1390, %v3465, %v3801
  %v3882 = vpack.c.bf16 %v3834, %v3818
  %v3883 = vpack.c.bf16 %v3835, %v3819
  %v3884 = vpack.c.bf16 %v3836, %v3820
  %v3885 = vpack.c.bf16 %v3837, %v3821
  %v3886 = vpack.c.bf16 %v3838, %v3822
  %v3887 = vpack.c.bf16 %v3839, %v3823
  %v3888 = vpack.c.bf16 %v3840, %v3824
  %v3889 = vpack.c.bf16 %v3841, %v3825
  %v3890 = vpack.c.bf16 %v3842, %v3826
  %v3891 = vpack.c.bf16 %v3843, %v3827
  %v3892 = vpack.c.bf16 %v3844, %v3828
  %v3893 = vpack.c.bf16 %v3845, %v3829
  %v3894 = vpack.c.bf16 %v3846, %v3830
  %v3895 = vpack.c.bf16 %v3847, %v3831
  %v3896 = vpack.c.bf16 %v3848, %v3832
  %v3897 = vpack.c.bf16 %v3849, %v3833
  %v3898 = vpack.c.bf16 %v3866, %v3850
  %v3899 = vpack.c.bf16 %v3867, %v3851
  %v3900 = vpack.c.bf16 %v3868, %v3852
  %v3901 = vpack.c.bf16 %v3869, %v3853
  %v3902 = vpack.c.bf16 %v3870, %v3854
  %v3903 = vpack.c.bf16 %v3871, %v3855
  %v3904 = vpack.c.bf16 %v3872, %v3856
  %v3905 = vpack.c.bf16 %v3873, %v3857
  %v3906 = vpack.c.bf16 %v3874, %v3858
  %v3907 = vpack.c.bf16 %v3875, %v3859
  %v3908 = vpack.c.bf16 %v3876, %v3860
  %v3909 = vpack.c.bf16 %v3877, %v3861
  %v3910 = vpack.c.bf16 %v3878, %v3862
  %v3911 = vpack.c.bf16 %v3879, %v3863
  %v3912 = vpack.c.bf16 %v3880, %v3864
  %v3913 = vpack.c.bf16 %v3881, %v3865
  %v3914 = vpack.c.bf16 %v3610, %v3610
  %v3915 = vpack.c.bf16 %v3611, %v3611
  %v3916 = vpack.c.bf16 %v3612, %v3612
  %v3917 = vpack.c.bf16 %v3613, %v3613
  %v3918 = vpack.c.bf16 %v3614, %v3614
  %v3919 = vpack.c.bf16 %v3615, %v3615
  %v3920 = vpack.c.bf16 %v3616, %v3616
  %v3921 = vpack.c.bf16 %v3617, %v3617
  %v3922 = vpack.c.bf16 %v3618, %v3618
  %v3923 = vpack.c.bf16 %v3619, %v3619
  %v3924 = vpack.c.bf16 %v3620, %v3620
  %v3925 = vpack.c.bf16 %v3621, %v3621
  %v3926 = vpack.c.bf16 %v3622, %v3622
  %v3927 = vpack.c.bf16 %v3623, %v3623
  %v3928 = vpack.c.bf16 %v3624, %v3624
  %v3929 = vpack.c.bf16 %v3625, %v3625
  %v3930 = vld [vmem:[%s8] sm:$0xf]
  %3932 = vset.pattern.permute.xlu0 0
  %3933 = vperm.xlu0 %3932, %v3930
  %v3934 = vpop.permute.xlu0 %3933
  %vm3936 = vcmask 293888
  %v3938 = vsel %vm3936, %v2969, 0
  %vm3940 = vcmask 1041408
  %v3942 = vsel %vm3940, %v3914, 0
  %v3945 = vsel %vm3940, %v3915, 0
  %v3948 = vsel %vm3940, %v3916, 0
  %v3951 = vsel %vm3940, %v3917, 0
  %v3954 = vsel %vm3940, %v3918, 0
  %v3957 = vsel %vm3940, %v3919, 0
  %v3960 = vsel %vm3940, %v3920, 0
  %v3963 = vsel %vm3940, %v3921, 0
  %v3966 = vsel %vm3940, %v3922, 0
  %v3969 = vsel %vm3940, %v3923, 0
  %v3972 = vsel %vm3940, %v3924, 0
  %v3975 = vsel %vm3940, %v3925, 0
  %v3978 = vsel %vm3940, %v3926, 0
  %v3981 = vsel %vm3940, %v3927, 0
  %v3984 = vsel %vm3940, %v3928, 0
  %v3987 = vsel %vm3940, %v3929, 0
  %3989 = vmatprep.subr.bf16.mxu0 0
  %3990 = vmatpush1.bf16.msra.mxu0 0
  %3991 = vmatprep.subr.bf16.mxu0 0
  %3992 = vmatpush1.bf16.msra.mxu0 0
  %3993 = vmatprep.subr.bf16.mxu0 0
  %3994 = vmatpush1.bf16.msra.mxu0 0
  %3995 = vmatprep.subr.bf16.mxu0 0
  %3996 = vmatpush1.bf16.msra.mxu0 0
  %3997 = vmatprep.subr.bf16.mxu0 0
  %3998 = vmatpush1.bf16.msra.mxu0 0
  %3999 = vmatprep.subr.bf16.mxu0 %v3945
  %4000 = vmatpush1.bf16.msra.mxu0 %v3942
  %4001 = vmatprep.subr.bf16.mxu0 %v3899
  %4002 = vmatpush1.bf16.msra.mxu0 %v3898
  %4003 = vmatprep.subr.bf16.mxu0 %v3883
  %4004 = vmatpush1.bf16.msra.mxu0 %v3882
  %4005 = vmatprep.subr.bf16.mxu0 0
  %4006 = vmatpush2.bf16.msra.mxu0 0
  %4007 = vmatprep.subr.bf16.mxu0 0
  %4008 = vmatpush2.bf16.msra.mxu0 0
  %4009 = vmatprep.subr.bf16.mxu0 0
  %4010 = vmatpush2.bf16.msra.mxu0 0
  %4011 = vmatprep.subr.bf16.mxu0 0
  %4012 = vmatpush2.bf16.msra.mxu0 0
  %4013 = vmatprep.subr.bf16.mxu0 0
  %4014 = vmatpush2.bf16.msra.mxu0 0
  %4015 = vmatprep.subr.bf16.mxu0 0
  %4016 = vmatpush2.bf16.msra.mxu0 0
  %4017 = vmatprep.subr.bf16.mxu0 0
  %4018 = vmatpush2.bf16.msra.mxu0 0
  %4019 = vmatprep.subr.bf16.mxu0 0
  %4020 = vmatpush2.bf16.msra.mxu0 0
  %4021 = vmatprep.mubr.bf16.mxu0 0
  %4022 = vmatmul.mubr.bf16.gmra.mxu0 %v3938
  %v4023 = vpop.f32.mrf.mxu0
  %v4024 = vadd.f32 %v3934, %v4023
  %v4025 = vpop.f32.mrf.mxu0
  %v4026 = vadd.f32 %v3934, %v4025
  %v4027 = vpop.f32.mrf.mxu0
  %v4028 = vpop.f32.mrf.mxu0
  %4029 = vdwg.mxu0
  %4030 = vmatprep.subr.bf16.mxu0 0
  %4031 = vmatpush1.bf16.msra.mxu0 0
  %4032 = vmatprep.subr.bf16.mxu0 0
  %4033 = vmatpush1.bf16.msra.mxu0 0
  %4034 = vmatprep.subr.bf16.mxu0 0
  %4035 = vmatpush1.bf16.msra.mxu0 0
  %4036 = vmatprep.subr.bf16.mxu0 0
  %4037 = vmatpush1.bf16.msra.mxu0 0
  %4038 = vmatprep.subr.bf16.mxu0 0
  %4039 = vmatpush1.bf16.msra.mxu0 0
  %4040 = vmatprep.subr.bf16.mxu0 %v3951
  %4041 = vmatpush1.bf16.msra.mxu0 %v3948
  %4042 = vmatprep.subr.bf16.mxu0 %v3901
  %4043 = vmatpush1.bf16.msra.mxu0 %v3900
  %4044 = vmatprep.subr.bf16.mxu0 %v3885
  %4045 = vmatpush1.bf16.msra.mxu0 %v3884
  %4046 = vmatprep.subr.bf16.mxu0 0
  %4047 = vmatpush2.bf16.msra.mxu0 0
  %4048 = vmatprep.subr.bf16.mxu0 0
  %4049 = vmatpush2.bf16.msra.mxu0 0
  %4050 = vmatprep.subr.bf16.mxu0 0
  %4051 = vmatpush2.bf16.msra.mxu0 0
  %4052 = vmatprep.subr.bf16.mxu0 0
  %4053 = vmatpush2.bf16.msra.mxu0 0
  %4054 = vmatprep.subr.bf16.mxu0 0
  %4055 = vmatpush2.bf16.msra.mxu0 0
  %4056 = vmatprep.subr.bf16.mxu0 0
  %4057 = vmatpush2.bf16.msra.mxu0 0
  %4058 = vmatprep.subr.bf16.mxu0 0
  %4059 = vmatpush2.bf16.msra.mxu0 0
  %4060 = vmatprep.subr.bf16.mxu0 0
  %4061 = vmatpush2.bf16.msra.mxu0 0
  %4062 = vmatprep.mubr.bf16.mxu0 0
  %4063 = vmatmul.mubr.bf16.gmra.mxu0 %v3938
  %v4064 = vpop.f32.mrf.mxu0
  %v4065 = vadd.f32 %v3934, %v4064
  %v4066 = vpop.f32.mrf.mxu0
  %v4067 = vadd.f32 %v3934, %v4066
  %v4068 = vpop.f32.mrf.mxu0
  %v4069 = vpop.f32.mrf.mxu0
  %4070 = vdwg.mxu0
  %4071 = vmatprep.subr.bf16.mxu0 0
  %4072 = vmatpush1.bf16.msra.mxu0 0
  %4073 = vmatprep.subr.bf16.mxu0 0
  %4074 = vmatpush1.bf16.msra.mxu0 0
  %4075 = vmatprep.subr.bf16.mxu0 0
  %4076 = vmatpush1.bf16.msra.mxu0 0
  %4077 = vmatprep.subr.bf16.mxu0 0
  %4078 = vmatpush1.bf16.msra.mxu0 0
  %4079 = vmatprep.subr.bf16.mxu0 0
  %4080 = vmatpush1.bf16.msra.mxu0 0
  %4081 = vmatprep.subr.bf16.mxu0 %v3957
  %4082 = vmatpush1.bf16.msra.mxu0 %v3954
  %4083 = vmatprep.subr.bf16.mxu0 %v3903
  %4084 = vmatpush1.bf16.msra.mxu0 %v3902
  %4085 = vmatprep.subr.bf16.mxu0 %v3887
  %4086 = vmatpush1.bf16.msra.mxu0 %v3886
  %4087 = vmatprep.subr.bf16.mxu0 0
  %4088 = vmatpush2.bf16.msra.mxu0 0
  %4089 = vmatprep.subr.bf16.mxu0 0
  %4090 = vmatpush2.bf16.msra.mxu0 0
  %4091 = vmatprep.subr.bf16.mxu0 0
  %4092 = vmatpush2.bf16.msra.mxu0 0
  %4093 = vmatprep.subr.bf16.mxu0 0
  %4094 = vmatpush2.bf16.msra.mxu0 0
  %4095 = vmatprep.subr.bf16.mxu0 0
  %4096 = vmatpush2.bf16.msra.mxu0 0
  %4097 = vmatprep.subr.bf16.mxu0 0
  %4098 = vmatpush2.bf16.msra.mxu0 0
  %4099 = vmatprep.subr.bf16.mxu0 0
  %4100 = vmatpush2.bf16.msra.mxu0 0
  %4101 = vmatprep.subr.bf16.mxu0 0
  %4102 = vmatpush2.bf16.msra.mxu0 0
  %4103 = vmatprep.mubr.bf16.mxu0 0
  %4104 = vmatmul.mubr.bf16.gmra.mxu0 %v3938
  %v4105 = vpop.f32.mrf.mxu0
  %v4106 = vadd.f32 %v3934, %v4105
  %v4107 = vpop.f32.mrf.mxu0
  %v4108 = vadd.f32 %v3934, %v4107
  %v4109 = vpop.f32.mrf.mxu0
  %v4110 = vpop.f32.mrf.mxu0
  %4111 = vdwg.mxu0
  %4112 = vmatprep.subr.bf16.mxu0 0
  %4113 = vmatpush1.bf16.msra.mxu0 0
  %4114 = vmatprep.subr.bf16.mxu0 0
  %4115 = vmatpush1.bf16.msra.mxu0 0
  %4116 = vmatprep.subr.bf16.mxu0 0
  %4117 = vmatpush1.bf16.msra.mxu0 0
  %4118 = vmatprep.subr.bf16.mxu0 0
  %4119 = vmatpush1.bf16.msra.mxu0 0
  %4120 = vmatprep.subr.bf16.mxu0 0
  %4121 = vmatpush1.bf16.msra.mxu0 0
  %4122 = vmatprep.subr.bf16.mxu0 %v3963
  %4123 = vmatpush1.bf16.msra.mxu0 %v3960
  %4124 = vmatprep.subr.bf16.mxu0 %v3905
  %4125 = vmatpush1.bf16.msra.mxu0 %v3904
  %4126 = vmatprep.subr.bf16.mxu0 %v3889
  %4127 = vmatpush1.bf16.msra.mxu0 %v3888
  %4128 = vmatprep.subr.bf16.mxu0 0
  %4129 = vmatpush2.bf16.msra.mxu0 0
  %4130 = vmatprep.subr.bf16.mxu0 0
  %4131 = vmatpush2.bf16.msra.mxu0 0
  %4132 = vmatprep.subr.bf16.mxu0 0
  %4133 = vmatpush2.bf16.msra.mxu0 0
  %4134 = vmatprep.subr.bf16.mxu0 0
  %4135 = vmatpush2.bf16.msra.mxu0 0
  %4136 = vmatprep.subr.bf16.mxu0 0
  %4137 = vmatpush2.bf16.msra.mxu0 0
  %4138 = vmatprep.subr.bf16.mxu0 0
  %4139 = vmatpush2.bf16.msra.mxu0 0
  %4140 = vmatprep.subr.bf16.mxu0 0
  %4141 = vmatpush2.bf16.msra.mxu0 0
  %4142 = vmatprep.subr.bf16.mxu0 0
  %4143 = vmatpush2.bf16.msra.mxu0 0
  %4144 = vmatprep.mubr.bf16.mxu0 0
  %4145 = vmatmul.mubr.bf16.gmra.mxu0 %v3938
  %v4146 = vpop.f32.mrf.mxu0
  %v4147 = vadd.f32 %v3934, %v4146
  %v4148 = vpop.f32.mrf.mxu0
  %v4149 = vadd.f32 %v3934, %v4148
  %v4150 = vpop.f32.mrf.mxu0
  %v4151 = vpop.f32.mrf.mxu0
  %4152 = vdwg.mxu0
  %4153 = vmatprep.subr.bf16.mxu0 0
  %4154 = vmatpush1.bf16.msra.mxu0 0
  %4155 = vmatprep.subr.bf16.mxu0 0
  %4156 = vmatpush1.bf16.msra.mxu0 0
  %4157 = vmatprep.subr.bf16.mxu0 0
  %4158 = vmatpush1.bf16.msra.mxu0 0
  %4159 = vmatprep.subr.bf16.mxu0 0
  %4160 = vmatpush1.bf16.msra.mxu0 0
  %4161 = vmatprep.subr.bf16.mxu0 0
  %4162 = vmatpush1.bf16.msra.mxu0 0
  %4163 = vmatprep.subr.bf16.mxu0 %v3969
  %4164 = vmatpush1.bf16.msra.mxu0 %v3966
  %4165 = vmatprep.subr.bf16.mxu0 %v3907
  %4166 = vmatpush1.bf16.msra.mxu0 %v3906
  %4167 = vmatprep.subr.bf16.mxu0 %v3891
  %4168 = vmatpush1.bf16.msra.mxu0 %v3890
  %4169 = vmatprep.subr.bf16.mxu0 0
  %4170 = vmatpush2.bf16.msra.mxu0 0
  %4171 = vmatprep.subr.bf16.mxu0 0
  %4172 = vmatpush2.bf16.msra.mxu0 0
  %4173 = vmatprep.subr.bf16.mxu0 0
  %4174 = vmatpush2.bf16.msra.mxu0 0
  %4175 = vmatprep.subr.bf16.mxu0 0
  %4176 = vmatpush2.bf16.msra.mxu0 0
  %4177 = vmatprep.subr.bf16.mxu0 0
  %4178 = vmatpush2.bf16.msra.mxu0 0
  %4179 = vmatprep.subr.bf16.mxu0 0
  %4180 = vmatpush2.bf16.msra.mxu0 0
  %4181 = vmatprep.subr.bf16.mxu0 0
  %4182 = vmatpush2.bf16.msra.mxu0 0
  %4183 = vmatprep.subr.bf16.mxu0 0
  %4184 = vmatpush2.bf16.msra.mxu0 0
  %4185 = vmatprep.mubr.bf16.mxu0 0
  %4186 = vmatmul.mubr.bf16.gmra.mxu0 %v3938
  %v4187 = vpop.f32.mrf.mxu0
  %v4188 = vadd.f32 %v3934, %v4187
  %v4189 = vpop.f32.mrf.mxu0
  %v4190 = vadd.f32 %v3934, %v4189
  %v4191 = vpop.f32.mrf.mxu0
  %v4192 = vpop.f32.mrf.mxu0
  %4193 = vdwg.mxu0
  %4194 = vmatprep.subr.bf16.mxu0 0
  %4195 = vmatpush1.bf16.msra.mxu0 0
  %4196 = vmatprep.subr.bf16.mxu0 0
  %4197 = vmatpush1.bf16.msra.mxu0 0
  %4198 = vmatprep.subr.bf16.mxu0 0
  %4199 = vmatpush1.bf16.msra.mxu0 0
  %4200 = vmatprep.subr.bf16.mxu0 0
  %4201 = vmatpush1.bf16.msra.mxu0 0
  %4202 = vmatprep.subr.bf16.mxu0 0
  %4203 = vmatpush1.bf16.msra.mxu0 0
  %4204 = vmatprep.subr.bf16.mxu0 %v3975
  %4205 = vmatpush1.bf16.msra.mxu0 %v3972
  %4206 = vmatprep.subr.bf16.mxu0 %v3909
  %4207 = vmatpush1.bf16.msra.mxu0 %v3908
  %4208 = vmatprep.subr.bf16.mxu0 %v3893
  %4209 = vmatpush1.bf16.msra.mxu0 %v3892
  %4210 = vmatprep.subr.bf16.mxu0 0
  %4211 = vmatpush2.bf16.msra.mxu0 0
  %4212 = vmatprep.subr.bf16.mxu0 0
  %4213 = vmatpush2.bf16.msra.mxu0 0
  %4214 = vmatprep.subr.bf16.mxu0 0
  %4215 = vmatpush2.bf16.msra.mxu0 0
  %4216 = vmatprep.subr.bf16.mxu0 0
  %4217 = vmatpush2.bf16.msra.mxu0 0
  %4218 = vmatprep.subr.bf16.mxu0 0
  %4219 = vmatpush2.bf16.msra.mxu0 0
  %4220 = vmatprep.subr.bf16.mxu0 0
  %4221 = vmatpush2.bf16.msra.mxu0 0
  %4222 = vmatprep.subr.bf16.mxu0 0
  %4223 = vmatpush2.bf16.msra.mxu0 0
  %4224 = vmatprep.subr.bf16.mxu0 0
  %4225 = vmatpush2.bf16.msra.mxu0 0
  %4226 = vmatprep.mubr.bf16.mxu0 0
  %4227 = vmatmul.mubr.bf16.gmra.mxu0 %v3938
  %v4228 = vpop.f32.mrf.mxu0
  %v4229 = vadd.f32 %v3934, %v4228
  %v4230 = vpop.f32.mrf.mxu0
  %v4231 = vadd.f32 %v3934, %v4230
  %v4232 = vpop.f32.mrf.mxu0
  %v4233 = vpop.f32.mrf.mxu0
  %4234 = vdwg.mxu0
  %4235 = vmatprep.subr.bf16.mxu0 0
  %4236 = vmatpush1.bf16.msra.mxu0 0
  %4237 = vmatprep.subr.bf16.mxu0 0
  %4238 = vmatpush1.bf16.msra.mxu0 0
  %4239 = vmatprep.subr.bf16.mxu0 0
  %4240 = vmatpush1.bf16.msra.mxu0 0
  %4241 = vmatprep.subr.bf16.mxu0 0
  %4242 = vmatpush1.bf16.msra.mxu0 0
  %4243 = vmatprep.subr.bf16.mxu0 0
  %4244 = vmatpush1.bf16.msra.mxu0 0
  %4245 = vmatprep.subr.bf16.mxu0 %v3981
  %4246 = vmatpush1.bf16.msra.mxu0 %v3978
  %4247 = vmatprep.subr.bf16.mxu0 %v3911
  %4248 = vmatpush1.bf16.msra.mxu0 %v3910
  %4249 = vmatprep.subr.bf16.mxu0 %v3895
  %4250 = vmatpush1.bf16.msra.mxu0 %v3894
  %4251 = vmatprep.subr.bf16.mxu0 0
  %4252 = vmatpush2.bf16.msra.mxu0 0
  %4253 = vmatprep.subr.bf16.mxu0 0
  %4254 = vmatpush2.bf16.msra.mxu0 0
  %4255 = vmatprep.subr.bf16.mxu0 0
  %4256 = vmatpush2.bf16.msra.mxu0 0
  %4257 = vmatprep.subr.bf16.mxu0 0
  %4258 = vmatpush2.bf16.msra.mxu0 0
  %4259 = vmatprep.subr.bf16.mxu0 0
  %4260 = vmatpush2.bf16.msra.mxu0 0
  %4261 = vmatprep.subr.bf16.mxu0 0
  %4262 = vmatpush2.bf16.msra.mxu0 0
  %4263 = vmatprep.subr.bf16.mxu0 0
  %4264 = vmatpush2.bf16.msra.mxu0 0
  %4265 = vmatprep.subr.bf16.mxu0 0
  %4266 = vmatpush2.bf16.msra.mxu0 0
  %4267 = vmatprep.mubr.bf16.mxu0 0
  %4268 = vmatmul.mubr.bf16.gmra.mxu0 %v3938
  %v4269 = vpop.f32.mrf.mxu0
  %v4270 = vadd.f32 %v3934, %v4269
  %v4271 = vpop.f32.mrf.mxu0
  %v4272 = vadd.f32 %v3934, %v4271
  %v4273 = vpop.f32.mrf.mxu0
  %v4274 = vpop.f32.mrf.mxu0
  %4275 = vdwg.mxu0
  %4276 = vmatprep.subr.bf16.mxu0 0
  %4277 = vmatpush1.bf16.msra.mxu0 0
  %4278 = vmatprep.subr.bf16.mxu0 0
  %4279 = vmatpush1.bf16.msra.mxu0 0
  %4280 = vmatprep.subr.bf16.mxu0 0
  %4281 = vmatpush1.bf16.msra.mxu0 0
  %4282 = vmatprep.subr.bf16.mxu0 0
  %4283 = vmatpush1.bf16.msra.mxu0 0
  %4284 = vmatprep.subr.bf16.mxu0 0
  %4285 = vmatpush1.bf16.msra.mxu0 0
  %4286 = vmatprep.subr.bf16.mxu0 %v3987
  %4287 = vmatpush1.bf16.msra.mxu0 %v3984
  %4288 = vmatprep.subr.bf16.mxu0 %v3913
  %4289 = vmatpush1.bf16.msra.mxu0 %v3912
  %4290 = vmatprep.subr.bf16.mxu0 %v3897
  %4291 = vmatpush1.bf16.msra.mxu0 %v3896
  %4292 = vmatprep.subr.bf16.mxu0 0
  %4293 = vmatpush2.bf16.msra.mxu0 0
  %4294 = vmatprep.subr.bf16.mxu0 0
  %4295 = vmatpush2.bf16.msra.mxu0 0
  %4296 = vmatprep.subr.bf16.mxu0 0
  %4297 = vmatpush2.bf16.msra.mxu0 0
  %4298 = vmatprep.subr.bf16.mxu0 0
  %4299 = vmatpush2.bf16.msra.mxu0 0
  %4300 = vmatprep.subr.bf16.mxu0 0
  %4301 = vmatpush2.bf16.msra.mxu0 0
  %4302 = vmatprep.subr.bf16.mxu0 0
  %4303 = vmatpush2.bf16.msra.mxu0 0
  %4304 = vmatprep.subr.bf16.mxu0 0
  %4305 = vmatpush2.bf16.msra.mxu0 0
  %4306 = vmatprep.subr.bf16.mxu0 0
  %4307 = vmatpush2.bf16.msra.mxu0 0
  %4308 = vmatprep.mubr.bf16.mxu0 0
  %4309 = vmatmul.mubr.bf16.gmra.mxu0 %v3938
  %v4310 = vpop.f32.mrf.mxu0
  %v4311 = vadd.f32 %v3934, %v4310
  %v4312 = vpop.f32.mrf.mxu0
  %v4313 = vadd.f32 %v3934, %v4312
  %v4314 = vpop.f32.mrf.mxu0
  %v4315 = vpop.f32.mrf.mxu0
  %4316 = vdwg.mxu0
  %v4317 = vmax.f32 %v4024, 0.0
  %v4318 = vmax.f32 %v4026, 0.0
  %v4319 = vmax.f32 %v4065, 0.0
  %v4320 = vmax.f32 %v4067, 0.0
  %v4321 = vmax.f32 %v4106, 0.0
  %v4322 = vmax.f32 %v4108, 0.0
  %v4323 = vmax.f32 %v4147, 0.0
  %v4324 = vmax.f32 %v4149, 0.0
  %v4325 = vmax.f32 %v4188, 0.0
  %v4326 = vmax.f32 %v4190, 0.0
  %v4327 = vmax.f32 %v4229, 0.0
  %v4328 = vmax.f32 %v4231, 0.0
  %v4329 = vmax.f32 %v4270, 0.0
  %v4330 = vmax.f32 %v4272, 0.0
  %v4331 = vmax.f32 %v4311, 0.0
  %v4332 = vmax.f32 %v4313, 0.0
  %v4341 = vcombine.low %v4317, %v4318
  %v4342 = vcombine.low %v4319, %v4320
  %v4343 = vcombine.low %v4321, %v4322
  %v4344 = vcombine.low %v4323, %v4324
  %4349 = vst [vmem:[%s9] sm:$0xff] %v4341
  %4350 = vst [vmem:[%s9 + $0x8] sm:$0xff] %v4342
  %4351 = vst [vmem:[%s9 + $0x10] sm:$0xff] %v4343
  %4352 = vst [vmem:[%s9 + $0x18] sm:$0xff] %v4344
  %v4361 = vcombine.low %v4325, %v4326
  %v4362 = vcombine.low %v4327, %v4328
  %v4363 = vcombine.low %v4329, %v4330
  %v4364 = vcombine.low %v4331, %v4332
  %s4369 = scalar_lea.vmem %s9, 32
  %4370 = vst [vmem:[%s4369] sm:$0xff] %v4361
  %4371 = vst [vmem:[%s4369 + $0x8] sm:$0xff] %v4362
  %4372 = vst [vmem:[%s4369 + $0x10] sm:$0xff] %v4363
  %4373 = vst [vmem:[%s4369 + $0x18] sm:$0xff] %v4364
  // Predicated region
  $region38: #{up_conv_block_forward.1} parent=0 // pred_check
    _
  $region39: #{up_conv_block_forward.1} parent=0 // pred_check_branch
    %4375 = sbr.rel (0) target = $region41
  $region40: #{up_conv_block_forward.1} parent=0 // pred_region
    _
  $region41: #{up_conv_block_forward.1} parent=0 // pred_fallthru
    _
  // Predicated region
  $region42: #{up_conv_block_forward.1} parent=0 // pred_check
    _
  $region43: #{up_conv_block_forward.1} parent=0 // pred_check_branch
    %4377 = sbr.rel (0) target = $region45
  $region44: #{up_conv_block_forward.1} parent=0 // pred_region
    _
  $region45: #{up_conv_block_forward.1} parent=0 // pred_fallthru
    _

</llo_original>
